<compile_context>
chip_gen: v7x
topology: tpu7x:2x2x1
jax: 0.10.0
libtpu: 0.0.40
codegen_flags: <defaults>
</compile_context>

<pallas_src>
import functools

import jax
import jax.numpy as jnp
from jax import lax
from jax.experimental import pallas as pl
from jax.experimental.pallas import tpu as pltpu

# ---- small-but-consistent ViT config (same structure as the PyTorch module) ----
IMAGE_SIZE = 32
PATCH_SIZE = 16
CHANNELS = 3
DIM = 128
DEPTH = 2
HEADS = 4
DIM_HEAD = 32
INNER = HEADS * DIM_HEAD               # 128 (lane-dense)
MLP_DIM = 256
NUM_CLASSES = 1
NCLS_PAD = 128                         # lane-dense logits block; sliced outside
LN_EPS = 1e-5
_INV_SQRT2 = 0.7071067811865476
_SCALE = DIM_HEAD ** -0.5
_NEG_INF = -1e30

NUM_PATCHES = (IMAGE_SIZE // PATCH_SIZE) ** 2        # 4
PATCH_DIM = CHANNELS * PATCH_SIZE * PATCH_SIZE       # 768
N_TOKENS = NUM_PATCHES + 1                           # 5 (cls + patches)
NP_PAD = ((N_TOKENS + 7) // 8) * 8                   # 8 (sublane multiple)

# TODO(synk): dropout / emb_dropout are identity here (inference / eval semantics).


# ------------------------------ in-kernel helpers ------------------------------

def _ln(x, g, b):
    """f32 LayerNorm over the last axis. g, b are (1, D)."""
    mu = jnp.mean(x, axis=-1, keepdims=True)
    xc = x - mu
    var = jnp.mean(xc * xc, axis=-1, keepdims=True)
    return xc * lax.rsqrt(var + LN_EPS) * g + b


def _mm(a, b):
    """MXU matmul: bf16 operands, f32 accumulation."""
    return jnp.dot(a.astype(jnp.bfloat16), b.astype(jnp.bfloat16),
                   preferred_element_type=jnp.float32)


def _gelu(x):
    # exact (erf) GELU, matching torch.nn.GELU default
    return 0.5 * x * (1.0 + lax.erf(x * _INV_SQRT2))


def _replicated_spec(arr):
    """Full-array block identical for every grid step (weights)."""
    zeros = (0,) * arr.ndim
    return pl.BlockSpec(arr.shape, lambda bi, _z=zeros: _z)


# ------------------------------ fused ViT kernel ------------------------------

def _vit_kernel(x_ref,                                  # (TB, NUM_PATCHES, PATCH_DIM)
                peg1_ref, peb1_ref, pew_ref, peb_ref, peg2_ref, peb2_ref,
                addpos_ref,                             # (1, NP_PAD, DIM): cls+pos rows
                aln_g_ref, aln_b_ref, wqkv_ref, wo_ref, bo_ref,
                fln_g_ref, fln_b_ref, w1_ref, b1_ref, w2_ref, b2_ref,
                gfin_ref, bfin_ref, hw_ref, hb_ref,
                o_ref,                                  # (TB, 1, NCLS_PAD)
                seq_ref, attn_o_ref,                    # VMEM scratch
                *, tb):
    rows = tb * NP_PAD

    # ---- patch embedding: LN(patch_dim) -> Linear -> LN(DIM), row-flattened ----
    xp = x_ref[...].astype(jnp.float32).reshape(tb * NUM_PATCHES, PATCH_DIM)
    xp = _ln(xp, peg1_ref[...], peb1_ref[...])
    pe = _mm(xp, pew_ref[...]) + peb_ref[...]
    pe = _ln(pe, peg2_ref[...], peb2_ref[...])          # (tb*num_patches, DIM)

    # ---- build padded token sequence: [cls, patches..., zero pad] + pos ----
    seq_ref[...] = jnp.zeros_like(seq_ref)
    seq_ref[:, 1:1 + NUM_PATCHES, :] = pe.reshape(tb, NUM_PATCHES, DIM)
    x = (seq_ref[...] + addpos_ref[...]).reshape(rows, DIM)   # (tb*NP_PAD, DIM)

    # mask for padded key columns (shared by all heads / layers)
    col = lax.broadcasted_iota(jnp.int32, (1, 1, NP_PAD), 2)
    kmask = jnp.where(col < N_TOKENS, 0.0, _NEG_INF).astype(jnp.float32)

    for li in range(DEPTH):                             # static unroll
        # -------- attention block (pre-LN) + residual --------
        xn = _ln(x, aln_g_ref[li], aln_b_ref[li])
        qkv = _mm(xn, wqkv_ref[li])                     # (rows, 3*INNER), no bias
        q = qkv[:, :INNER] * _SCALE                     # fold 1/sqrt(d) into q once
        k = qkv[:, INNER:2 * INNER]
        v = qkv[:, 2 * INNER:]

        for h in range(HEADS):                          # per-head, batched over tb
            sl = slice(h * DIM_HEAD, (h + 1) * DIM_HEAD)
            qh = q[:, sl].reshape(tb, NP_PAD, DIM_HEAD).astype(jnp.bfloat16)
            kh = k[:, sl].reshape(tb, NP_PAD, DIM_HEAD).astype(jnp.bfloat16)
            vh = v[:, sl].reshape(tb, NP_PAD, DIM_HEAD).astype(jnp.bfloat16)
            s = jnp.einsum('bqd,bkd->bqk', qh, kh,
                           preferred_element_type=jnp.float32) + kmask
            s = s - jnp.max(s, axis=-1, keepdims=True)  # stable softmax (f32)
            e = jnp.exp(s)
            inv = pl.reciprocal(jnp.sum(e, axis=-1, keepdims=True), approx=True)
            p = (e * inv).astype(jnp.bfloat16)
            oh = jnp.einsum('bqk,bkd->bqd', p, vh,
                            preferred_element_type=jnp.float32)
            # write each head into the output slab at a static lane offset
            attn_o_ref[:, sl] = oh.reshape(rows, DIM_HEAD)

        x = _mm(attn_o_ref[...], wo_ref[li]) + bo_ref[li] + x   # to_out + residual

        # -------- feed-forward block (pre-LN) + residual --------
        xn = _ln(x, fln_g_ref[li], fln_b_ref[li])
        h1 = _gelu(_mm(xn, w1_ref[li]) + b1_ref[li])
        x = _mm(h1, w2_ref[li]) + b2_ref[li] + x

    # ---- cls pool (before final LN; LN is row-wise) -> final LN -> mlp_head ----
    cls = x.reshape(tb, NP_PAD, DIM)[:, 0:1, :].reshape(tb, DIM)
    cls = _ln(cls, gfin_ref[...], bfin_ref[...])
    logits = _mm(cls, hw_ref[...]) + hb_ref[...]        # (tb, NCLS_PAD) lane-dense
    o_ref[...] = logits.reshape(tb, 1, NCLS_PAD).astype(o_ref.dtype)


# ------------------------------ wrapper / pallas_call ------------------------------

def _pick_tb(batch):
    """Batch tile: target >=256 rows per matmul, keep >=2 grid steps (v7x 2 TCs)."""
    row_target = max(1, 256 // NP_PAD)
    cap = max(1, min(row_target, batch if batch < 2 else batch // 2))
    tb = 1
    for cand in range(1, cap + 1):
        if batch % cand == 0:
            tb = cand
    return tb


def pallas_vit(x_patches, addpos, p):
    b = x_patches.shape[0]
    tb = _pick_tb(b)
    L = p["layers"]
    args = (x_patches,
            p["pe_ln1_g"], p["pe_ln1_b"], p["pe_w"], p["pe_b"],
            p["pe_ln2_g"], p["pe_ln2_b"],
            addpos,
            L["attn_ln_g"], L["attn_ln_b"], L["wqkv"], L["wo"], L["bo"],
            L["ff_ln_g"], L["ff_ln_b"], L["w1"], L["b1"], L["w2"], L["b2"],
            p["final_ln_g"], p["final_ln_b"], p["head_w"], p["head_b"])
    in_specs = [pl.BlockSpec((tb, NUM_PATCHES, PATCH_DIM), lambda bi: (bi, 0, 0))]
    in_specs += [_replicated_spec(a) for a in args[1:]]
    return pl.pallas_call(
        functools.partial(_vit_kernel, tb=tb),
        out_shape=jax.ShapeDtypeStruct((b, 1, NCLS_PAD), jnp.float32),
        grid=(b // tb,),
        in_specs=in_specs,
        out_specs=pl.BlockSpec((tb, 1, NCLS_PAD), lambda bi: (bi, 0, 0)),
        scratch_shapes=[pltpu.VMEM((tb, NP_PAD, DIM), jnp.float32),
                        pltpu.VMEM((tb * NP_PAD, INNER), jnp.float32)],
        compiler_params=pltpu.CompilerParams(
            dimension_semantics=("parallel",)),   # both v7x TCs get grid steps
    )(*args)


# ------------------------------ parameters ------------------------------

def init_params(key):
    keys = jax.random.split(key, 8)

    def normal(k, shape, scale=0.02):
        return scale * jax.random.normal(k, shape, dtype=jnp.float32)

    head_w = jnp.zeros((DIM, NCLS_PAD), jnp.float32)
    head_w = head_w.at[:, :NUM_CLASSES].set(normal(keys[3], (DIM, NUM_CLASSES)))

    p = {
        "pe_ln1_g": jnp.ones((1, PATCH_DIM), jnp.float32),
        "pe_ln1_b": jnp.zeros((1, PATCH_DIM), jnp.float32),
        "pe_w": normal(keys[0], (PATCH_DIM, DIM)).astype(jnp.bfloat16),
        "pe_b": jnp.zeros((1, DIM), jnp.float32),
        "pe_ln2_g": jnp.ones((1, DIM), jnp.float32),
        "pe_ln2_b": jnp.zeros((1, DIM), jnp.float32),
        "pos_embedding": normal(keys[1], (1, N_TOKENS, DIM), 1.0),
        "cls_token": normal(keys[2], (1, 1, DIM), 1.0),
        "final_ln_g": jnp.ones((1, DIM), jnp.float32),
        "final_ln_b": jnp.zeros((1, DIM), jnp.float32),
        "head_w": head_w.astype(jnp.bfloat16),
        "head_b": jnp.zeros((1, NCLS_PAD), jnp.float32),
        # per-layer weights stacked along a leading DEPTH axis (bf16 matmul weights)
        "layers": {
            "attn_ln_g": jnp.ones((DEPTH, 1, DIM), jnp.float32),
            "attn_ln_b": jnp.zeros((DEPTH, 1, DIM), jnp.float32),
            "wqkv": normal(keys[4], (DEPTH, DIM, 3 * INNER)).astype(jnp.bfloat16),
            "wo": normal(keys[5], (DEPTH, INNER, DIM)).astype(jnp.bfloat16),
            "bo": jnp.zeros((DEPTH, 1, DIM), jnp.float32),
            "ff_ln_g": jnp.ones((DEPTH, 1, DIM), jnp.float32),
            "ff_ln_b": jnp.zeros((DEPTH, 1, DIM), jnp.float32),
            "w1": normal(keys[6], (DEPTH, DIM, MLP_DIM)).astype(jnp.bfloat16),
            "b1": jnp.zeros((DEPTH, 1, MLP_DIM), jnp.float32),
            "w2": normal(keys[7], (DEPTH, MLP_DIM, DIM)).astype(jnp.bfloat16),
            "b2": jnp.zeros((DEPTH, 1, DIM), jnp.float32),
        },
    }
    return p


# ------------------------------ forward pass ------------------------------

def vit_forward(params, img):
    b, c, hh, ww = img.shape
    p1 = p2 = PATCH_SIZE
    h, w = hh // p1, ww // p2

    # rearrange 'b c (h p1) (w p2) -> b (h w) (p1 p2 c)'  (one-time XLA glue)
    x = img.reshape(b, c, h, p1, w, p2).transpose(0, 2, 4, 3, 5, 1)
    x = x.reshape(b, h * w, c * p1 * p2)

    # combined per-row additive term: row 0 = cls + pos[0], rows 1..n-1 = pos,
    # padded rows = 0 (tiny one-time XLA combine, consumed inside the kernel)
    addpos = jnp.zeros((1, NP_PAD, DIM), jnp.float32)
    addpos = addpos.at[:, :N_TOKENS].set(params["pos_embedding"][:, :N_TOKENS])
    addpos = addpos.at[:, 0].add(params["cls_token"][:, 0])

    # single fused pallas_call: patch-embed + encoder + final LN + cls pool + head
    logits = pallas_vit(x, addpos, params)       # (b, 1, NCLS_PAD)
    return logits[:, 0, :NUM_CLASSES]


if __name__ == "__main__":
    key = jax.random.PRNGKey(0)
    pkey, xkey = jax.random.split(key)
    params = init_params(pkey)
    img = jax.random.normal(xkey, (2, CHANNELS, IMAGE_SIZE, IMAGE_SIZE), dtype=jnp.float32)
    fwd = jax.jit(vit_forward)
    out = jax.block_until_ready(fwd(params, img))
    assert out.shape == (2, NUM_CLASSES), out.shape
    print("KERNEL_OK")
</pallas_src>

<mosaic_0001>
module attributes {stable_mosaic.version = 11 : i64} {
  func.func @_vit_kernel(%arg0: i32, %arg1: memref<1x4x768xf32, #tpu.memory_space<vmem>>, %arg2: memref<1x768xf32, #tpu.memory_space<vmem>>, %arg3: memref<1x768xf32, #tpu.memory_space<vmem>>, %arg4: memref<768x128xbf16, #tpu.memory_space<vmem>>, %arg5: memref<1x128xf32, #tpu.memory_space<vmem>>, %arg6: memref<1x128xf32, #tpu.memory_space<vmem>>, %arg7: memref<1x128xf32, #tpu.memory_space<vmem>>, %arg8: memref<1x8x128xf32, #tpu.memory_space<vmem>>, %arg9: memref<2x1x128xf32, #tpu.memory_space<vmem>>, %arg10: memref<2x1x128xf32, #tpu.memory_space<vmem>>, %arg11: memref<2x128x384xbf16, #tpu.memory_space<vmem>>, %arg12: memref<2x128x128xbf16, #tpu.memory_space<vmem>>, %arg13: memref<2x1x128xf32, #tpu.memory_space<vmem>>, %arg14: memref<2x1x128xf32, #tpu.memory_space<vmem>>, %arg15: memref<2x1x128xf32, #tpu.memory_space<vmem>>, %arg16: memref<2x128x256xbf16, #tpu.memory_space<vmem>>, %arg17: memref<2x1x256xf32, #tpu.memory_space<vmem>>, %arg18: memref<2x256x128xbf16, #tpu.memory_space<vmem>>, %arg19: memref<2x1x128xf32, #tpu.memory_space<vmem>>, %arg20: memref<1x128xf32, #tpu.memory_space<vmem>>, %arg21: memref<1x128xf32, #tpu.memory_space<vmem>>, %arg22: memref<128x128xbf16, #tpu.memory_space<vmem>>, %arg23: memref<1x128xf32, #tpu.memory_space<vmem>>, %arg24: memref<1x1x128xf32, #tpu.memory_space<vmem>>, %arg25: memref<1x8x128xf32, #tpu.memory_space<vmem>>, %arg26: memref<8x128xf32, #tpu.memory_space<vmem>>) attributes {dimension_semantics = [#tpu.dimension_semantics<parallel>], iteration_bounds = array<i64: 2>, scalar_prefetch = 0 : i64, scratch_operands = 2 : i64, tpu.core_type = #tpu.core_type<tc>, window_params = [{transform_indices = @transform_0, window_bounds = array<i64: 1, 4, 768>}, {pipeline_mode = #tpu.pipeline_mode<synchronous>, transform_indices = @transform_1, window_bounds = array<i64: 1, 768>}, {pipeline_mode = #tpu.pipeline_mode<synchronous>, transform_indices = @transform_2, window_bounds = array<i64: 1, 768>}, {pipeline_mode = #tpu.pipeline_mode<synchronous>, transform_indices = @transform_3, window_bounds = array<i64: 768, 128>}, {pipeline_mode = #tpu.pipeline_mode<synchronous>, transform_indices = @transform_4, window_bounds = array<i64: 1, 128>}, {pipeline_mode = #tpu.pipeline_mode<synchronous>, transform_indices = @transform_5, window_bounds = array<i64: 1, 128>}, {pipeline_mode = #tpu.pipeline_mode<synchronous>, transform_indices = @transform_6, window_bounds = array<i64: 1, 128>}, {pipeline_mode = #tpu.pipeline_mode<synchronous>, transform_indices = @transform_7, window_bounds = array<i64: 1, 8, 128>}, {pipeline_mode = #tpu.pipeline_mode<synchronous>, transform_indices = @transform_8, window_bounds = array<i64: 2, 1, 128>}, {pipeline_mode = #tpu.pipeline_mode<synchronous>, transform_indices = @transform_9, window_bounds = array<i64: 2, 1, 128>}, {pipeline_mode = #tpu.pipeline_mode<synchronous>, transform_indices = @transform_10, window_bounds = array<i64: 2, 128, 384>}, {pipeline_mode = #tpu.pipeline_mode<synchronous>, transform_indices = @transform_11, window_bounds = array<i64: 2, 128, 128>}, {pipeline_mode = #tpu.pipeline_mode<synchronous>, transform_indices = @transform_12, window_bounds = array<i64: 2, 1, 128>}, {pipeline_mode = #tpu.pipeline_mode<synchronous>, transform_indices = @transform_13, window_bounds = array<i64: 2, 1, 128>}, {pipeline_mode = #tpu.pipeline_mode<synchronous>, transform_indices = @transform_14, window_bounds = array<i64: 2, 1, 128>}, {pipeline_mode = #tpu.pipeline_mode<synchronous>, transform_indices = @transform_15, window_bounds = array<i64: 2, 128, 256>}, {pipeline_mode = #tpu.pipeline_mode<synchronous>, transform_indices = @transform_16, window_bounds = array<i64: 2, 1, 256>}, {pipeline_mode = #tpu.pipeline_mode<synchronous>, transform_indices = @transform_17, window_bounds = array<i64: 2, 256, 128>}, {pipeline_mode = #tpu.pipeline_mode<synchronous>, transform_indices = @transform_18, window_bounds = array<i64: 2, 1, 128>}, {pipeline_mode = #tpu.pipeline_mode<synchronous>, transform_indices = @transform_19, window_bounds = array<i64: 1, 128>}, {pipeline_mode = #tpu.pipeline_mode<synchronous>, transform_indices = @transform_20, window_bounds = array<i64: 1, 128>}, {pipeline_mode = #tpu.pipeline_mode<synchronous>, transform_indices = @transform_21, window_bounds = array<i64: 128, 128>}, {pipeline_mode = #tpu.pipeline_mode<synchronous>, transform_indices = @transform_22, window_bounds = array<i64: 1, 128>}, {transform_indices = @transform_23, window_bounds = array<i64: 1, 1, 128>}]} {
    %c0 = arith.constant 0 : index
    %c0_0 = arith.constant 0 : index
    %c0_1 = arith.constant 0 : index
    %0 = vector.load %arg1[%c0, %c0_0, %c0_1] : memref<1x4x768xf32, #tpu.memory_space<vmem>>, vector<1x4x768xf32>
    %1 = vector.shape_cast %0 : vector<1x4x768xf32> to vector<4x768xf32>
    %c0_2 = arith.constant 0 : index
    %c0_3 = arith.constant 0 : index
    %2 = vector.load %arg2[%c0_2, %c0_3] : memref<1x768xf32, #tpu.memory_space<vmem>>, vector<1x768xf32>
    %c0_4 = arith.constant 0 : index
    %c0_5 = arith.constant 0 : index
    %3 = vector.load %arg3[%c0_4, %c0_5] : memref<1x768xf32, #tpu.memory_space<vmem>>, vector<1x768xf32>
    %cst = arith.constant dense<0.000000e+00> : vector<4xf32>
    %4 = vector.multi_reduction <add>, %1, %cst [1] : vector<4x768xf32> to vector<4xf32>
    %5 = vector.shape_cast %4 : vector<4xf32> to vector<4x1xf32>
    %cst_6 = arith.constant 7.680000e+02 : f32
    %6 = vector.broadcast %cst_6 : f32 to vector<4x1xf32>
    %7 = arith.divf %5, %6 : vector<4x1xf32>
    %8 = vector.broadcast %7 : vector<4x1xf32> to vector<4x768xf32>
    %9 = arith.subf %1, %8 : vector<4x768xf32>
    %10 = arith.mulf %9, %9 : vector<4x768xf32>
    %cst_7 = arith.constant dense<0.000000e+00> : vector<4xf32>
    %11 = vector.multi_reduction <add>, %10, %cst_7 [1] : vector<4x768xf32> to vector<4xf32>
    %12 = vector.shape_cast %11 : vector<4xf32> to vector<4x1xf32>
    %cst_8 = arith.constant 7.680000e+02 : f32
    %13 = vector.broadcast %cst_8 : f32 to vector<4x1xf32>
    %14 = arith.divf %12, %13 : vector<4x1xf32>
    %cst_9 = arith.constant 9.99999974E-6 : f32
    %15 = vector.broadcast %cst_9 : f32 to vector<4x1xf32>
    %16 = arith.addf %14, %15 : vector<4x1xf32>
    %17 = math.rsqrt %16 : vector<4x1xf32>
    %18 = vector.broadcast %17 : vector<4x1xf32> to vector<4x768xf32>
    %19 = arith.mulf %9, %18 : vector<4x768xf32>
    %20 = vector.broadcast %2 : vector<1x768xf32> to vector<4x768xf32>
    %21 = arith.mulf %19, %20 : vector<4x768xf32>
    %22 = vector.broadcast %3 : vector<1x768xf32> to vector<4x768xf32>
    %23 = arith.addf %21, %22 : vector<4x768xf32>
    %c0_10 = arith.constant 0 : index
    %c0_11 = arith.constant 0 : index
    %24 = vector.load %arg4[%c0_10, %c0_11] : memref<768x128xbf16, #tpu.memory_space<vmem>>, vector<768x128xbf16>
    %25 = arith.truncf %23 : vector<4x768xf32> to vector<4x768xbf16>
    %cst_12 = arith.constant dense<0.000000e+00> : vector<4x128xf32>
    %26 = tpu.matmul %25, %24, %cst_12 {dimension_numbers = #tpu.dot_dimension_numbers<[1], [0], [0], [1], [0, 0, 1, 1], [], []>} : vector<4x768xbf16>, vector<768x128xbf16>, vector<4x128xf32> -> vector<4x128xf32>
    %c0_13 = arith.constant 0 : index
    %c0_14 = arith.constant 0 : index
    %27 = vector.load %arg5[%c0_13, %c0_14] : memref<1x128xf32, #tpu.memory_space<vmem>>, vector<1x128xf32>
    %28 = vector.broadcast %27 : vector<1x128xf32> to vector<4x128xf32>
    %29 = arith.addf %26, %28 : vector<4x128xf32>
    %c0_15 = arith.constant 0 : index
    %c0_16 = arith.constant 0 : index
    %30 = vector.load %arg6[%c0_15, %c0_16] : memref<1x128xf32, #tpu.memory_space<vmem>>, vector<1x128xf32>
    %c0_17 = arith.constant 0 : index
    %c0_18 = arith.constant 0 : index
    %31 = vector.load %arg7[%c0_17, %c0_18] : memref<1x128xf32, #tpu.memory_space<vmem>>, vector<1x128xf32>
    %cst_19 = arith.constant dense<0.000000e+00> : vector<4xf32>
    %32 = vector.multi_reduction <add>, %29, %cst_19 [1] : vector<4x128xf32> to vector<4xf32>
    %33 = vector.shape_cast %32 : vector<4xf32> to vector<4x1xf32>
    %cst_20 = arith.constant 1.280000e+02 : f32
    %34 = vector.broadcast %cst_20 : f32 to vector<4x1xf32>
    %35 = arith.divf %33, %34 : vector<4x1xf32>
    %36 = vector.broadcast %35 : vector<4x1xf32> to vector<4x128xf32>
    %37 = arith.subf %29, %36 : vector<4x128xf32>
    %38 = arith.mulf %37, %37 : vector<4x128xf32>
    %cst_21 = arith.constant dense<0.000000e+00> : vector<4xf32>
    %39 = vector.multi_reduction <add>, %38, %cst_21 [1] : vector<4x128xf32> to vector<4xf32>
    %40 = vector.shape_cast %39 : vector<4xf32> to vector<4x1xf32>
    %cst_22 = arith.constant 1.280000e+02 : f32
    %41 = vector.broadcast %cst_22 : f32 to vector<4x1xf32>
    %42 = arith.divf %40, %41 : vector<4x1xf32>
    %cst_23 = arith.constant 9.99999974E-6 : f32
    %43 = vector.broadcast %cst_23 : f32 to vector<4x1xf32>
    %44 = arith.addf %42, %43 : vector<4x1xf32>
    %45 = math.rsqrt %44 : vector<4x1xf32>
    %46 = vector.broadcast %45 : vector<4x1xf32> to vector<4x128xf32>
    %47 = arith.mulf %37, %46 : vector<4x128xf32>
    %48 = vector.broadcast %30 : vector<1x128xf32> to vector<4x128xf32>
    %49 = arith.mulf %47, %48 : vector<4x128xf32>
    %50 = vector.broadcast %31 : vector<1x128xf32> to vector<4x128xf32>
    %51 = arith.addf %49, %50 : vector<4x128xf32>
    %cst_24 = arith.constant 0.000000e+00 : f32
    %52 = vector.broadcast %cst_24 : f32 to vector<1x8x128xf32>
    %c0_25 = arith.constant 0 : index
    %c0_26 = arith.constant 0 : index
    %c0_27 = arith.constant 0 : index
    %53 = vector.load %arg25[%c0_25, %c0_26, %c0_27] : memref<1x8x128xf32, #tpu.memory_space<vmem>>, vector<1x8x128xf32>
    tpu.vector_store %arg25[%c0_25, %c0_26, %c0_27], %52 {strides = array<i32>} : memref<1x8x128xf32, #tpu.memory_space<vmem>>, vector<1x8x128xf32>,
    %54 = vector.shape_cast %51 : vector<4x128xf32> to vector<1x4x128xf32>
    %c0_28 = arith.constant 0 : index
    %c1 = arith.constant 1 : index
    %c0_29 = arith.constant 0 : index
    %55 = vector.load %arg25[%c0_28, %c1, %c0_29] : memref<1x8x128xf32, #tpu.memory_space<vmem>>, vector<1x4x128xf32>
    tpu.vector_store %arg25[%c0_28, %c1, %c0_29], %54 {strides = array<i32>} : memref<1x8x128xf32, #tpu.memory_space<vmem>>, vector<1x4x128xf32>,
    %c0_30 = arith.constant 0 : index
    %c0_31 = arith.constant 0 : index
    %c0_32 = arith.constant 0 : index
    %56 = vector.load %arg25[%c0_30, %c0_31, %c0_32] : memref<1x8x128xf32, #tpu.memory_space<vmem>>, vector<1x8x128xf32>
    %c0_33 = arith.constant 0 : index
    %c0_34 = arith.constant 0 : index
    %c0_35 = arith.constant 0 : index
    %57 = vector.load %arg8[%c0_33, %c0_34, %c0_35] : memref<1x8x128xf32, #tpu.memory_space<vmem>>, vector<1x8x128xf32>
    %58 = arith.addf %56, %57 : vector<1x8x128xf32>
    %59 = vector.shape_cast %58 : vector<1x8x128xf32> to vector<8x128xf32>
    %60 = tpu.iota {dimensions = array<i32: 2>} : vector<1x1x8xi32>
    %c5_i32 = arith.constant 5 : i32
    %61 = vector.broadcast %c5_i32 : i32 to vector<1x1x8xi32>
    %62 = arith.cmpi slt, %60, %61 : vector<1x1x8xi32>
    %cst_36 = arith.constant 0.000000e+00 : f32
    %cst_37 = arith.constant -1.000000e+30 : f32
    %63 = vector.broadcast %cst_36 : f32 to vector<1x1x8xf32>
    %64 = vector.broadcast %cst_37 : f32 to vector<1x1x8xf32>
    %65 = arith.select %62, %63, %64 : vector<1x1x8xi1>, vector<1x1x8xf32>
    %c0_38 = arith.constant 0 : index
    %c0_39 = arith.constant 0 : index
    %c0_40 = arith.constant 0 : index
    %66 = vector.load %arg9[%c0_38, %c0_39, %c0_40] : memref<2x1x128xf32, #tpu.memory_space<vmem>>, vector<1x1x128xf32>
    %67 = vector.shape_cast %66 : vector<1x1x128xf32> to vector<1x128xf32>
    %c0_41 = arith.constant 0 : index
    %c0_42 = arith.constant 0 : index
    %c0_43 = arith.constant 0 : index
    %68 = vector.load %arg10[%c0_41, %c0_42, %c0_43] : memref<2x1x128xf32, #tpu.memory_space<vmem>>, vector<1x1x128xf32>
    %69 = vector.shape_cast %68 : vector<1x1x128xf32> to vector<1x128xf32>
    %cst_44 = arith.constant dense<0.000000e+00> : vector<8xf32>
    %70 = vector.multi_reduction <add>, %59, %cst_44 [1] : vector<8x128xf32> to vector<8xf32>
    %71 = vector.shape_cast %70 : vector<8xf32> to vector<8x1xf32>
    %cst_45 = arith.constant 1.280000e+02 : f32
    %72 = vector.broadcast %cst_45 : f32 to vector<8x1xf32>
    %73 = arith.divf %71, %72 : vector<8x1xf32>
    %74 = vector.broadcast %73 : vector<8x1xf32> to vector<8x128xf32>
    %75 = arith.subf %59, %74 : vector<8x128xf32>
    %76 = arith.mulf %75, %75 : vector<8x128xf32>
    %cst_46 = arith.constant dense<0.000000e+00> : vector<8xf32>
    %77 = vector.multi_reduction <add>, %76, %cst_46 [1] : vector<8x128xf32> to vector<8xf32>
    %78 = vector.shape_cast %77 : vector<8xf32> to vector<8x1xf32>
    %cst_47 = arith.constant 1.280000e+02 : f32
    %79 = vector.broadcast %cst_47 : f32 to vector<8x1xf32>
    %80 = arith.divf %78, %79 : vector<8x1xf32>
    %cst_48 = arith.constant 9.99999974E-6 : f32
    %81 = vector.broadcast %cst_48 : f32 to vector<8x1xf32>
    %82 = arith.addf %80, %81 : vector<8x1xf32>
    %83 = math.rsqrt %82 : vector<8x1xf32>
    %84 = vector.broadcast %83 : vector<8x1xf32> to vector<8x128xf32>
    %85 = arith.mulf %75, %84 : vector<8x128xf32>
    %86 = vector.broadcast %67 : vector<1x128xf32> to vector<8x128xf32>
    %87 = arith.mulf %85, %86 : vector<8x128xf32>
    %88 = vector.broadcast %69 : vector<1x128xf32> to vector<8x128xf32>
    %89 = arith.addf %87, %88 : vector<8x128xf32>
    %c0_49 = arith.constant 0 : index
    %c0_50 = arith.constant 0 : index
    %c0_51 = arith.constant 0 : index
    %90 = vector.load %arg11[%c0_49, %c0_50, %c0_51] : memref<2x128x384xbf16, #tpu.memory_space<vmem>>, vector<1x128x384xbf16>
    %91 = vector.shape_cast %90 : vector<1x128x384xbf16> to vector<128x384xbf16>
    %92 = arith.truncf %89 : vector<8x128xf32> to vector<8x128xbf16>
    %cst_52 = arith.constant dense<0.000000e+00> : vector<8x384xf32>
    %93 = tpu.matmul %92, %91, %cst_52 {dimension_numbers = #tpu.dot_dimension_numbers<[1], [0], [0], [1], [0, 0, 1, 1], [], []>} : vector<8x128xbf16>, vector<128x384xbf16>, vector<8x384xf32> -> vector<8x384xf32>
    %94 = vector.extract_strided_slice %93 {offsets = [0, 0], sizes = [8, 128], strides = [1, 1]} : vector<8x384xf32> to vector<8x128xf32>
    %cst_53 = arith.constant 0.176776692 : f32
    %95 = vector.broadcast %cst_53 : f32 to vector<8x128xf32>
    %96 = arith.mulf %94, %95 : vector<8x128xf32>
    %97 = vector.extract_strided_slice %93 {offsets = [0, 128], sizes = [8, 128], strides = [1, 1]} : vector<8x384xf32> to vector<8x128xf32>
    %98 = vector.extract_strided_slice %93 {offsets = [0, 256], sizes = [8, 128], strides = [1, 1]} : vector<8x384xf32> to vector<8x128xf32>
    %99 = vector.extract_strided_slice %96 {offsets = [0, 0], sizes = [8, 32], strides = [1, 1]} : vector<8x128xf32> to vector<8x32xf32>
    %100 = vector.shape_cast %99 : vector<8x32xf32> to vector<1x8x32xf32>
    %101 = arith.truncf %100 : vector<1x8x32xf32> to vector<1x8x32xbf16>
    %102 = vector.extract_strided_slice %97 {offsets = [0, 0], sizes = [8, 32], strides = [1, 1]} : vector<8x128xf32> to vector<8x32xf32>
    %103 = vector.shape_cast %102 : vector<8x32xf32> to vector<1x8x32xf32>
    %104 = arith.truncf %103 : vector<1x8x32xf32> to vector<1x8x32xbf16>
    %105 = vector.extract_strided_slice %98 {offsets = [0, 0], sizes = [8, 32], strides = [1, 1]} : vector<8x128xf32> to vector<8x32xf32>
    %106 = vector.shape_cast %105 : vector<8x32xf32> to vector<1x8x32xf32>
    %107 = arith.truncf %106 : vector<1x8x32xf32> to vector<1x8x32xbf16>
    "tpu.trace_start"() <{level = 10 : i32, message = "bqd,bkd->bqk"}> : () -> ()
    %cst_54 = arith.constant dense<0.000000e+00> : vector<1x8x8xf32>
    %108 = tpu.matmul %101, %104, %cst_54 {dimension_numbers = #tpu.dot_dimension_numbers<[2], [2], [1], [1], [0, 0, 0, 1, 1, 1], [0], [0]>} : vector<1x8x32xbf16>, vector<1x8x32xbf16>, vector<1x8x8xf32> -> vector<1x8x8xf32>
    "tpu.trace_stop"() : () -> ()
    %109 = vector.broadcast %65 : vector<1x1x8xf32> to vector<1x8x8xf32>
    %110 = arith.addf %108, %109 : vector<1x8x8xf32>
    %cst_55 = arith.constant dense<0xFF800000> : vector<1x8xf32>
    %111 = vector.multi_reduction <maximumf>, %110, %cst_55 [2] : vector<1x8x8xf32> to vector<1x8xf32>
    %112 = vector.shape_cast %111 : vector<1x8xf32> to vector<1x8x1xf32>
    %113 = vector.broadcast %112 : vector<1x8x1xf32> to vector<1x8x8xf32>
    %114 = arith.subf %110, %113 : vector<1x8x8xf32>
    %115 = math.exp %114 : vector<1x8x8xf32>
    %cst_56 = arith.constant dense<0.000000e+00> : vector<1x8xf32>
    %116 = vector.multi_reduction <add>, %115, %cst_56 [2] : vector<1x8x8xf32> to vector<1x8xf32>
    %117 = vector.shape_cast %116 : vector<1x8xf32> to vector<1x8x1xf32>
    %118 = tpu.reciprocal %117 {approx = true} : vector<1x8x1xf32> -> vector<1x8x1xf32>
    %119 = vector.broadcast %118 : vector<1x8x1xf32> to vector<1x8x8xf32>
    %120 = arith.mulf %115, %119 : vector<1x8x8xf32>
    %121 = arith.truncf %120 : vector<1x8x8xf32> to vector<1x8x8xbf16>
    "tpu.trace_start"() <{level = 10 : i32, message = "bqk,bkd->bqd"}> : () -> ()
    %cst_57 = arith.constant dense<0.000000e+00> : vector<1x8x32xf32>
    %122 = tpu.matmul %121, %107, %cst_57 {dimension_numbers = #tpu.dot_dimension_numbers<[2], [1], [1], [2], [0, 0, 0, 1, 1, 2], [0], [0]>} : vector<1x8x8xbf16>, vector<1x8x32xbf16>, vector<1x8x32xf32> -> vector<1x8x32xf32>
    "tpu.trace_stop"() : () -> ()
    %123 = vector.shape_cast %122 : vector<1x8x32xf32> to vector<8x32xf32>
    %c0_58 = arith.constant 0 : index
    %c0_59 = arith.constant 0 : index
    %124 = vector.load %arg26[%c0_58, %c0_59] : memref<8x128xf32, #tpu.memory_space<vmem>>, vector<8x32xf32>
    tpu.vector_store %arg26[%c0_58, %c0_59], %123 {strides = array<i32>} : memref<8x128xf32, #tpu.memory_space<vmem>>, vector<8x32xf32>,
    %125 = vector.extract_strided_slice %96 {offsets = [0, 32], sizes = [8, 32], strides = [1, 1]} : vector<8x128xf32> to vector<8x32xf32>
    %126 = vector.shape_cast %125 : vector<8x32xf32> to vector<1x8x32xf32>
    %127 = arith.truncf %126 : vector<1x8x32xf32> to vector<1x8x32xbf16>
    %128 = vector.extract_strided_slice %97 {offsets = [0, 32], sizes = [8, 32], strides = [1, 1]} : vector<8x128xf32> to vector<8x32xf32>
    %129 = vector.shape_cast %128 : vector<8x32xf32> to vector<1x8x32xf32>
    %130 = arith.truncf %129 : vector<1x8x32xf32> to vector<1x8x32xbf16>
    %131 = vector.extract_strided_slice %98 {offsets = [0, 32], sizes = [8, 32], strides = [1, 1]} : vector<8x128xf32> to vector<8x32xf32>
    %132 = vector.shape_cast %131 : vector<8x32xf32> to vector<1x8x32xf32>
    %133 = arith.truncf %132 : vector<1x8x32xf32> to vector<1x8x32xbf16>
    "tpu.trace_start"() <{level = 10 : i32, message = "bqd,bkd->bqk"}> : () -> ()
    %cst_60 = arith.constant dense<0.000000e+00> : vector<1x8x8xf32>
    %134 = tpu.matmul %127, %130, %cst_60 {dimension_numbers = #tpu.dot_dimension_numbers<[2], [2], [1], [1], [0, 0, 0, 1, 1, 1], [0], [0]>} : vector<1x8x32xbf16>, vector<1x8x32xbf16>, vector<1x8x8xf32> -> vector<1x8x8xf32>
    "tpu.trace_stop"() : () -> ()
    %135 = vector.broadcast %65 : vector<1x1x8xf32> to vector<1x8x8xf32>
    %136 = arith.addf %134, %135 : vector<1x8x8xf32>
    %cst_61 = arith.constant dense<0xFF800000> : vector<1x8xf32>
    %137 = vector.multi_reduction <maximumf>, %136, %cst_61 [2] : vector<1x8x8xf32> to vector<1x8xf32>
    %138 = vector.shape_cast %137 : vector<1x8xf32> to vector<1x8x1xf32>
    %139 = vector.broadcast %138 : vector<1x8x1xf32> to vector<1x8x8xf32>
    %140 = arith.subf %136, %139 : vector<1x8x8xf32>
    %141 = math.exp %140 : vector<1x8x8xf32>
    %cst_62 = arith.constant dense<0.000000e+00> : vector<1x8xf32>
    %142 = vector.multi_reduction <add>, %141, %cst_62 [2] : vector<1x8x8xf32> to vector<1x8xf32>
    %143 = vector.shape_cast %142 : vector<1x8xf32> to vector<1x8x1xf32>
    %144 = tpu.reciprocal %143 {approx = true} : vector<1x8x1xf32> -> vector<1x8x1xf32>
    %145 = vector.broadcast %144 : vector<1x8x1xf32> to vector<1x8x8xf32>
    %146 = arith.mulf %141, %145 : vector<1x8x8xf32>
    %147 = arith.truncf %146 : vector<1x8x8xf32> to vector<1x8x8xbf16>
    "tpu.trace_start"() <{level = 10 : i32, message = "bqk,bkd->bqd"}> : () -> ()
    %cst_63 = arith.constant dense<0.000000e+00> : vector<1x8x32xf32>
    %148 = tpu.matmul %147, %133, %cst_63 {dimension_numbers = #tpu.dot_dimension_numbers<[2], [1], [1], [2], [0, 0, 0, 1, 1, 2], [0], [0]>} : vector<1x8x8xbf16>, vector<1x8x32xbf16>, vector<1x8x32xf32> -> vector<1x8x32xf32>
    "tpu.trace_stop"() : () -> ()
    %149 = vector.shape_cast %148 : vector<1x8x32xf32> to vector<8x32xf32>
    %c0_64 = arith.constant 0 : index
    %c32 = arith.constant 32 : index
    %150 = vector.load %arg26[%c0_64, %c32] : memref<8x128xf32, #tpu.memory_space<vmem>>, vector<8x32xf32>
    tpu.vector_store %arg26[%c0_64, %c32], %149 {strides = array<i32>} : memref<8x128xf32, #tpu.memory_space<vmem>>, vector<8x32xf32>,
    %151 = vector.extract_strided_slice %96 {offsets = [0, 64], sizes = [8, 32], strides = [1, 1]} : vector<8x128xf32> to vector<8x32xf32>
    %152 = vector.shape_cast %151 : vector<8x32xf32> to vector<1x8x32xf32>
    %153 = arith.truncf %152 : vector<1x8x32xf32> to vector<1x8x32xbf16>
    %154 = vector.extract_strided_slice %97 {offsets = [0, 64], sizes = [8, 32], strides = [1, 1]} : vector<8x128xf32> to vector<8x32xf32>
    %155 = vector.shape_cast %154 : vector<8x32xf32> to vector<1x8x32xf32>
    %156 = arith.truncf %155 : vector<1x8x32xf32> to vector<1x8x32xbf16>
    %157 = vector.extract_strided_slice %98 {offsets = [0, 64], sizes = [8, 32], strides = [1, 1]} : vector<8x128xf32> to vector<8x32xf32>
    %158 = vector.shape_cast %157 : vector<8x32xf32> to vector<1x8x32xf32>
    %159 = arith.truncf %158 : vector<1x8x32xf32> to vector<1x8x32xbf16>
    "tpu.trace_start"() <{level = 10 : i32, message = "bqd,bkd->bqk"}> : () -> ()
    %cst_65 = arith.constant dense<0.000000e+00> : vector<1x8x8xf32>
    %160 = tpu.matmul %153, %156, %cst_65 {dimension_numbers = #tpu.dot_dimension_numbers<[2], [2], [1], [1], [0, 0, 0, 1, 1, 1], [0], [0]>} : vector<1x8x32xbf16>, vector<1x8x32xbf16>, vector<1x8x8xf32> -> vector<1x8x8xf32>
    "tpu.trace_stop"() : () -> ()
    %161 = vector.broadcast %65 : vector<1x1x8xf32> to vector<1x8x8xf32>
    %162 = arith.addf %160, %161 : vector<1x8x8xf32>
    %cst_66 = arith.constant dense<0xFF800000> : vector<1x8xf32>
    %163 = vector.multi_reduction <maximumf>, %162, %cst_66 [2] : vector<1x8x8xf32> to vector<1x8xf32>
    %164 = vector.shape_cast %163 : vector<1x8xf32> to vector<1x8x1xf32>
    %165 = vector.broadcast %164 : vector<1x8x1xf32> to vector<1x8x8xf32>
    %166 = arith.subf %162, %165 : vector<1x8x8xf32>
    %167 = math.exp %166 : vector<1x8x8xf32>
    %cst_67 = arith.constant dense<0.000000e+00> : vector<1x8xf32>
    %168 = vector.multi_reduction <add>, %167, %cst_67 [2] : vector<1x8x8xf32> to vector<1x8xf32>
    %169 = vector.shape_cast %168 : vector<1x8xf32> to vector<1x8x1xf32>
    %170 = tpu.reciprocal %169 {approx = true} : vector<1x8x1xf32> -> vector<1x8x1xf32>
    %171 = vector.broadcast %170 : vector<1x8x1xf32> to vector<1x8x8xf32>
    %172 = arith.mulf %167, %171 : vector<1x8x8xf32>
    %173 = arith.truncf %172 : vector<1x8x8xf32> to vector<1x8x8xbf16>
    "tpu.trace_start"() <{level = 10 : i32, message = "bqk,bkd->bqd"}> : () -> ()
    %cst_68 = arith.constant dense<0.000000e+00> : vector<1x8x32xf32>
    %174 = tpu.matmul %173, %159, %cst_68 {dimension_numbers = #tpu.dot_dimension_numbers<[2], [1], [1], [2], [0, 0, 0, 1, 1, 2], [0], [0]>} : vector<1x8x8xbf16>, vector<1x8x32xbf16>, vector<1x8x32xf32> -> vector<1x8x32xf32>
    "tpu.trace_stop"() : () -> ()
    %175 = vector.shape_cast %174 : vector<1x8x32xf32> to vector<8x32xf32>
    %c0_69 = arith.constant 0 : index
    %c64 = arith.constant 64 : index
    %176 = vector.load %arg26[%c0_69, %c64] : memref<8x128xf32, #tpu.memory_space<vmem>>, vector<8x32xf32>
    tpu.vector_store %arg26[%c0_69, %c64], %175 {strides = array<i32>} : memref<8x128xf32, #tpu.memory_space<vmem>>, vector<8x32xf32>,
    %177 = vector.extract_strided_slice %96 {offsets = [0, 96], sizes = [8, 32], strides = [1, 1]} : vector<8x128xf32> to vector<8x32xf32>
    %178 = vector.shape_cast %177 : vector<8x32xf32> to vector<1x8x32xf32>
    %179 = arith.truncf %178 : vector<1x8x32xf32> to vector<1x8x32xbf16>
    %180 = vector.extract_strided_slice %97 {offsets = [0, 96], sizes = [8, 32], strides = [1, 1]} : vector<8x128xf32> to vector<8x32xf32>
    %181 = vector.shape_cast %180 : vector<8x32xf32> to vector<1x8x32xf32>
    %182 = arith.truncf %181 : vector<1x8x32xf32> to vector<1x8x32xbf16>
    %183 = vector.extract_strided_slice %98 {offsets = [0, 96], sizes = [8, 32], strides = [1, 1]} : vector<8x128xf32> to vector<8x32xf32>
    %184 = vector.shape_cast %183 : vector<8x32xf32> to vector<1x8x32xf32>
    %185 = arith.truncf %184 : vector<1x8x32xf32> to vector<1x8x32xbf16>
    "tpu.trace_start"() <{level = 10 : i32, message = "bqd,bkd->bqk"}> : () -> ()
    %cst_70 = arith.constant dense<0.000000e+00> : vector<1x8x8xf32>
    %186 = tpu.matmul %179, %182, %cst_70 {dimension_numbers = #tpu.dot_dimension_numbers<[2], [2], [1], [1], [0, 0, 0, 1, 1, 1], [0], [0]>} : vector<1x8x32xbf16>, vector<1x8x32xbf16>, vector<1x8x8xf32> -> vector<1x8x8xf32>
    "tpu.trace_stop"() : () -> ()
    %187 = vector.broadcast %65 : vector<1x1x8xf32> to vector<1x8x8xf32>
    %188 = arith.addf %186, %187 : vector<1x8x8xf32>
    %cst_71 = arith.constant dense<0xFF800000> : vector<1x8xf32>
    %189 = vector.multi_reduction <maximumf>, %188, %cst_71 [2] : vector<1x8x8xf32> to vector<1x8xf32>
    %190 = vector.shape_cast %189 : vector<1x8xf32> to vector<1x8x1xf32>
    %191 = vector.broadcast %190 : vector<1x8x1xf32> to vector<1x8x8xf32>
    %192 = arith.subf %188, %191 : vector<1x8x8xf32>
    %193 = math.exp %192 : vector<1x8x8xf32>
    %cst_72 = arith.constant dense<0.000000e+00> : vector<1x8xf32>
    %194 = vector.multi_reduction <add>, %193, %cst_72 [2] : vector<1x8x8xf32> to vector<1x8xf32>
    %195 = vector.shape_cast %194 : vector<1x8xf32> to vector<1x8x1xf32>
    %196 = tpu.reciprocal %195 {approx = true} : vector<1x8x1xf32> -> vector<1x8x1xf32>
    %197 = vector.broadcast %196 : vector<1x8x1xf32> to vector<1x8x8xf32>
    %198 = arith.mulf %193, %197 : vector<1x8x8xf32>
    %199 = arith.truncf %198 : vector<1x8x8xf32> to vector<1x8x8xbf16>
    "tpu.trace_start"() <{level = 10 : i32, message = "bqk,bkd->bqd"}> : () -> ()
    %cst_73 = arith.constant dense<0.000000e+00> : vector<1x8x32xf32>
    %200 = tpu.matmul %199, %185, %cst_73 {dimension_numbers = #tpu.dot_dimension_numbers<[2], [1], [1], [2], [0, 0, 0, 1, 1, 2], [0], [0]>} : vector<1x8x8xbf16>, vector<1x8x32xbf16>, vector<1x8x32xf32> -> vector<1x8x32xf32>
    "tpu.trace_stop"() : () -> ()
    %201 = vector.shape_cast %200 : vector<1x8x32xf32> to vector<8x32xf32>
    %c0_74 = arith.constant 0 : index
    %c96 = arith.constant 96 : index
    %202 = vector.load %arg26[%c0_74, %c96] : memref<8x128xf32, #tpu.memory_space<vmem>>, vector<8x32xf32>
    tpu.vector_store %arg26[%c0_74, %c96], %201 {strides = array<i32>} : memref<8x128xf32, #tpu.memory_space<vmem>>, vector<8x32xf32>,
    %c0_75 = arith.constant 0 : index
    %c0_76 = arith.constant 0 : index
    %203 = vector.load %arg26[%c0_75, %c0_76] : memref<8x128xf32, #tpu.memory_space<vmem>>, vector<8x128xf32>
    %c0_77 = arith.constant 0 : index
    %c0_78 = arith.constant 0 : index
    %c0_79 = arith.constant 0 : index
    %204 = vector.load %arg12[%c0_77, %c0_78, %c0_79] : memref<2x128x128xbf16, #tpu.memory_space<vmem>>, vector<1x128x128xbf16>
    %205 = vector.shape_cast %204 : vector<1x128x128xbf16> to vector<128x128xbf16>
    %206 = arith.truncf %203 : vector<8x128xf32> to vector<8x128xbf16>
    %cst_80 = arith.constant dense<0.000000e+00> : vector<8x128xf32>
    %207 = tpu.matmul %206, %205, %cst_80 {dimension_numbers = #tpu.dot_dimension_numbers<[1], [0], [0], [1], [0, 0, 1, 1], [], []>} : vector<8x128xbf16>, vector<128x128xbf16>, vector<8x128xf32> -> vector<8x128xf32>
    %c0_81 = arith.constant 0 : index
    %c0_82 = arith.constant 0 : index
    %c0_83 = arith.constant 0 : index
    %208 = vector.load %arg13[%c0_81, %c0_82, %c0_83] : memref<2x1x128xf32, #tpu.memory_space<vmem>>, vector<1x1x128xf32>
    %209 = vector.shape_cast %208 : vector<1x1x128xf32> to vector<1x128xf32>
    %210 = vector.broadcast %209 : vector<1x128xf32> to vector<8x128xf32>
    %211 = arith.addf %207, %210 : vector<8x128xf32>
    %212 = arith.addf %211, %59 : vector<8x128xf32>
    %c0_84 = arith.constant 0 : index
    %c0_85 = arith.constant 0 : index
    %c0_86 = arith.constant 0 : index
    %213 = vector.load %arg14[%c0_84, %c0_85, %c0_86] : memref<2x1x128xf32, #tpu.memory_space<vmem>>, vector<1x1x128xf32>
    %214 = vector.shape_cast %213 : vector<1x1x128xf32> to vector<1x128xf32>
    %c0_87 = arith.constant 0 : index
    %c0_88 = arith.constant 0 : index
    %c0_89 = arith.constant 0 : index
    %215 = vector.load %arg15[%c0_87, %c0_88, %c0_89] : memref<2x1x128xf32, #tpu.memory_space<vmem>>, vector<1x1x128xf32>
    %216 = vector.shape_cast %215 : vector<1x1x128xf32> to vector<1x128xf32>
    %cst_90 = arith.constant dense<0.000000e+00> : vector<8xf32>
    %217 = vector.multi_reduction <add>, %212, %cst_90 [1] : vector<8x128xf32> to vector<8xf32>
    %218 = vector.shape_cast %217 : vector<8xf32> to vector<8x1xf32>
    %cst_91 = arith.constant 1.280000e+02 : f32
    %219 = vector.broadcast %cst_91 : f32 to vector<8x1xf32>
    %220 = arith.divf %218, %219 : vector<8x1xf32>
    %221 = vector.broadcast %220 : vector<8x1xf32> to vector<8x128xf32>
    %222 = arith.subf %212, %221 : vector<8x128xf32>
    %223 = arith.mulf %222, %222 : vector<8x128xf32>
    %cst_92 = arith.constant dense<0.000000e+00> : vector<8xf32>
    %224 = vector.multi_reduction <add>, %223, %cst_92 [1] : vector<8x128xf32> to vector<8xf32>
    %225 = vector.shape_cast %224 : vector<8xf32> to vector<8x1xf32>
    %cst_93 = arith.constant 1.280000e+02 : f32
    %226 = vector.broadcast %cst_93 : f32 to vector<8x1xf32>
    %227 = arith.divf %225, %226 : vector<8x1xf32>
    %cst_94 = arith.constant 9.99999974E-6 : f32
    %228 = vector.broadcast %cst_94 : f32 to vector<8x1xf32>
    %229 = arith.addf %227, %228 : vector<8x1xf32>
    %230 = math.rsqrt %229 : vector<8x1xf32>
    %231 = vector.broadcast %230 : vector<8x1xf32> to vector<8x128xf32>
    %232 = arith.mulf %222, %231 : vector<8x128xf32>
    %233 = vector.broadcast %214 : vector<1x128xf32> to vector<8x128xf32>
    %234 = arith.mulf %232, %233 : vector<8x128xf32>
    %235 = vector.broadcast %216 : vector<1x128xf32> to vector<8x128xf32>
    %236 = arith.addf %234, %235 : vector<8x128xf32>
    %c0_95 = arith.constant 0 : index
    %c0_96 = arith.constant 0 : index
    %c0_97 = arith.constant 0 : index
    %237 = vector.load %arg16[%c0_95, %c0_96, %c0_97] : memref<2x128x256xbf16, #tpu.memory_space<vmem>>, vector<1x128x256xbf16>
    %238 = vector.shape_cast %237 : vector<1x128x256xbf16> to vector<128x256xbf16>
    %239 = arith.truncf %236 : vector<8x128xf32> to vector<8x128xbf16>
    %cst_98 = arith.constant dense<0.000000e+00> : vector<8x256xf32>
    %240 = tpu.matmul %239, %238, %cst_98 {dimension_numbers = #tpu.dot_dimension_numbers<[1], [0], [0], [1], [0, 0, 1, 1], [], []>} : vector<8x128xbf16>, vector<128x256xbf16>, vector<8x256xf32> -> vector<8x256xf32>
    %c0_99 = arith.constant 0 : index
    %c0_100 = arith.constant 0 : index
    %c0_101 = arith.constant 0 : index
    %241 = vector.load %arg17[%c0_99, %c0_100, %c0_101] : memref<2x1x256xf32, #tpu.memory_space<vmem>>, vector<1x1x256xf32>
    %242 = vector.shape_cast %241 : vector<1x1x256xf32> to vector<1x256xf32>
    %243 = vector.broadcast %242 : vector<1x256xf32> to vector<8x256xf32>
    %244 = arith.addf %240, %243 : vector<8x256xf32>
    %cst_102 = arith.constant 5.000000e-01 : f32
    %245 = vector.broadcast %cst_102 : f32 to vector<8x256xf32>
    %246 = arith.mulf %245, %244 : vector<8x256xf32>
    %cst_103 = arith.constant 0.707106769 : f32
    %247 = vector.broadcast %cst_103 : f32 to vector<8x256xf32>
    %248 = arith.mulf %244, %247 : vector<8x256xf32>
    %249 = math.erf %248 : vector<8x256xf32>
    %cst_104 = arith.constant 1.000000e+00 : f32
    %250 = vector.broadcast %cst_104 : f32 to vector<8x256xf32>
    %251 = arith.addf %250, %249 : vector<8x256xf32>
    %252 = arith.mulf %246, %251 : vector<8x256xf32>
    %c0_105 = arith.constant 0 : index
    %c0_106 = arith.constant 0 : index
    %c0_107 = arith.constant 0 : index
    %253 = vector.load %arg18[%c0_105, %c0_106, %c0_107] : memref<2x256x128xbf16, #tpu.memory_space<vmem>>, vector<1x256x128xbf16>
    %254 = vector.shape_cast %253 : vector<1x256x128xbf16> to vector<256x128xbf16>
    %255 = arith.truncf %252 : vector<8x256xf32> to vector<8x256xbf16>
    %cst_108 = arith.constant dense<0.000000e+00> : vector<8x128xf32>
    %256 = tpu.matmul %255, %254, %cst_108 {dimension_numbers = #tpu.dot_dimension_numbers<[1], [0], [0], [1], [0, 0, 1, 1], [], []>} : vector<8x256xbf16>, vector<256x128xbf16>, vector<8x128xf32> -> vector<8x128xf32>
    %c0_109 = arith.constant 0 : index
    %c0_110 = arith.constant 0 : index
    %c0_111 = arith.constant 0 : index
    %257 = vector.load %arg19[%c0_109, %c0_110, %c0_111] : memref<2x1x128xf32, #tpu.memory_space<vmem>>, vector<1x1x128xf32>
    %258 = vector.shape_cast %257 : vector<1x1x128xf32> to vector<1x128xf32>
    %259 = vector.broadcast %258 : vector<1x128xf32> to vector<8x128xf32>
    %260 = arith.addf %256, %259 : vector<8x128xf32>
    %261 = arith.addf %260, %212 : vector<8x128xf32>
    %c1_112 = arith.constant 1 : index
    %c0_113 = arith.constant 0 : index
    %c0_114 = arith.constant 0 : index
    %262 = vector.load %arg9[%c1_112, %c0_113, %c0_114] : memref<2x1x128xf32, #tpu.memory_space<vmem>>, vector<1x1x128xf32>
    %263 = vector.shape_cast %262 : vector<1x1x128xf32> to vector<1x128xf32>
    %c1_115 = arith.constant 1 : index
    %c0_116 = arith.constant 0 : index
    %c0_117 = arith.constant 0 : index
    %264 = vector.load %arg10[%c1_115, %c0_116, %c0_117] : memref<2x1x128xf32, #tpu.memory_space<vmem>>, vector<1x1x128xf32>
    %265 = vector.shape_cast %264 : vector<1x1x128xf32> to vector<1x128xf32>
    %cst_118 = arith.constant dense<0.000000e+00> : vector<8xf32>
    %266 = vector.multi_reduction <add>, %261, %cst_118 [1] : vector<8x128xf32> to vector<8xf32>
    %267 = vector.shape_cast %266 : vector<8xf32> to vector<8x1xf32>
    %cst_119 = arith.constant 1.280000e+02 : f32
    %268 = vector.broadcast %cst_119 : f32 to vector<8x1xf32>
    %269 = arith.divf %267, %268 : vector<8x1xf32>
    %270 = vector.broadcast %269 : vector<8x1xf32> to vector<8x128xf32>
    %271 = arith.subf %261, %270 : vector<8x128xf32>
    %272 = arith.mulf %271, %271 : vector<8x128xf32>
    %cst_120 = arith.constant dense<0.000000e+00> : vector<8xf32>
    %273 = vector.multi_reduction <add>, %272, %cst_120 [1] : vector<8x128xf32> to vector<8xf32>
    %274 = vector.shape_cast %273 : vector<8xf32> to vector<8x1xf32>
    %cst_121 = arith.constant 1.280000e+02 : f32
    %275 = vector.broadcast %cst_121 : f32 to vector<8x1xf32>
    %276 = arith.divf %274, %275 : vector<8x1xf32>
    %cst_122 = arith.constant 9.99999974E-6 : f32
    %277 = vector.broadcast %cst_122 : f32 to vector<8x1xf32>
    %278 = arith.addf %276, %277 : vector<8x1xf32>
    %279 = math.rsqrt %278 : vector<8x1xf32>
    %280 = vector.broadcast %279 : vector<8x1xf32> to vector<8x128xf32>
    %281 = arith.mulf %271, %280 : vector<8x128xf32>
    %282 = vector.broadcast %263 : vector<1x128xf32> to vector<8x128xf32>
    %283 = arith.mulf %281, %282 : vector<8x128xf32>
    %284 = vector.broadcast %265 : vector<1x128xf32> to vector<8x128xf32>
    %285 = arith.addf %283, %284 : vector<8x128xf32>
    %c1_123 = arith.constant 1 : index
    %c0_124 = arith.constant 0 : index
    %c0_125 = arith.constant 0 : index
    %286 = vector.load %arg11[%c1_123, %c0_124, %c0_125] : memref<2x128x384xbf16, #tpu.memory_space<vmem>>, vector<1x128x384xbf16>
    %287 = vector.shape_cast %286 : vector<1x128x384xbf16> to vector<128x384xbf16>
    %288 = arith.truncf %285 : vector<8x128xf32> to vector<8x128xbf16>
    %cst_126 = arith.constant dense<0.000000e+00> : vector<8x384xf32>
    %289 = tpu.matmul %288, %287, %cst_126 {dimension_numbers = #tpu.dot_dimension_numbers<[1], [0], [0], [1], [0, 0, 1, 1], [], []>} : vector<8x128xbf16>, vector<128x384xbf16>, vector<8x384xf32> -> vector<8x384xf32>
    %290 = vector.extract_strided_slice %289 {offsets = [0, 0], sizes = [8, 128], strides = [1, 1]} : vector<8x384xf32> to vector<8x128xf32>
    %cst_127 = arith.constant 0.176776692 : f32
    %291 = vector.broadcast %cst_127 : f32 to vector<8x128xf32>
    %292 = arith.mulf %290, %291 : vector<8x128xf32>
    %293 = vector.extract_strided_slice %289 {offsets = [0, 128], sizes = [8, 128], strides = [1, 1]} : vector<8x384xf32> to vector<8x128xf32>
    %294 = vector.extract_strided_slice %289 {offsets = [0, 256], sizes = [8, 128], strides = [1, 1]} : vector<8x384xf32> to vector<8x128xf32>
    %295 = vector.extract_strided_slice %292 {offsets = [0, 0], sizes = [8, 32], strides = [1, 1]} : vector<8x128xf32> to vector<8x32xf32>
    %296 = vector.shape_cast %295 : vector<8x32xf32> to vector<1x8x32xf32>
    %297 = arith.truncf %296 : vector<1x8x32xf32> to vector<1x8x32xbf16>
    %298 = vector.extract_strided_slice %293 {offsets = [0, 0], sizes = [8, 32], strides = [1, 1]} : vector<8x128xf32> to vector<8x32xf32>
    %299 = vector.shape_cast %298 : vector<8x32xf32> to vector<1x8x32xf32>
    %300 = arith.truncf %299 : vector<1x8x32xf32> to vector<1x8x32xbf16>
    %301 = vector.extract_strided_slice %294 {offsets = [0, 0], sizes = [8, 32], strides = [1, 1]} : vector<8x128xf32> to vector<8x32xf32>
    %302 = vector.shape_cast %301 : vector<8x32xf32> to vector<1x8x32xf32>
    %303 = arith.truncf %302 : vector<1x8x32xf32> to vector<1x8x32xbf16>
    "tpu.trace_start"() <{level = 10 : i32, message = "bqd,bkd->bqk"}> : () -> ()
    %cst_128 = arith.constant dense<0.000000e+00> : vector<1x8x8xf32>
    %304 = tpu.matmul %297, %300, %cst_128 {dimension_numbers = #tpu.dot_dimension_numbers<[2], [2], [1], [1], [0, 0, 0, 1, 1, 1], [0], [0]>} : vector<1x8x32xbf16>, vector<1x8x32xbf16>, vector<1x8x8xf32> -> vector<1x8x8xf32>
    "tpu.trace_stop"() : () -> ()
    %305 = vector.broadcast %65 : vector<1x1x8xf32> to vector<1x8x8xf32>
    %306 = arith.addf %304, %305 : vector<1x8x8xf32>
    %cst_129 = arith.constant dense<0xFF800000> : vector<1x8xf32>
    %307 = vector.multi_reduction <maximumf>, %306, %cst_129 [2] : vector<1x8x8xf32> to vector<1x8xf32>
    %308 = vector.shape_cast %307 : vector<1x8xf32> to vector<1x8x1xf32>
    %309 = vector.broadcast %308 : vector<1x8x1xf32> to vector<1x8x8xf32>
    %310 = arith.subf %306, %309 : vector<1x8x8xf32>
    %311 = math.exp %310 : vector<1x8x8xf32>
    %cst_130 = arith.constant dense<0.000000e+00> : vector<1x8xf32>
    %312 = vector.multi_reduction <add>, %311, %cst_130 [2] : vector<1x8x8xf32> to vector<1x8xf32>
    %313 = vector.shape_cast %312 : vector<1x8xf32> to vector<1x8x1xf32>
    %314 = tpu.reciprocal %313 {approx = true} : vector<1x8x1xf32> -> vector<1x8x1xf32>
    %315 = vector.broadcast %314 : vector<1x8x1xf32> to vector<1x8x8xf32>
    %316 = arith.mulf %311, %315 : vector<1x8x8xf32>
    %317 = arith.truncf %316 : vector<1x8x8xf32> to vector<1x8x8xbf16>
    "tpu.trace_start"() <{level = 10 : i32, message = "bqk,bkd->bqd"}> : () -> ()
    %cst_131 = arith.constant dense<0.000000e+00> : vector<1x8x32xf32>
    %318 = tpu.matmul %317, %303, %cst_131 {dimension_numbers = #tpu.dot_dimension_numbers<[2], [1], [1], [2], [0, 0, 0, 1, 1, 2], [0], [0]>} : vector<1x8x8xbf16>, vector<1x8x32xbf16>, vector<1x8x32xf32> -> vector<1x8x32xf32>
    "tpu.trace_stop"() : () -> ()
    %319 = vector.shape_cast %318 : vector<1x8x32xf32> to vector<8x32xf32>
    %c0_132 = arith.constant 0 : index
    %c0_133 = arith.constant 0 : index
    %320 = vector.load %arg26[%c0_132, %c0_133] : memref<8x128xf32, #tpu.memory_space<vmem>>, vector<8x32xf32>
    tpu.vector_store %arg26[%c0_132, %c0_133], %319 {strides = array<i32>} : memref<8x128xf32, #tpu.memory_space<vmem>>, vector<8x32xf32>,
    %321 = vector.extract_strided_slice %292 {offsets = [0, 32], sizes = [8, 32], strides = [1, 1]} : vector<8x128xf32> to vector<8x32xf32>
    %322 = vector.shape_cast %321 : vector<8x32xf32> to vector<1x8x32xf32>
    %323 = arith.truncf %322 : vector<1x8x32xf32> to vector<1x8x32xbf16>
    %324 = vector.extract_strided_slice %293 {offsets = [0, 32], sizes = [8, 32], strides = [1, 1]} : vector<8x128xf32> to vector<8x32xf32>
    %325 = vector.shape_cast %324 : vector<8x32xf32> to vector<1x8x32xf32>
    %326 = arith.truncf %325 : vector<1x8x32xf32> to vector<1x8x32xbf16>
    %327 = vector.extract_strided_slice %294 {offsets = [0, 32], sizes = [8, 32], strides = [1, 1]} : vector<8x128xf32> to vector<8x32xf32>
    %328 = vector.shape_cast %327 : vector<8x32xf32> to vector<1x8x32xf32>
    %329 = arith.truncf %328 : vector<1x8x32xf32> to vector<1x8x32xbf16>
    "tpu.trace_start"() <{level = 10 : i32, message = "bqd,bkd->bqk"}> : () -> ()
    %cst_134 = arith.constant dense<0.000000e+00> : vector<1x8x8xf32>
    %330 = tpu.matmul %323, %326, %cst_134 {dimension_numbers = #tpu.dot_dimension_numbers<[2], [2], [1], [1], [0, 0, 0, 1, 1, 1], [0], [0]>} : vector<1x8x32xbf16>, vector<1x8x32xbf16>, vector<1x8x8xf32> -> vector<1x8x8xf32>
    "tpu.trace_stop"() : () -> ()
    %331 = vector.broadcast %65 : vector<1x1x8xf32> to vector<1x8x8xf32>
    %332 = arith.addf %330, %331 : vector<1x8x8xf32>
    %cst_135 = arith.constant dense<0xFF800000> : vector<1x8xf32>
    %333 = vector.multi_reduction <maximumf>, %332, %cst_135 [2] : vector<1x8x8xf32> to vector<1x8xf32>
    %334 = vector.shape_cast %333 : vector<1x8xf32> to vector<1x8x1xf32>
    %335 = vector.broadcast %334 : vector<1x8x1xf32> to vector<1x8x8xf32>
    %336 = arith.subf %332, %335 : vector<1x8x8xf32>
    %337 = math.exp %336 : vector<1x8x8xf32>
    %cst_136 = arith.constant dense<0.000000e+00> : vector<1x8xf32>
    %338 = vector.multi_reduction <add>, %337, %cst_136 [2] : vector<1x8x8xf32> to vector<1x8xf32>
    %339 = vector.shape_cast %338 : vector<1x8xf32> to vector<1x8x1xf32>
    %340 = tpu.reciprocal %339 {approx = true} : vector<1x8x1xf32> -> vector<1x8x1xf32>
    %341 = vector.broadcast %340 : vector<1x8x1xf32> to vector<1x8x8xf32>
    %342 = arith.mulf %337, %341 : vector<1x8x8xf32>
    %343 = arith.truncf %342 : vector<1x8x8xf32> to vector<1x8x8xbf16>
    "tpu.trace_start"() <{level = 10 : i32, message = "bqk,bkd->bqd"}> : () -> ()
    %cst_137 = arith.constant dense<0.000000e+00> : vector<1x8x32xf32>
    %344 = tpu.matmul %343, %329, %cst_137 {dimension_numbers = #tpu.dot_dimension_numbers<[2], [1], [1], [2], [0, 0, 0, 1, 1, 2], [0], [0]>} : vector<1x8x8xbf16>, vector<1x8x32xbf16>, vector<1x8x32xf32> -> vector<1x8x32xf32>
    "tpu.trace_stop"() : () -> ()
    %345 = vector.shape_cast %344 : vector<1x8x32xf32> to vector<8x32xf32>
    %c0_138 = arith.constant 0 : index
    %c32_139 = arith.constant 32 : index
    %346 = vector.load %arg26[%c0_138, %c32_139] : memref<8x128xf32, #tpu.memory_space<vmem>>, vector<8x32xf32>
    tpu.vector_store %arg26[%c0_138, %c32_139], %345 {strides = array<i32>} : memref<8x128xf32, #tpu.memory_space<vmem>>, vector<8x32xf32>,
    %347 = vector.extract_strided_slice %292 {offsets = [0, 64], sizes = [8, 32], strides = [1, 1]} : vector<8x128xf32> to vector<8x32xf32>
    %348 = vector.shape_cast %347 : vector<8x32xf32> to vector<1x8x32xf32>
    %349 = arith.truncf %348 : vector<1x8x32xf32> to vector<1x8x32xbf16>
    %350 = vector.extract_strided_slice %293 {offsets = [0, 64], sizes = [8, 32], strides = [1, 1]} : vector<8x128xf32> to vector<8x32xf32>
    %351 = vector.shape_cast %350 : vector<8x32xf32> to vector<1x8x32xf32>
    %352 = arith.truncf %351 : vector<1x8x32xf32> to vector<1x8x32xbf16>
    %353 = vector.extract_strided_slice %294 {offsets = [0, 64], sizes = [8, 32], strides = [1, 1]} : vector<8x128xf32> to vector<8x32xf32>
    %354 = vector.shape_cast %353 : vector<8x32xf32> to vector<1x8x32xf32>
    %355 = arith.truncf %354 : vector<1x8x32xf32> to vector<1x8x32xbf16>
    "tpu.trace_start"() <{level = 10 : i32, message = "bqd,bkd->bqk"}> : () -> ()
    %cst_140 = arith.constant dense<0.000000e+00> : vector<1x8x8xf32>
    %356 = tpu.matmul %349, %352, %cst_140 {dimension_numbers = #tpu.dot_dimension_numbers<[2], [2], [1], [1], [0, 0, 0, 1, 1, 1], [0], [0]>} : vector<1x8x32xbf16>, vector<1x8x32xbf16>, vector<1x8x8xf32> -> vector<1x8x8xf32>
    "tpu.trace_stop"() : () -> ()
    %357 = vector.broadcast %65 : vector<1x1x8xf32> to vector<1x8x8xf32>
    %358 = arith.addf %356, %357 : vector<1x8x8xf32>
    %cst_141 = arith.constant dense<0xFF800000> : vector<1x8xf32>
    %359 = vector.multi_reduction <maximumf>, %358, %cst_141 [2] : vector<1x8x8xf32> to vector<1x8xf32>
    %360 = vector.shape_cast %359 : vector<1x8xf32> to vector<1x8x1xf32>
    %361 = vector.broadcast %360 : vector<1x8x1xf32> to vector<1x8x8xf32>
    %362 = arith.subf %358, %361 : vector<1x8x8xf32>
    %363 = math.exp %362 : vector<1x8x8xf32>
    %cst_142 = arith.constant dense<0.000000e+00> : vector<1x8xf32>
    %364 = vector.multi_reduction <add>, %363, %cst_142 [2] : vector<1x8x8xf32> to vector<1x8xf32>
    %365 = vector.shape_cast %364 : vector<1x8xf32> to vector<1x8x1xf32>
    %366 = tpu.reciprocal %365 {approx = true} : vector<1x8x1xf32> -> vector<1x8x1xf32>
    %367 = vector.broadcast %366 : vector<1x8x1xf32> to vector<1x8x8xf32>
    %368 = arith.mulf %363, %367 : vector<1x8x8xf32>
    %369 = arith.truncf %368 : vector<1x8x8xf32> to vector<1x8x8xbf16>
    "tpu.trace_start"() <{level = 10 : i32, message = "bqk,bkd->bqd"}> : () -> ()
    %cst_143 = arith.constant dense<0.000000e+00> : vector<1x8x32xf32>
    %370 = tpu.matmul %369, %355, %cst_143 {dimension_numbers = #tpu.dot_dimension_numbers<[2], [1], [1], [2], [0, 0, 0, 1, 1, 2], [0], [0]>} : vector<1x8x8xbf16>, vector<1x8x32xbf16>, vector<1x8x32xf32> -> vector<1x8x32xf32>
    "tpu.trace_stop"() : () -> ()
    %371 = vector.shape_cast %370 : vector<1x8x32xf32> to vector<8x32xf32>
    %c0_144 = arith.constant 0 : index
    %c64_145 = arith.constant 64 : index
    %372 = vector.load %arg26[%c0_144, %c64_145] : memref<8x128xf32, #tpu.memory_space<vmem>>, vector<8x32xf32>
    tpu.vector_store %arg26[%c0_144, %c64_145], %371 {strides = array<i32>} : memref<8x128xf32, #tpu.memory_space<vmem>>, vector<8x32xf32>,
    %373 = vector.extract_strided_slice %292 {offsets = [0, 96], sizes = [8, 32], strides = [1, 1]} : vector<8x128xf32> to vector<8x32xf32>
    %374 = vector.shape_cast %373 : vector<8x32xf32> to vector<1x8x32xf32>
    %375 = arith.truncf %374 : vector<1x8x32xf32> to vector<1x8x32xbf16>
    %376 = vector.extract_strided_slice %293 {offsets = [0, 96], sizes = [8, 32], strides = [1, 1]} : vector<8x128xf32> to vector<8x32xf32>
    %377 = vector.shape_cast %376 : vector<8x32xf32> to vector<1x8x32xf32>
    %378 = arith.truncf %377 : vector<1x8x32xf32> to vector<1x8x32xbf16>
    %379 = vector.extract_strided_slice %294 {offsets = [0, 96], sizes = [8, 32], strides = [1, 1]} : vector<8x128xf32> to vector<8x32xf32>
    %380 = vector.shape_cast %379 : vector<8x32xf32> to vector<1x8x32xf32>
    %381 = arith.truncf %380 : vector<1x8x32xf32> to vector<1x8x32xbf16>
    "tpu.trace_start"() <{level = 10 : i32, message = "bqd,bkd->bqk"}> : () -> ()
    %cst_146 = arith.constant dense<0.000000e+00> : vector<1x8x8xf32>
    %382 = tpu.matmul %375, %378, %cst_146 {dimension_numbers = #tpu.dot_dimension_numbers<[2], [2], [1], [1], [0, 0, 0, 1, 1, 1], [0], [0]>} : vector<1x8x32xbf16>, vector<1x8x32xbf16>, vector<1x8x8xf32> -> vector<1x8x8xf32>
    "tpu.trace_stop"() : () -> ()
    %383 = vector.broadcast %65 : vector<1x1x8xf32> to vector<1x8x8xf32>
    %384 = arith.addf %382, %383 : vector<1x8x8xf32>
    %cst_147 = arith.constant dense<0xFF800000> : vector<1x8xf32>
    %385 = vector.multi_reduction <maximumf>, %384, %cst_147 [2] : vector<1x8x8xf32> to vector<1x8xf32>
    %386 = vector.shape_cast %385 : vector<1x8xf32> to vector<1x8x1xf32>
    %387 = vector.broadcast %386 : vector<1x8x1xf32> to vector<1x8x8xf32>
    %388 = arith.subf %384, %387 : vector<1x8x8xf32>
    %389 = math.exp %388 : vector<1x8x8xf32>
    %cst_148 = arith.constant dense<0.000000e+00> : vector<1x8xf32>
    %390 = vector.multi_reduction <add>, %389, %cst_148 [2] : vector<1x8x8xf32> to vector<1x8xf32>
    %391 = vector.shape_cast %390 : vector<1x8xf32> to vector<1x8x1xf32>
    %392 = tpu.reciprocal %391 {approx = true} : vector<1x8x1xf32> -> vector<1x8x1xf32>
    %393 = vector.broadcast %392 : vector<1x8x1xf32> to vector<1x8x8xf32>
    %394 = arith.mulf %389, %393 : vector<1x8x8xf32>
    %395 = arith.truncf %394 : vector<1x8x8xf32> to vector<1x8x8xbf16>
    "tpu.trace_start"() <{level = 10 : i32, message = "bqk,bkd->bqd"}> : () -> ()
    %cst_149 = arith.constant dense<0.000000e+00> : vector<1x8x32xf32>
    %396 = tpu.matmul %395, %381, %cst_149 {dimension_numbers = #tpu.dot_dimension_numbers<[2], [1], [1], [2], [0, 0, 0, 1, 1, 2], [0], [0]>} : vector<1x8x8xbf16>, vector<1x8x32xbf16>, vector<1x8x32xf32> -> vector<1x8x32xf32>
    "tpu.trace_stop"() : () -> ()
    %397 = vector.shape_cast %396 : vector<1x8x32xf32> to vector<8x32xf32>
    %c0_150 = arith.constant 0 : index
    %c96_151 = arith.constant 96 : index
    %398 = vector.load %arg26[%c0_150, %c96_151] : memref<8x128xf32, #tpu.memory_space<vmem>>, vector<8x32xf32>
    tpu.vector_store %arg26[%c0_150, %c96_151], %397 {strides = array<i32>} : memref<8x128xf32, #tpu.memory_space<vmem>>, vector<8x32xf32>,
    %c0_152 = arith.constant 0 : index
    %c0_153 = arith.constant 0 : index
    %399 = vector.load %arg26[%c0_152, %c0_153] : memref<8x128xf32, #tpu.memory_space<vmem>>, vector<8x128xf32>
    %c1_154 = arith.constant 1 : index
    %c0_155 = arith.constant 0 : index
    %c0_156 = arith.constant 0 : index
    %400 = vector.load %arg12[%c1_154, %c0_155, %c0_156] : memref<2x128x128xbf16, #tpu.memory_space<vmem>>, vector<1x128x128xbf16>
    %401 = vector.shape_cast %400 : vector<1x128x128xbf16> to vector<128x128xbf16>
    %402 = arith.truncf %399 : vector<8x128xf32> to vector<8x128xbf16>
    %cst_157 = arith.constant dense<0.000000e+00> : vector<8x128xf32>
    %403 = tpu.matmul %402, %401, %cst_157 {dimension_numbers = #tpu.dot_dimension_numbers<[1], [0], [0], [1], [0, 0, 1, 1], [], []>} : vector<8x128xbf16>, vector<128x128xbf16>, vector<8x128xf32> -> vector<8x128xf32>
    %c1_158 = arith.constant 1 : index
    %c0_159 = arith.constant 0 : index
    %c0_160 = arith.constant 0 : index
    %404 = vector.load %arg13[%c1_158, %c0_159, %c0_160] : memref<2x1x128xf32, #tpu.memory_space<vmem>>, vector<1x1x128xf32>
    %405 = vector.shape_cast %404 : vector<1x1x128xf32> to vector<1x128xf32>
    %406 = vector.broadcast %405 : vector<1x128xf32> to vector<8x128xf32>
    %407 = arith.addf %403, %406 : vector<8x128xf32>
    %408 = arith.addf %407, %261 : vector<8x128xf32>
    %c1_161 = arith.constant 1 : index
    %c0_162 = arith.constant 0 : index
    %c0_163 = arith.constant 0 : index
    %409 = vector.load %arg14[%c1_161, %c0_162, %c0_163] : memref<2x1x128xf32, #tpu.memory_space<vmem>>, vector<1x1x128xf32>
    %410 = vector.shape_cast %409 : vector<1x1x128xf32> to vector<1x128xf32>
    %c1_164 = arith.constant 1 : index
    %c0_165 = arith.constant 0 : index
    %c0_166 = arith.constant 0 : index
    %411 = vector.load %arg15[%c1_164, %c0_165, %c0_166] : memref<2x1x128xf32, #tpu.memory_space<vmem>>, vector<1x1x128xf32>
    %412 = vector.shape_cast %411 : vector<1x1x128xf32> to vector<1x128xf32>
    %cst_167 = arith.constant dense<0.000000e+00> : vector<8xf32>
    %413 = vector.multi_reduction <add>, %408, %cst_167 [1] : vector<8x128xf32> to vector<8xf32>
    %414 = vector.shape_cast %413 : vector<8xf32> to vector<8x1xf32>
    %cst_168 = arith.constant 1.280000e+02 : f32
    %415 = vector.broadcast %cst_168 : f32 to vector<8x1xf32>
    %416 = arith.divf %414, %415 : vector<8x1xf32>
    %417 = vector.broadcast %416 : vector<8x1xf32> to vector<8x128xf32>
    %418 = arith.subf %408, %417 : vector<8x128xf32>
    %419 = arith.mulf %418, %418 : vector<8x128xf32>
    %cst_169 = arith.constant dense<0.000000e+00> : vector<8xf32>
    %420 = vector.multi_reduction <add>, %419, %cst_169 [1] : vector<8x128xf32> to vector<8xf32>
    %421 = vector.shape_cast %420 : vector<8xf32> to vector<8x1xf32>
    %cst_170 = arith.constant 1.280000e+02 : f32
    %422 = vector.broadcast %cst_170 : f32 to vector<8x1xf32>
    %423 = arith.divf %421, %422 : vector<8x1xf32>
    %cst_171 = arith.constant 9.99999974E-6 : f32
    %424 = vector.broadcast %cst_171 : f32 to vector<8x1xf32>
    %425 = arith.addf %423, %424 : vector<8x1xf32>
    %426 = math.rsqrt %425 : vector<8x1xf32>
    %427 = vector.broadcast %426 : vector<8x1xf32> to vector<8x128xf32>
    %428 = arith.mulf %418, %427 : vector<8x128xf32>
    %429 = vector.broadcast %410 : vector<1x128xf32> to vector<8x128xf32>
    %430 = arith.mulf %428, %429 : vector<8x128xf32>
    %431 = vector.broadcast %412 : vector<1x128xf32> to vector<8x128xf32>
    %432 = arith.addf %430, %431 : vector<8x128xf32>
    %c1_172 = arith.constant 1 : index
    %c0_173 = arith.constant 0 : index
    %c0_174 = arith.constant 0 : index
    %433 = vector.load %arg16[%c1_172, %c0_173, %c0_174] : memref<2x128x256xbf16, #tpu.memory_space<vmem>>, vector<1x128x256xbf16>
    %434 = vector.shape_cast %433 : vector<1x128x256xbf16> to vector<128x256xbf16>
    %435 = arith.truncf %432 : vector<8x128xf32> to vector<8x128xbf16>
    %cst_175 = arith.constant dense<0.000000e+00> : vector<8x256xf32>
    %436 = tpu.matmul %435, %434, %cst_175 {dimension_numbers = #tpu.dot_dimension_numbers<[1], [0], [0], [1], [0, 0, 1, 1], [], []>} : vector<8x128xbf16>, vector<128x256xbf16>, vector<8x256xf32> -> vector<8x256xf32>
    %c1_176 = arith.constant 1 : index
    %c0_177 = arith.constant 0 : index
    %c0_178 = arith.constant 0 : index
    %437 = vector.load %arg17[%c1_176, %c0_177, %c0_178] : memref<2x1x256xf32, #tpu.memory_space<vmem>>, vector<1x1x256xf32>
    %438 = vector.shape_cast %437 : vector<1x1x256xf32> to vector<1x256xf32>
    %439 = vector.broadcast %438 : vector<1x256xf32> to vector<8x256xf32>
    %440 = arith.addf %436, %439 : vector<8x256xf32>
    %cst_179 = arith.constant 5.000000e-01 : f32
    %441 = vector.broadcast %cst_179 : f32 to vector<8x256xf32>
    %442 = arith.mulf %441, %440 : vector<8x256xf32>
    %cst_180 = arith.constant 0.707106769 : f32
    %443 = vector.broadcast %cst_180 : f32 to vector<8x256xf32>
    %444 = arith.mulf %440, %443 : vector<8x256xf32>
    %445 = math.erf %444 : vector<8x256xf32>
    %cst_181 = arith.constant 1.000000e+00 : f32
    %446 = vector.broadcast %cst_181 : f32 to vector<8x256xf32>
    %447 = arith.addf %446, %445 : vector<8x256xf32>
    %448 = arith.mulf %442, %447 : vector<8x256xf32>
    %c1_182 = arith.constant 1 : index
    %c0_183 = arith.constant 0 : index
    %c0_184 = arith.constant 0 : index
    %449 = vector.load %arg18[%c1_182, %c0_183, %c0_184] : memref<2x256x128xbf16, #tpu.memory_space<vmem>>, vector<1x256x128xbf16>
    %450 = vector.shape_cast %449 : vector<1x256x128xbf16> to vector<256x128xbf16>
    %451 = arith.truncf %448 : vector<8x256xf32> to vector<8x256xbf16>
    %cst_185 = arith.constant dense<0.000000e+00> : vector<8x128xf32>
    %452 = tpu.matmul %451, %450, %cst_185 {dimension_numbers = #tpu.dot_dimension_numbers<[1], [0], [0], [1], [0, 0, 1, 1], [], []>} : vector<8x256xbf16>, vector<256x128xbf16>, vector<8x128xf32> -> vector<8x128xf32>
    %c1_186 = arith.constant 1 : index
    %c0_187 = arith.constant 0 : index
    %c0_188 = arith.constant 0 : index
    %453 = vector.load %arg19[%c1_186, %c0_187, %c0_188] : memref<2x1x128xf32, #tpu.memory_space<vmem>>, vector<1x1x128xf32>
    %454 = vector.shape_cast %453 : vector<1x1x128xf32> to vector<1x128xf32>
    %455 = vector.broadcast %454 : vector<1x128xf32> to vector<8x128xf32>
    %456 = arith.addf %452, %455 : vector<8x128xf32>
    %457 = arith.addf %456, %408 : vector<8x128xf32>
    %458 = vector.shape_cast %457 : vector<8x128xf32> to vector<1x8x128xf32>
    %459 = vector.extract_strided_slice %458 {offsets = [0, 0, 0], sizes = [1, 1, 128], strides = [1, 1, 1]} : vector<1x8x128xf32> to vector<1x1x128xf32>
    %460 = vector.shape_cast %459 : vector<1x1x128xf32> to vector<1x128xf32>
    %c0_189 = arith.constant 0 : index
    %c0_190 = arith.constant 0 : index
    %461 = vector.load %arg20[%c0_189, %c0_190] : memref<1x128xf32, #tpu.memory_space<vmem>>, vector<1x128xf32>
    %c0_191 = arith.constant 0 : index
    %c0_192 = arith.constant 0 : index
    %462 = vector.load %arg21[%c0_191, %c0_192] : memref<1x128xf32, #tpu.memory_space<vmem>>, vector<1x128xf32>
    %cst_193 = arith.constant dense<0.000000e+00> : vector<1xf32>
    %463 = vector.multi_reduction <add>, %460, %cst_193 [1] : vector<1x128xf32> to vector<1xf32>
    %464 = vector.shape_cast %463 : vector<1xf32> to vector<1x1xf32>
    %cst_194 = arith.constant 1.280000e+02 : f32
    %465 = vector.broadcast %cst_194 : f32 to vector<1x1xf32>
    %466 = arith.divf %464, %465 : vector<1x1xf32>
    %467 = vector.broadcast %466 : vector<1x1xf32> to vector<1x128xf32>
    %468 = arith.subf %460, %467 : vector<1x128xf32>
    %469 = arith.mulf %468, %468 : vector<1x128xf32>
    %cst_195 = arith.constant dense<0.000000e+00> : vector<1xf32>
    %470 = vector.multi_reduction <add>, %469, %cst_195 [1] : vector<1x128xf32> to vector<1xf32>
    %471 = vector.shape_cast %470 : vector<1xf32> to vector<1x1xf32>
    %cst_196 = arith.constant 1.280000e+02 : f32
    %472 = vector.broadcast %cst_196 : f32 to vector<1x1xf32>
    %473 = arith.divf %471, %472 : vector<1x1xf32>
    %cst_197 = arith.constant 9.99999974E-6 : f32
    %474 = vector.broadcast %cst_197 : f32 to vector<1x1xf32>
    %475 = arith.addf %473, %474 : vector<1x1xf32>
    %476 = math.rsqrt %475 : vector<1x1xf32>
    %477 = vector.broadcast %476 : vector<1x1xf32> to vector<1x128xf32>
    %478 = arith.mulf %468, %477 : vector<1x128xf32>
    %479 = arith.mulf %478, %461 : vector<1x128xf32>
    %480 = arith.addf %479, %462 : vector<1x128xf32>
    %c0_198 = arith.constant 0 : index
    %c0_199 = arith.constant 0 : index
    %481 = vector.load %arg22[%c0_198, %c0_199] : memref<128x128xbf16, #tpu.memory_space<vmem>>, vector<128x128xbf16>
    %482 = arith.truncf %480 : vector<1x128xf32> to vector<1x128xbf16>
    %cst_200 = arith.constant dense<0.000000e+00> : vector<1x128xf32>
    %483 = tpu.matmul %482, %481, %cst_200 {dimension_numbers = #tpu.dot_dimension_numbers<[1], [0], [0], [1], [0, 0, 1, 1], [], []>} : vector<1x128xbf16>, vector<128x128xbf16>, vector<1x128xf32> -> vector<1x128xf32>
    %c0_201 = arith.constant 0 : index
    %c0_202 = arith.constant 0 : index
    %484 = vector.load %arg23[%c0_201, %c0_202] : memref<1x128xf32, #tpu.memory_space<vmem>>, vector<1x128xf32>
    %485 = arith.addf %483, %484 : vector<1x128xf32>
    %486 = vector.shape_cast %485 : vector<1x128xf32> to vector<1x1x128xf32>
    %c0_203 = arith.constant 0 : index
    %c0_204 = arith.constant 0 : index
    %c0_205 = arith.constant 0 : index
    %487 = vector.load %arg24[%c0_203, %c0_204, %c0_205] : memref<1x1x128xf32, #tpu.memory_space<vmem>>, vector<1x1x128xf32>
    tpu.vector_store %arg24[%c0_203, %c0_204, %c0_205], %486 {strides = array<i32>} : memref<1x1x128xf32, #tpu.memory_space<vmem>>, vector<1x1x128xf32>,
    return
  }
  func.func @transform_0(%arg0: i32) -> (i32, i32, i32) {
    %c0_i32 = arith.constant 0 : i32
    %c0_i32_0 = arith.constant 0 : i32
    %c0_i32_1 = arith.constant 0 : i32
    return %arg0, %c0_i32, %c0_i32_0 : i32, i32, i32
  }
  func.func @transform_1(%arg0: i32) -> (i32, i32) {
    %c0_i32 = arith.constant 0 : i32
    %c0_i32_0 = arith.constant 0 : i32
    %c0_i32_1 = arith.constant 0 : i32
    return %c0_i32, %c0_i32_0 : i32, i32
  }
  func.func @transform_2(%arg0: i32) -> (i32, i32) {
    %c0_i32 = arith.constant 0 : i32
    %c0_i32_0 = arith.constant 0 : i32
    %c0_i32_1 = arith.constant 0 : i32
    return %c0_i32, %c0_i32_0 : i32, i32
  }
  func.func @transform_3(%arg0: i32) -> (i32, i32) {
    %c0_i32 = arith.constant 0 : i32
    %c0_i32_0 = arith.constant 0 : i32
    %c0_i32_1 = arith.constant 0 : i32
    return %c0_i32, %c0_i32_0 : i32, i32
  }
  func.func @transform_4(%arg0: i32) -> (i32, i32) {
    %c0_i32 = arith.constant 0 : i32
    %c0_i32_0 = arith.constant 0 : i32
    %c0_i32_1 = arith.constant 0 : i32
    return %c0_i32, %c0_i32_0 : i32, i32
  }
  func.func @transform_5(%arg0: i32) -> (i32, i32) {
    %c0_i32 = arith.constant 0 : i32
    %c0_i32_0 = arith.constant 0 : i32
    %c0_i32_1 = arith.constant 0 : i32
    return %c0_i32, %c0_i32_0 : i32, i32
  }
  func.func @transform_6(%arg0: i32) -> (i32, i32) {
    %c0_i32 = arith.constant 0 : i32
    %c0_i32_0 = arith.constant 0 : i32
    %c0_i32_1 = arith.constant 0 : i32
    return %c0_i32, %c0_i32_0 : i32, i32
  }
  func.func @transform_7(%arg0: i32) -> (i32, i32, i32) {
    %c0_i32 = arith.constant 0 : i32
    %c0_i32_0 = arith.constant 0 : i32
    %c0_i32_1 = arith.constant 0 : i32
    %c0_i32_2 = arith.constant 0 : i32
    return %c0_i32, %c0_i32_0, %c0_i32_1 : i32, i32, i32
  }
  func.func @transform_8(%arg0: i32) -> (i32, i32, i32) {
    %c0_i32 = arith.constant 0 : i32
    %c0_i32_0 = arith.constant 0 : i32
    %c0_i32_1 = arith.constant 0 : i32
    %c0_i32_2 = arith.constant 0 : i32
    return %c0_i32, %c0_i32_0, %c0_i32_1 : i32, i32, i32
  }
  func.func @transform_9(%arg0: i32) -> (i32, i32, i32) {
    %c0_i32 = arith.constant 0 : i32
    %c0_i32_0 = arith.constant 0 : i32
    %c0_i32_1 = arith.constant 0 : i32
    %c0_i32_2 = arith.constant 0 : i32
    return %c0_i32, %c0_i32_0, %c0_i32_1 : i32, i32, i32
  }
  func.func @transform_10(%arg0: i32) -> (i32, i32, i32) {
    %c0_i32 = arith.constant 0 : i32
    %c0_i32_0 = arith.constant 0 : i32
    %c0_i32_1 = arith.constant 0 : i32
    %c0_i32_2 = arith.constant 0 : i32
    return %c0_i32, %c0_i32_0, %c0_i32_1 : i32, i32, i32
  }
  func.func @transform_11(%arg0: i32) -> (i32, i32, i32) {
    %c0_i32 = arith.constant 0 : i32
    %c0_i32_0 = arith.constant 0 : i32
    %c0_i32_1 = arith.constant 0 : i32
    %c0_i32_2 = arith.constant 0 : i32
    return %c0_i32, %c0_i32_0, %c0_i32_1 : i32, i32, i32
  }
  func.func @transform_12(%arg0: i32) -> (i32, i32, i32) {
    %c0_i32 = arith.constant 0 : i32
    %c0_i32_0 = arith.constant 0 : i32
    %c0_i32_1 = arith.constant 0 : i32
    %c0_i32_2 = arith.constant 0 : i32
    return %c0_i32, %c0_i32_0, %c0_i32_1 : i32, i32, i32
  }
  func.func @transform_13(%arg0: i32) -> (i32, i32, i32) {
    %c0_i32 = arith.constant 0 : i32
    %c0_i32_0 = arith.constant 0 : i32
    %c0_i32_1 = arith.constant 0 : i32
    %c0_i32_2 = arith.constant 0 : i32
    return %c0_i32, %c0_i32_0, %c0_i32_1 : i32, i32, i32
  }
  func.func @transform_14(%arg0: i32) -> (i32, i32, i32) {
    %c0_i32 = arith.constant 0 : i32
    %c0_i32_0 = arith.constant 0 : i32
    %c0_i32_1 = arith.constant 0 : i32
    %c0_i32_2 = arith.constant 0 : i32
    return %c0_i32, %c0_i32_0, %c0_i32_1 : i32, i32, i32
  }
  func.func @transform_15(%arg0: i32) -> (i32, i32, i32) {
    %c0_i32 = arith.constant 0 : i32
    %c0_i32_0 = arith.constant 0 : i32
    %c0_i32_1 = arith.constant 0 : i32
    %c0_i32_2 = arith.constant 0 : i32
    return %c0_i32, %c0_i32_0, %c0_i32_1 : i32, i32, i32
  }
  func.func @transform_16(%arg0: i32) -> (i32, i32, i32) {
    %c0_i32 = arith.constant 0 : i32
    %c0_i32_0 = arith.constant 0 : i32
    %c0_i32_1 = arith.constant 0 : i32
    %c0_i32_2 = arith.constant 0 : i32
    return %c0_i32, %c0_i32_0, %c0_i32_1 : i32, i32, i32
  }
  func.func @transform_17(%arg0: i32) -> (i32, i32, i32) {
    %c0_i32 = arith.constant 0 : i32
    %c0_i32_0 = arith.constant 0 : i32
    %c0_i32_1 = arith.constant 0 : i32
    %c0_i32_2 = arith.constant 0 : i32
    return %c0_i32, %c0_i32_0, %c0_i32_1 : i32, i32, i32
  }
  func.func @transform_18(%arg0: i32) -> (i32, i32, i32) {
    %c0_i32 = arith.constant 0 : i32
    %c0_i32_0 = arith.constant 0 : i32
    %c0_i32_1 = arith.constant 0 : i32
    %c0_i32_2 = arith.constant 0 : i32
    return %c0_i32, %c0_i32_0, %c0_i32_1 : i32, i32, i32
  }
  func.func @transform_19(%arg0: i32) -> (i32, i32) {
    %c0_i32 = arith.constant 0 : i32
    %c0_i32_0 = arith.constant 0 : i32
    %c0_i32_1 = arith.constant 0 : i32
    return %c0_i32, %c0_i32_0 : i32, i32
  }
  func.func @transform_20(%arg0: i32) -> (i32, i32) {
    %c0_i32 = arith.constant 0 : i32
    %c0_i32_0 = arith.constant 0 : i32
    %c0_i32_1 = arith.constant 0 : i32
    return %c0_i32, %c0_i32_0 : i32, i32
  }
  func.func @transform_21(%arg0: i32) -> (i32, i32) {
    %c0_i32 = arith.constant 0 : i32
    %c0_i32_0 = arith.constant 0 : i32
    %c0_i32_1 = arith.constant 0 : i32
    return %c0_i32, %c0_i32_0 : i32, i32
  }
  func.func @transform_22(%arg0: i32) -> (i32, i32) {
    %c0_i32 = arith.constant 0 : i32
    %c0_i32_0 = arith.constant 0 : i32
    %c0_i32_1 = arith.constant 0 : i32
    return %c0_i32, %c0_i32_0 : i32, i32
  }
  func.func @transform_23(%arg0: i32) -> (i32, i32, i32) {
    %c0_i32 = arith.constant 0 : i32
    %c0_i32_0 = arith.constant 0 : i32
    %c0_i32_1 = arith.constant 0 : i32
    return %arg0, %c0_i32, %c0_i32_0 : i32, i32, i32
  }
}

</mosaic_0001>

<llo_original>
// kernel: vit_forward.1
$region0: #{vit_forward.1}
  #allocation0 [shape = 'u32[]', space=smem, size = 0x4, offset = 0x4, fixed_abs, tag = 'smem constant byte address 0x4 - core index']
  #allocation1 [shape = 'u32[144,128]{1,0:T(1,128)}', space=vmem, size = 0x12000, scoped, tag = 'internal scratch']
  #allocation2 [shape = 'f32[1,8,128]{2,1,0:T(8,128)}', space=vmem, size = 0x1000, scoped, tag = 'scratch operand']
  #allocation3 [shape = 'f32[8,128]{1,0:T(8,128)}', space=vmem, size = 0x1000, scoped, tag = 'scratch operand']
  %s0 = inlined_call_operand.vmem [shape: f32[2,4,768], index: 0, kind: input, shape index: {}]
  %s1 = inlined_call_operand.vmem [shape: f32[1,768], index: 1, kind: input, shape index: {}]
  %s2 = inlined_call_operand.vmem [shape: f32[1,768], index: 2, kind: input, shape index: {}]
  %s3 = inlined_call_operand.vmem [shape: bf16[768,128], index: 3, kind: input, shape index: {}]
  %s4 = inlined_call_operand.vmem [shape: f32[1,128], index: 4, kind: input, shape index: {}]
  %s5 = inlined_call_operand.vmem [shape: f32[1,128], index: 5, kind: input, shape index: {}]
  %s6 = inlined_call_operand.vmem [shape: f32[1,128], index: 6, kind: input, shape index: {}]
  %s7 = inlined_call_operand.vmem [shape: f32[1,8,128], index: 7, kind: input, shape index: {}]
  %s8 = inlined_call_operand.vmem [shape: f32[2,1,128], index: 8, kind: input, shape index: {}]
  %s9 = inlined_call_operand.vmem [shape: f32[2,1,128], index: 9, kind: input, shape index: {}]
  %s10 = inlined_call_operand.vmem [shape: bf16[2,128,384], index: 10, kind: input, shape index: {}]
  %s11 = inlined_call_operand.vmem [shape: bf16[2,128,128], index: 11, kind: input, shape index: {}]
  %s12 = inlined_call_operand.vmem [shape: f32[2,1,128], index: 12, kind: input, shape index: {}]
  %s13 = inlined_call_operand.vmem [shape: f32[2,1,128], index: 13, kind: input, shape index: {}]
  %s14 = inlined_call_operand.vmem [shape: f32[2,1,128], index: 14, kind: input, shape index: {}]
  %s15 = inlined_call_operand.vmem [shape: bf16[2,128,256], index: 15, kind: input, shape index: {}]
  %s16 = inlined_call_operand.vmem [shape: f32[2,1,256], index: 16, kind: input, shape index: {}]
  %s17 = inlined_call_operand.vmem [shape: bf16[2,256,128], index: 17, kind: input, shape index: {}]
  %s18 = inlined_call_operand.vmem [shape: f32[2,1,128], index: 18, kind: input, shape index: {}]
  %s19 = inlined_call_operand.vmem [shape: f32[1,128], index: 19, kind: input, shape index: {}]
  %s20 = inlined_call_operand.vmem [shape: f32[1,128], index: 20, kind: input, shape index: {}]
  %s21 = inlined_call_operand.vmem [shape: bf16[128,128], index: 21, kind: input, shape index: {}]
  %s22 = inlined_call_operand.vmem [shape: f32[1,128], index: 22, kind: input, shape index: {}]
  %s23 = inlined_call_operand.vmem [shape: f32[2,1,128], index: 23, kind: output, shape index: {}]
  %s24 = sld [smem:[#allocation0]]
  $region125: #{vit_forward.1} parent=0
    _
  %s26 = ssub.s32 1, %s24
  %s27 = scalar_select 0, %s26, %s24
  loop: start=0, step=1, limit=4
  $region2: #{vit_forward.1} parent=0 // loop_pre_header
    _
  $region3: #{vit_forward.1} parent=0 // loop_header
    %s29 = sphi 0, %s33
    %p30 = scmp.ge.s32.totalorder %s29, 4
    %s39 = sphi 0, %s41
    %s42 = sphi 0, %s39
    %s43 = sphi 0, %s42
    %s59 = sphi 0, %s43
    %s63 = sphi 0, %s63
    %s65 = sphi 0, %s63
    %s66 = sphi 0, %s65
    %s80 = sphi 0, %s66
    %s84 = sphi 0, %s84
    %s86 = sphi 0, %s84
    %s87 = sphi 0, %s86
    %s101 = sphi 0, %s87
    %s105 = sphi 0, %s105
    %s107 = sphi 0, %s105
    %s108 = sphi 0, %s107
    %s122 = sphi 0, %s108
    %s126 = sphi 0, %s126
    %s128 = sphi 0, %s126
    %s129 = sphi 0, %s128
    %s143 = sphi 0, %s129
    %s147 = sphi 0, %s147
    %s149 = sphi 0, %s147
    %s150 = sphi 0, %s149
    %s164 = sphi 0, %s150
    %s168 = sphi 0, %s168
    %s170 = sphi 0, %s168
    %s171 = sphi 0, %s170
    %s185 = sphi 0, %s171
    %s189 = sphi 0, %s189
    %s191 = sphi 0, %s189
    %s192 = sphi 0, %s191
    %s206 = sphi 0, %s192
    %s210 = sphi 0, %s210
    %s212 = sphi 0, %s210
    %s213 = sphi 0, %s212
    %s227 = sphi 0, %s213
    %s231 = sphi 0, %s231
    %s233 = sphi 0, %s231
    %s234 = sphi 0, %s233
    %s248 = sphi 0, %s234
    %s252 = sphi 0, %s252
    %s254 = sphi 0, %s252
    %s255 = sphi 0, %s254
    %s269 = sphi 0, %s255
    %s273 = sphi 0, %s273
    %s275 = sphi 0, %s273
    %s276 = sphi 0, %s275
    %s290 = sphi 0, %s276
    %s294 = sphi 0, %s294
    %s296 = sphi 0, %s294
    %s297 = sphi 0, %s296
    %s311 = sphi 0, %s297
    %s315 = sphi 0, %s315
    %s317 = sphi 0, %s315
    %s318 = sphi 0, %s317
    %s332 = sphi 0, %s318
    %s336 = sphi 0, %s336
    %s338 = sphi 0, %s336
    %s339 = sphi 0, %s338
    %s353 = sphi 0, %s339
    %s357 = sphi 0, %s357
    %s359 = sphi 0, %s357
    %s360 = sphi 0, %s359
    %s374 = sphi 0, %s360
    %s378 = sphi 0, %s378
    %s380 = sphi 0, %s378
    %s381 = sphi 0, %s380
    %s395 = sphi 0, %s381
    %s399 = sphi 0, %s399
    %s401 = sphi 0, %s399
    %s402 = sphi 0, %s401
    %s416 = sphi 0, %s402
    %s420 = sphi 0, %s420
    %s422 = sphi 0, %s420
    %s423 = sphi 0, %s422
    %s437 = sphi 0, %s423
    %s441 = sphi 0, %s441
    %s443 = sphi 0, %s441
    %s444 = sphi 0, %s443
    %s458 = sphi 0, %s444
    %s462 = sphi 0, %s462
    %s464 = sphi 0, %s462
    %s465 = sphi 0, %s464
    %s479 = sphi 0, %s465
    %s483 = sphi 0, %s483
    %s485 = sphi 0, %s483
    %s486 = sphi 0, %s485
    %s500 = sphi 0, %s486
    %s504 = sphi 0, %s504
    %s506 = sphi 0, %s504
    %s507 = sphi 0, %s506
    %s521 = sphi 0, %s507
    %s527 = sphi 0, %s529
    %s530 = sphi 0, %s527
    %s531 = sphi 0, %s530
    %s547 = sphi 0, %s531
  $region4: #{vit_forward.1} parent=0 // loop_header_branch
    %32 = sbr.rel (%p30) target = $region8
  $region5: #{vit_forward.1} parent=0 // loop_body
    %s34 = ssub.s32 %s29, 1
    %s35 = ssub.s32 %s29, 2
    %s36 = sadd.s32 %s29, 1
    %s37 = ssub.s32 %s29, %s36
    %p38 = scmp.eq.s32.totalorder %s37, 0
    %s40 = sadd.s32 %s39, 1
    %s41 = scalar_select %p38, %s39, %s40
    %p44 = pneg %p38
    %p45 = scmp.eq.s32.totalorder %s29, 1
    %p46 = por %p44, %p45
    %p47 = scmp.ne.s32.totalorder %s39, %s42
    %p48 = scmp.eq.s32.totalorder %s29, 0
    %p49 = por %p47, %p48
    %p50 = scmp.ne.s32.totalorder %s39, %s42
    %p51 = scmp.eq.s32.totalorder %s34, 1
    %p52 = por %p50, %p51
    %p53 = scmp.ne.s32.totalorder %s42, %s43
    %p54 = scmp.eq.s32.totalorder %s34, 0
    %p55 = por %p53, %p54
    %p56 = scmp.ne.s32.totalorder %s42, %s43
    %p57 = scmp.eq.s32.totalorder %s35, 1
    %p58 = por %p56, %p57
    %p60 = scmp.ne.s32.totalorder %s43, %s59
    %p61 = scmp.eq.s32.totalorder %s35, 0
    %p62 = por %p60, %p61
    %s64 = sadd.s32 %s63, 1
    %p67 = scmp.eq.s32.totalorder %s29, 1
    %p68 = scmp.ne.s32.totalorder %s63, %s65
    %p69 = scmp.eq.s32.totalorder %s29, 0
    %p70 = por %p68, %p69
    %p71 = scmp.ne.s32.totalorder %s63, %s65
    %p72 = scmp.eq.s32.totalorder %s34, 1
    %p73 = por %p71, %p72
    %p74 = scmp.ne.s32.totalorder %s65, %s66
    %p75 = scmp.eq.s32.totalorder %s34, 0
    %p76 = por %p74, %p75
    %p77 = scmp.ne.s32.totalorder %s65, %s66
    %p78 = scmp.eq.s32.totalorder %s35, 1
    %p79 = por %p77, %p78
    %p81 = scmp.ne.s32.totalorder %s66, %s80
    %p82 = scmp.eq.s32.totalorder %s35, 0
    %p83 = por %p81, %p82
    %s85 = sadd.s32 %s84, 1
    %p88 = scmp.eq.s32.totalorder %s29, 1
    %p89 = scmp.ne.s32.totalorder %s84, %s86
    %p90 = scmp.eq.s32.totalorder %s29, 0
    %p91 = por %p89, %p90
    %p92 = scmp.ne.s32.totalorder %s84, %s86
    %p93 = scmp.eq.s32.totalorder %s34, 1
    %p94 = por %p92, %p93
    %p95 = scmp.ne.s32.totalorder %s86, %s87
    %p96 = scmp.eq.s32.totalorder %s34, 0
    %p97 = por %p95, %p96
    %p98 = scmp.ne.s32.totalorder %s86, %s87
    %p99 = scmp.eq.s32.totalorder %s35, 1
    %p100 = por %p98, %p99
    %p102 = scmp.ne.s32.totalorder %s87, %s101
    %p103 = scmp.eq.s32.totalorder %s35, 0
    %p104 = por %p102, %p103
    %s106 = sadd.s32 %s105, 1
    %p109 = scmp.eq.s32.totalorder %s29, 1
    %p110 = scmp.ne.s32.totalorder %s105, %s107
    %p111 = scmp.eq.s32.totalorder %s29, 0
    %p112 = por %p110, %p111
    %p113 = scmp.ne.s32.totalorder %s105, %s107
    %p114 = scmp.eq.s32.totalorder %s34, 1
    %p115 = por %p113, %p114
    %p116 = scmp.ne.s32.totalorder %s107, %s108
    %p117 = scmp.eq.s32.totalorder %s34, 0
    %p118 = por %p116, %p117
    %p119 = scmp.ne.s32.totalorder %s107, %s108
    %p120 = scmp.eq.s32.totalorder %s35, 1
    %p121 = por %p119, %p120
    %p123 = scmp.ne.s32.totalorder %s108, %s122
    %p124 = scmp.eq.s32.totalorder %s35, 0
    %p125 = por %p123, %p124
    %s127 = sadd.s32 %s126, 1
    %p130 = scmp.eq.s32.totalorder %s29, 1
    %p131 = scmp.ne.s32.totalorder %s126, %s128
    %p132 = scmp.eq.s32.totalorder %s29, 0
    %p133 = por %p131, %p132
    %p134 = scmp.ne.s32.totalorder %s126, %s128
    %p135 = scmp.eq.s32.totalorder %s34, 1
    %p136 = por %p134, %p135
    %p137 = scmp.ne.s32.totalorder %s128, %s129
    %p138 = scmp.eq.s32.totalorder %s34, 0
    %p139 = por %p137, %p138
    %p140 = scmp.ne.s32.totalorder %s128, %s129
    %p141 = scmp.eq.s32.totalorder %s35, 1
    %p142 = por %p140, %p141
    %p144 = scmp.ne.s32.totalorder %s129, %s143
    %p145 = scmp.eq.s32.totalorder %s35, 0
    %p146 = por %p144, %p145
    %s148 = sadd.s32 %s147, 1
    %p151 = scmp.eq.s32.totalorder %s29, 1
    %p152 = scmp.ne.s32.totalorder %s147, %s149
    %p153 = scmp.eq.s32.totalorder %s29, 0
    %p154 = por %p152, %p153
    %p155 = scmp.ne.s32.totalorder %s147, %s149
    %p156 = scmp.eq.s32.totalorder %s34, 1
    %p157 = por %p155, %p156
    %p158 = scmp.ne.s32.totalorder %s149, %s150
    %p159 = scmp.eq.s32.totalorder %s34, 0
    %p160 = por %p158, %p159
    %p161 = scmp.ne.s32.totalorder %s149, %s150
    %p162 = scmp.eq.s32.totalorder %s35, 1
    %p163 = por %p161, %p162
    %p165 = scmp.ne.s32.totalorder %s150, %s164
    %p166 = scmp.eq.s32.totalorder %s35, 0
    %p167 = por %p165, %p166
    %s169 = sadd.s32 %s168, 1
    %p172 = scmp.eq.s32.totalorder %s29, 1
    %p173 = scmp.ne.s32.totalorder %s168, %s170
    %p174 = scmp.eq.s32.totalorder %s29, 0
    %p175 = por %p173, %p174
    %p176 = scmp.ne.s32.totalorder %s168, %s170
    %p177 = scmp.eq.s32.totalorder %s34, 1
    %p178 = por %p176, %p177
    %p179 = scmp.ne.s32.totalorder %s170, %s171
    %p180 = scmp.eq.s32.totalorder %s34, 0
    %p181 = por %p179, %p180
    %p182 = scmp.ne.s32.totalorder %s170, %s171
    %p183 = scmp.eq.s32.totalorder %s35, 1
    %p184 = por %p182, %p183
    %p186 = scmp.ne.s32.totalorder %s171, %s185
    %p187 = scmp.eq.s32.totalorder %s35, 0
    %p188 = por %p186, %p187
    %s190 = sadd.s32 %s189, 1
    %p193 = scmp.eq.s32.totalorder %s29, 1
    %p194 = scmp.ne.s32.totalorder %s189, %s191
    %p195 = scmp.eq.s32.totalorder %s29, 0
    %p196 = por %p194, %p195
    %p197 = scmp.ne.s32.totalorder %s189, %s191
    %p198 = scmp.eq.s32.totalorder %s34, 1
    %p199 = por %p197, %p198
    %p200 = scmp.ne.s32.totalorder %s191, %s192
    %p201 = scmp.eq.s32.totalorder %s34, 0
    %p202 = por %p200, %p201
    %p203 = scmp.ne.s32.totalorder %s191, %s192
    %p204 = scmp.eq.s32.totalorder %s35, 1
    %p205 = por %p203, %p204
    %p207 = scmp.ne.s32.totalorder %s192, %s206
    %p208 = scmp.eq.s32.totalorder %s35, 0
    %p209 = por %p207, %p208
    %s211 = sadd.s32 %s210, 1
    %p214 = scmp.eq.s32.totalorder %s29, 1
    %p215 = scmp.ne.s32.totalorder %s210, %s212
    %p216 = scmp.eq.s32.totalorder %s29, 0
    %p217 = por %p215, %p216
    %p218 = scmp.ne.s32.totalorder %s210, %s212
    %p219 = scmp.eq.s32.totalorder %s34, 1
    %p220 = por %p218, %p219
    %p221 = scmp.ne.s32.totalorder %s212, %s213
    %p222 = scmp.eq.s32.totalorder %s34, 0
    %p223 = por %p221, %p222
    %p224 = scmp.ne.s32.totalorder %s212, %s213
    %p225 = scmp.eq.s32.totalorder %s35, 1
    %p226 = por %p224, %p225
    %p228 = scmp.ne.s32.totalorder %s213, %s227
    %p229 = scmp.eq.s32.totalorder %s35, 0
    %p230 = por %p228, %p229
    %s232 = sadd.s32 %s231, 1
    %p235 = scmp.eq.s32.totalorder %s29, 1
    %p236 = scmp.ne.s32.totalorder %s231, %s233
    %p237 = scmp.eq.s32.totalorder %s29, 0
    %p238 = por %p236, %p237
    %p239 = scmp.ne.s32.totalorder %s231, %s233
    %p240 = scmp.eq.s32.totalorder %s34, 1
    %p241 = por %p239, %p240
    %p242 = scmp.ne.s32.totalorder %s233, %s234
    %p243 = scmp.eq.s32.totalorder %s34, 0
    %p244 = por %p242, %p243
    %p245 = scmp.ne.s32.totalorder %s233, %s234
    %p246 = scmp.eq.s32.totalorder %s35, 1
    %p247 = por %p245, %p246
    %p249 = scmp.ne.s32.totalorder %s234, %s248
    %p250 = scmp.eq.s32.totalorder %s35, 0
    %p251 = por %p249, %p250
    %s253 = sadd.s32 %s252, 1
    %p256 = scmp.eq.s32.totalorder %s29, 1
    %p257 = scmp.ne.s32.totalorder %s252, %s254
    %p258 = scmp.eq.s32.totalorder %s29, 0
    %p259 = por %p257, %p258
    %p260 = scmp.ne.s32.totalorder %s252, %s254
    %p261 = scmp.eq.s32.totalorder %s34, 1
    %p262 = por %p260, %p261
    %p263 = scmp.ne.s32.totalorder %s254, %s255
    %p264 = scmp.eq.s32.totalorder %s34, 0
    %p265 = por %p263, %p264
    %p266 = scmp.ne.s32.totalorder %s254, %s255
    %p267 = scmp.eq.s32.totalorder %s35, 1
    %p268 = por %p266, %p267
    %p270 = scmp.ne.s32.totalorder %s255, %s269
    %p271 = scmp.eq.s32.totalorder %s35, 0
    %p272 = por %p270, %p271
    %s274 = sadd.s32 %s273, 1
    %p277 = scmp.eq.s32.totalorder %s29, 1
    %p278 = scmp.ne.s32.totalorder %s273, %s275
    %p279 = scmp.eq.s32.totalorder %s29, 0
    %p280 = por %p278, %p279
    %p281 = scmp.ne.s32.totalorder %s273, %s275
    %p282 = scmp.eq.s32.totalorder %s34, 1
    %p283 = por %p281, %p282
    %p284 = scmp.ne.s32.totalorder %s275, %s276
    %p285 = scmp.eq.s32.totalorder %s34, 0
    %p286 = por %p284, %p285
    %p287 = scmp.ne.s32.totalorder %s275, %s276
    %p288 = scmp.eq.s32.totalorder %s35, 1
    %p289 = por %p287, %p288
    %p291 = scmp.ne.s32.totalorder %s276, %s290
    %p292 = scmp.eq.s32.totalorder %s35, 0
    %p293 = por %p291, %p292
    %s295 = sadd.s32 %s294, 1
    %p298 = scmp.eq.s32.totalorder %s29, 1
    %p299 = scmp.ne.s32.totalorder %s294, %s296
    %p300 = scmp.eq.s32.totalorder %s29, 0
    %p301 = por %p299, %p300
    %p302 = scmp.ne.s32.totalorder %s294, %s296
    %p303 = scmp.eq.s32.totalorder %s34, 1
    %p304 = por %p302, %p303
    %p305 = scmp.ne.s32.totalorder %s296, %s297
    %p306 = scmp.eq.s32.totalorder %s34, 0
    %p307 = por %p305, %p306
    %p308 = scmp.ne.s32.totalorder %s296, %s297
    %p309 = scmp.eq.s32.totalorder %s35, 1
    %p310 = por %p308, %p309
    %p312 = scmp.ne.s32.totalorder %s297, %s311
    %p313 = scmp.eq.s32.totalorder %s35, 0
    %p314 = por %p312, %p313
    %s316 = sadd.s32 %s315, 1
    %p319 = scmp.eq.s32.totalorder %s29, 1
    %p320 = scmp.ne.s32.totalorder %s315, %s317
    %p321 = scmp.eq.s32.totalorder %s29, 0
    %p322 = por %p320, %p321
    %p323 = scmp.ne.s32.totalorder %s315, %s317
    %p324 = scmp.eq.s32.totalorder %s34, 1
    %p325 = por %p323, %p324
    %p326 = scmp.ne.s32.totalorder %s317, %s318
    %p327 = scmp.eq.s32.totalorder %s34, 0
    %p328 = por %p326, %p327
    %p329 = scmp.ne.s32.totalorder %s317, %s318
    %p330 = scmp.eq.s32.totalorder %s35, 1
    %p331 = por %p329, %p330
    %p333 = scmp.ne.s32.totalorder %s318, %s332
    %p334 = scmp.eq.s32.totalorder %s35, 0
    %p335 = por %p333, %p334
    %s337 = sadd.s32 %s336, 1
    %p340 = scmp.eq.s32.totalorder %s29, 1
    %p341 = scmp.ne.s32.totalorder %s336, %s338
    %p342 = scmp.eq.s32.totalorder %s29, 0
    %p343 = por %p341, %p342
    %p344 = scmp.ne.s32.totalorder %s336, %s338
    %p345 = scmp.eq.s32.totalorder %s34, 1
    %p346 = por %p344, %p345
    %p347 = scmp.ne.s32.totalorder %s338, %s339
    %p348 = scmp.eq.s32.totalorder %s34, 0
    %p349 = por %p347, %p348
    %p350 = scmp.ne.s32.totalorder %s338, %s339
    %p351 = scmp.eq.s32.totalorder %s35, 1
    %p352 = por %p350, %p351
    %p354 = scmp.ne.s32.totalorder %s339, %s353
    %p355 = scmp.eq.s32.totalorder %s35, 0
    %p356 = por %p354, %p355
    %s358 = sadd.s32 %s357, 1
    %p361 = scmp.eq.s32.totalorder %s29, 1
    %p362 = scmp.ne.s32.totalorder %s357, %s359
    %p363 = scmp.eq.s32.totalorder %s29, 0
    %p364 = por %p362, %p363
    %p365 = scmp.ne.s32.totalorder %s357, %s359
    %p366 = scmp.eq.s32.totalorder %s34, 1
    %p367 = por %p365, %p366
    %p368 = scmp.ne.s32.totalorder %s359, %s360
    %p369 = scmp.eq.s32.totalorder %s34, 0
    %p370 = por %p368, %p369
    %p371 = scmp.ne.s32.totalorder %s359, %s360
    %p372 = scmp.eq.s32.totalorder %s35, 1
    %p373 = por %p371, %p372
    %p375 = scmp.ne.s32.totalorder %s360, %s374
    %p376 = scmp.eq.s32.totalorder %s35, 0
    %p377 = por %p375, %p376
    %s379 = sadd.s32 %s378, 1
    %p382 = scmp.eq.s32.totalorder %s29, 1
    %p383 = scmp.ne.s32.totalorder %s378, %s380
    %p384 = scmp.eq.s32.totalorder %s29, 0
    %p385 = por %p383, %p384
    %p386 = scmp.ne.s32.totalorder %s378, %s380
    %p387 = scmp.eq.s32.totalorder %s34, 1
    %p388 = por %p386, %p387
    %p389 = scmp.ne.s32.totalorder %s380, %s381
    %p390 = scmp.eq.s32.totalorder %s34, 0
    %p391 = por %p389, %p390
    %p392 = scmp.ne.s32.totalorder %s380, %s381
    %p393 = scmp.eq.s32.totalorder %s35, 1
    %p394 = por %p392, %p393
    %p396 = scmp.ne.s32.totalorder %s381, %s395
    %p397 = scmp.eq.s32.totalorder %s35, 0
    %p398 = por %p396, %p397
    %s400 = sadd.s32 %s399, 1
    %p403 = scmp.eq.s32.totalorder %s29, 1
    %p404 = scmp.ne.s32.totalorder %s399, %s401
    %p405 = scmp.eq.s32.totalorder %s29, 0
    %p406 = por %p404, %p405
    %p407 = scmp.ne.s32.totalorder %s399, %s401
    %p408 = scmp.eq.s32.totalorder %s34, 1
    %p409 = por %p407, %p408
    %p410 = scmp.ne.s32.totalorder %s401, %s402
    %p411 = scmp.eq.s32.totalorder %s34, 0
    %p412 = por %p410, %p411
    %p413 = scmp.ne.s32.totalorder %s401, %s402
    %p414 = scmp.eq.s32.totalorder %s35, 1
    %p415 = por %p413, %p414
    %p417 = scmp.ne.s32.totalorder %s402, %s416
    %p418 = scmp.eq.s32.totalorder %s35, 0
    %p419 = por %p417, %p418
    %s421 = sadd.s32 %s420, 1
    %p424 = scmp.eq.s32.totalorder %s29, 1
    %p425 = scmp.ne.s32.totalorder %s420, %s422
    %p426 = scmp.eq.s32.totalorder %s29, 0
    %p427 = por %p425, %p426
    %p428 = scmp.ne.s32.totalorder %s420, %s422
    %p429 = scmp.eq.s32.totalorder %s34, 1
    %p430 = por %p428, %p429
    %p431 = scmp.ne.s32.totalorder %s422, %s423
    %p432 = scmp.eq.s32.totalorder %s34, 0
    %p433 = por %p431, %p432
    %p434 = scmp.ne.s32.totalorder %s422, %s423
    %p435 = scmp.eq.s32.totalorder %s35, 1
    %p436 = por %p434, %p435
    %p438 = scmp.ne.s32.totalorder %s423, %s437
    %p439 = scmp.eq.s32.totalorder %s35, 0
    %p440 = por %p438, %p439
    %s442 = sadd.s32 %s441, 1
    %p445 = scmp.eq.s32.totalorder %s29, 1
    %p446 = scmp.ne.s32.totalorder %s441, %s443
    %p447 = scmp.eq.s32.totalorder %s29, 0
    %p448 = por %p446, %p447
    %p449 = scmp.ne.s32.totalorder %s441, %s443
    %p450 = scmp.eq.s32.totalorder %s34, 1
    %p451 = por %p449, %p450
    %p452 = scmp.ne.s32.totalorder %s443, %s444
    %p453 = scmp.eq.s32.totalorder %s34, 0
    %p454 = por %p452, %p453
    %p455 = scmp.ne.s32.totalorder %s443, %s444
    %p456 = scmp.eq.s32.totalorder %s35, 1
    %p457 = por %p455, %p456
    %p459 = scmp.ne.s32.totalorder %s444, %s458
    %p460 = scmp.eq.s32.totalorder %s35, 0
    %p461 = por %p459, %p460
    %s463 = sadd.s32 %s462, 1
    %p466 = scmp.eq.s32.totalorder %s29, 1
    %p467 = scmp.ne.s32.totalorder %s462, %s464
    %p468 = scmp.eq.s32.totalorder %s29, 0
    %p469 = por %p467, %p468
    %p470 = scmp.ne.s32.totalorder %s462, %s464
    %p471 = scmp.eq.s32.totalorder %s34, 1
    %p472 = por %p470, %p471
    %p473 = scmp.ne.s32.totalorder %s464, %s465
    %p474 = scmp.eq.s32.totalorder %s34, 0
    %p475 = por %p473, %p474
    %p476 = scmp.ne.s32.totalorder %s464, %s465
    %p477 = scmp.eq.s32.totalorder %s35, 1
    %p478 = por %p476, %p477
    %p480 = scmp.ne.s32.totalorder %s465, %s479
    %p481 = scmp.eq.s32.totalorder %s35, 0
    %p482 = por %p480, %p481
    %s484 = sadd.s32 %s483, 1
    %p487 = scmp.eq.s32.totalorder %s29, 1
    %p488 = scmp.ne.s32.totalorder %s483, %s485
    %p489 = scmp.eq.s32.totalorder %s29, 0
    %p490 = por %p488, %p489
    %p491 = scmp.ne.s32.totalorder %s483, %s485
    %p492 = scmp.eq.s32.totalorder %s34, 1
    %p493 = por %p491, %p492
    %p494 = scmp.ne.s32.totalorder %s485, %s486
    %p495 = scmp.eq.s32.totalorder %s34, 0
    %p496 = por %p494, %p495
    %p497 = scmp.ne.s32.totalorder %s485, %s486
    %p498 = scmp.eq.s32.totalorder %s35, 1
    %p499 = por %p497, %p498
    %p501 = scmp.ne.s32.totalorder %s486, %s500
    %p502 = scmp.eq.s32.totalorder %s35, 0
    %p503 = por %p501, %p502
    %s505 = sadd.s32 %s504, 1
    %p508 = scmp.eq.s32.totalorder %s29, 1
    %p509 = scmp.ne.s32.totalorder %s504, %s506
    %p510 = scmp.eq.s32.totalorder %s29, 0
    %p511 = por %p509, %p510
    %p512 = scmp.ne.s32.totalorder %s504, %s506
    %p513 = scmp.eq.s32.totalorder %s34, 1
    %p514 = por %p512, %p513
    %p515 = scmp.ne.s32.totalorder %s506, %s507
    %p516 = scmp.eq.s32.totalorder %s34, 0
    %p517 = por %p515, %p516
    %p518 = scmp.ne.s32.totalorder %s506, %s507
    %p519 = scmp.eq.s32.totalorder %s35, 1
    %p520 = por %p518, %p519
    %p522 = scmp.ne.s32.totalorder %s507, %s521
    %p523 = scmp.eq.s32.totalorder %s35, 0
    %p524 = por %p522, %p523
    %s525 = ssub.s32 %s29, %s36
    %p526 = scmp.eq.s32.totalorder %s525, 0
    %s528 = sadd.s32 %s527, 1
    %s529 = scalar_select %p526, %s527, %s528
    %p532 = pneg %p526
    %p533 = scmp.eq.s32.totalorder %s29, 1
    %p534 = por %p532, %p533
    %p535 = scmp.ne.s32.totalorder %s527, %s530
    %p536 = scmp.eq.s32.totalorder %s29, 0
    %p537 = por %p535, %p536
    %p538 = scmp.ne.s32.totalorder %s527, %s530
    %p539 = scmp.eq.s32.totalorder %s34, 1
    %p540 = por %p538, %p539
    %p541 = scmp.ne.s32.totalorder %s530, %s531
    %p542 = scmp.eq.s32.totalorder %s34, 0
    %p543 = por %p541, %p542
    %p544 = scmp.ne.s32.totalorder %s530, %s531
    %p545 = scmp.eq.s32.totalorder %s35, 1
    %p546 = por %p544, %p545
    %p548 = scmp.ne.s32.totalorder %s531, %s547
    %p549 = scmp.eq.s32.totalorder %s35, 0
    %p550 = por %p548, %p549
    %p551 = scmp.le.s32.totalorder 1, %s29
    %p552 = scmp.lt.s32.totalorder %s29, 3
    %p553 = pnand %p551, %p552
    %p554 = pneg %p553
    // Predicated region
    $region9: #{vit_forward.1} parent=5 // pred_check
      _
    $region10: #{vit_forward.1} parent=5 // pred_check_branch
      %556 = sbr.rel (%p553) target = $region12
    $region11: #{vit_forward.1} parent=5 // pred_region
      %s557 = ssub.s32 %s29, 1
      // Predicated region
      $region13: #{vit_forward.1} parent=11 // pred_check
        %p558 = pneg %p76
      $region14: #{vit_forward.1} parent=11 // pred_check_branch
        %560 = sbr.rel (%p558) target = $region16
      $region15: #{vit_forward.1} parent=11 // pred_region
        _
      $region16: #{vit_forward.1} parent=11 // pred_fallthru
        _
      // Predicated region
      $region17: #{vit_forward.1} parent=11 // pred_check
        %p561 = pneg %p97
      $region18: #{vit_forward.1} parent=11 // pred_check_branch
        %563 = sbr.rel (%p561) target = $region20
      $region19: #{vit_forward.1} parent=11 // pred_region
        _
      $region20: #{vit_forward.1} parent=11 // pred_fallthru
        _
      // Predicated region
      $region21: #{vit_forward.1} parent=11 // pred_check
        %p564 = pneg %p118
      $region22: #{vit_forward.1} parent=11 // pred_check_branch
        %566 = sbr.rel (%p564) target = $region24
      $region23: #{vit_forward.1} parent=11 // pred_region
        _
      $region24: #{vit_forward.1} parent=11 // pred_fallthru
        _
      // Predicated region
      $region25: #{vit_forward.1} parent=11 // pred_check
        %p567 = pneg %p139
      $region26: #{vit_forward.1} parent=11 // pred_check_branch
        %569 = sbr.rel (%p567) target = $region28
      $region27: #{vit_forward.1} parent=11 // pred_region
        _
      $region28: #{vit_forward.1} parent=11 // pred_fallthru
        _
      // Predicated region
      $region29: #{vit_forward.1} parent=11 // pred_check
        %p570 = pneg %p160
      $region30: #{vit_forward.1} parent=11 // pred_check_branch
        %572 = sbr.rel (%p570) target = $region32
      $region31: #{vit_forward.1} parent=11 // pred_region
        _
      $region32: #{vit_forward.1} parent=11 // pred_fallthru
        _
      // Predicated region
      $region33: #{vit_forward.1} parent=11 // pred_check
        %p573 = pneg %p181
      $region34: #{vit_forward.1} parent=11 // pred_check_branch
        %575 = sbr.rel (%p573) target = $region36
      $region35: #{vit_forward.1} parent=11 // pred_region
        _
      $region36: #{vit_forward.1} parent=11 // pred_fallthru
        _
      // Predicated region
      $region37: #{vit_forward.1} parent=11 // pred_check
        %p576 = pneg %p202
      $region38: #{vit_forward.1} parent=11 // pred_check_branch
        %578 = sbr.rel (%p576) target = $region40
      $region39: #{vit_forward.1} parent=11 // pred_region
        _
      $region40: #{vit_forward.1} parent=11 // pred_fallthru
        _
      // Predicated region
      $region41: #{vit_forward.1} parent=11 // pred_check
        %p579 = pneg %p223
      $region42: #{vit_forward.1} parent=11 // pred_check_branch
        %581 = sbr.rel (%p579) target = $region44
      $region43: #{vit_forward.1} parent=11 // pred_region
        _
      $region44: #{vit_forward.1} parent=11 // pred_fallthru
        _
      // Predicated region
      $region45: #{vit_forward.1} parent=11 // pred_check
        %p582 = pneg %p244
      $region46: #{vit_forward.1} parent=11 // pred_check_branch
        %584 = sbr.rel (%p582) target = $region48
      $region47: #{vit_forward.1} parent=11 // pred_region
        _
      $region48: #{vit_forward.1} parent=11 // pred_fallthru
        _
      // Predicated region
      $region49: #{vit_forward.1} parent=11 // pred_check
        %p585 = pneg %p265
      $region50: #{vit_forward.1} parent=11 // pred_check_branch
        %587 = sbr.rel (%p585) target = $region52
      $region51: #{vit_forward.1} parent=11 // pred_region
        _
      $region52: #{vit_forward.1} parent=11 // pred_fallthru
        _
      // Predicated region
      $region53: #{vit_forward.1} parent=11 // pred_check
        %p588 = pneg %p286
      $region54: #{vit_forward.1} parent=11 // pred_check_branch
        %590 = sbr.rel (%p588) target = $region56
      $region55: #{vit_forward.1} parent=11 // pred_region
        _
      $region56: #{vit_forward.1} parent=11 // pred_fallthru
        _
      // Predicated region
      $region57: #{vit_forward.1} parent=11 // pred_check
        %p591 = pneg %p307
      $region58: #{vit_forward.1} parent=11 // pred_check_branch
        %593 = sbr.rel (%p591) target = $region60
      $region59: #{vit_forward.1} parent=11 // pred_region
        _
      $region60: #{vit_forward.1} parent=11 // pred_fallthru
        _
      // Predicated region
      $region61: #{vit_forward.1} parent=11 // pred_check
        %p594 = pneg %p328
      $region62: #{vit_forward.1} parent=11 // pred_check_branch
        %596 = sbr.rel (%p594) target = $region64
      $region63: #{vit_forward.1} parent=11 // pred_region
        _
      $region64: #{vit_forward.1} parent=11 // pred_fallthru
        _
      // Predicated region
      $region65: #{vit_forward.1} parent=11 // pred_check
        %p597 = pneg %p349
      $region66: #{vit_forward.1} parent=11 // pred_check_branch
        %599 = sbr.rel (%p597) target = $region68
      $region67: #{vit_forward.1} parent=11 // pred_region
        _
      $region68: #{vit_forward.1} parent=11 // pred_fallthru
        _
      // Predicated region
      $region69: #{vit_forward.1} parent=11 // pred_check
        %p600 = pneg %p370
      $region70: #{vit_forward.1} parent=11 // pred_check_branch
        %602 = sbr.rel (%p600) target = $region72
      $region71: #{vit_forward.1} parent=11 // pred_region
        _
      $region72: #{vit_forward.1} parent=11 // pred_fallthru
        _
      // Predicated region
      $region73: #{vit_forward.1} parent=11 // pred_check
        %p603 = pneg %p391
      $region74: #{vit_forward.1} parent=11 // pred_check_branch
        %605 = sbr.rel (%p603) target = $region76
      $region75: #{vit_forward.1} parent=11 // pred_region
        _
      $region76: #{vit_forward.1} parent=11 // pred_fallthru
        _
      // Predicated region
      $region77: #{vit_forward.1} parent=11 // pred_check
        %p606 = pneg %p412
      $region78: #{vit_forward.1} parent=11 // pred_check_branch
        %608 = sbr.rel (%p606) target = $region80
      $region79: #{vit_forward.1} parent=11 // pred_region
        _
      $region80: #{vit_forward.1} parent=11 // pred_fallthru
        _
      // Predicated region
      $region81: #{vit_forward.1} parent=11 // pred_check
        %p609 = pneg %p433
      $region82: #{vit_forward.1} parent=11 // pred_check_branch
        %611 = sbr.rel (%p609) target = $region84
      $region83: #{vit_forward.1} parent=11 // pred_region
        _
      $region84: #{vit_forward.1} parent=11 // pred_fallthru
        _
      // Predicated region
      $region85: #{vit_forward.1} parent=11 // pred_check
        %p612 = pneg %p454
      $region86: #{vit_forward.1} parent=11 // pred_check_branch
        %614 = sbr.rel (%p612) target = $region88
      $region87: #{vit_forward.1} parent=11 // pred_region
        _
      $region88: #{vit_forward.1} parent=11 // pred_fallthru
        _
      // Predicated region
      $region89: #{vit_forward.1} parent=11 // pred_check
        %p615 = pneg %p475
      $region90: #{vit_forward.1} parent=11 // pred_check_branch
        %617 = sbr.rel (%p615) target = $region92
      $region91: #{vit_forward.1} parent=11 // pred_region
        _
      $region92: #{vit_forward.1} parent=11 // pred_fallthru
        _
      // Predicated region
      $region93: #{vit_forward.1} parent=11 // pred_check
        %p618 = pneg %p496
      $region94: #{vit_forward.1} parent=11 // pred_check_branch
        %620 = sbr.rel (%p618) target = $region96
      $region95: #{vit_forward.1} parent=11 // pred_region
        _
      $region96: #{vit_forward.1} parent=11 // pred_fallthru
        _
      // Predicated region
      $region97: #{vit_forward.1} parent=11 // pred_check
        %p621 = pneg %p517
      $region98: #{vit_forward.1} parent=11 // pred_check_branch
        %623 = sbr.rel (%p621) target = $region100
      $region99: #{vit_forward.1} parent=11 // pred_region
        _
      $region100: #{vit_forward.1} parent=11 // pred_fallthru
        _
    $region12: #{vit_forward.1} parent=5 // pred_fallthru
      _
    %p624 = scmp.lt.s32.totalorder %s29, 2
    // Predicated region
    $region101: #{vit_forward.1} parent=5 // pred_check
      %p625 = pneg %p624
    $region102: #{vit_forward.1} parent=5 // pred_check_branch
      %627 = sbr.rel (%p625) target = $region104
    $region103: #{vit_forward.1} parent=5 // pred_region
      // Predicated region
      $region105: #{vit_forward.1} parent=103 // pred_check
        %p628 = pneg %p49
      $region106: #{vit_forward.1} parent=103 // pred_check_branch
        %630 = sbr.rel (%p628) target = $region108
      $region107: #{vit_forward.1} parent=103 // pred_region
        %p631 = scmp.lt.s32.totalorder %s29, 1
        %s632 = scalar_select %p631, %s29, 1
        %s633 = smul.addr %s632, 6
        %s634 = smul.addr %s633, 4
        %s635 = scalar_lea.vmem %s0, %s634
      $region108: #{vit_forward.1} parent=103 // pred_fallthru
        _
    $region104: #{vit_forward.1} parent=5 // pred_fallthru
      _
    %p636 = scmp.le.s32.totalorder 1, %s29
    %p637 = scmp.lt.s32.totalorder %s29, 3
    %p638 = pnand %p636, %p637
    %p639 = pneg %p638
    // Predicated region
    $region109: #{vit_forward.1} parent=5 // pred_check
      _
    $region110: #{vit_forward.1} parent=5 // pred_check_branch
      %641 = sbr.rel (%p638) target = $region112
    $region111: #{vit_forward.1} parent=5 // pred_region
      %s642 = ssub.s32 %s29, 1
      %p643 = scmp.lt.s32.totalorder %s34, 1
      %s644 = scalar_select %p643, %s34, 1
      %s645 = smul.addr %s644, 6
      %s646 = smul.addr %s645, 4
      %s647 = scalar_lea.vmem %s0, %s646
      %p648 = pneg %p55
      %p649 = pneg %p52
      %p650 = pneg %p76
      %p651 = pneg %p73
      %p652 = pneg %p97
      %p653 = pneg %p94
      %p654 = pneg %p118
      %p655 = pneg %p115
      %p656 = pneg %p139
      %p657 = pneg %p136
      %p658 = pneg %p160
      %p659 = pneg %p157
      %p660 = pneg %p181
      %p661 = pneg %p178
      %p662 = pneg %p202
      %p663 = pneg %p199
      %p664 = pneg %p223
      %p665 = pneg %p220
      %p666 = pneg %p244
      %p667 = pneg %p241
      %p668 = pneg %p265
      %p669 = pneg %p262
      %p670 = pneg %p286
      %p671 = pneg %p283
      %p672 = pneg %p307
      %p673 = pneg %p304
      %p674 = pneg %p328
      %p675 = pneg %p325
      %p676 = pneg %p349
      %p677 = pneg %p346
      %p678 = pneg %p370
      %p679 = pneg %p367
      %p680 = pneg %p391
      %p681 = pneg %p388
      %p682 = pneg %p412
      %p683 = pneg %p409
      %p684 = pneg %p433
      %p685 = pneg %p430
      %p686 = pneg %p454
      %p687 = pneg %p451
      %p688 = pneg %p475
      %p689 = pneg %p472
      %p690 = pneg %p496
      %p691 = pneg %p493
      %p692 = pneg %p517
      %p693 = pneg %p514
      %p694 = pneg %p543
      %p695 = pneg %p540
      %p696 = scmp.lt.s32.totalorder %s34, 1
      %s697 = scalar_select %p696, %s34, 1
      %s698 = scalar_lea.vmem %s23, %s697
      %p699 = scmp.lt.s32.totalorder %s34, 1
      %s700 = scalar_select %p699, %s34, 1
      %s701 = smul.addr %s700, 6
      %s702 = smul.addr %s701, 4
      %s703 = scalar_lea.vmem %s0, %s702
      %p704 = scmp.lt.s32.totalorder %s34, 1
      %s705 = scalar_select %p704, %s34, 1
      %s706 = scalar_lea.vmem %s23, %s705
      %v708 = vld [vmem:[%s703] sm:$0xff]
      %v709 = vld [vmem:[%s703 + $0x8] sm:$0xff]
      %v710 = vld [vmem:[%s703 + $0x10] sm:$0xff]
      %v711 = vld [vmem:[%s1] sm:$0x3f]
      %v712 = vld [vmem:[%s2] sm:$0x3f]
      %v716 = vcombine.high %v708, %v708
      %v717 = vcombine.high %v709, %v709
      %v718 = vcombine.high %v710, %v710
      %vm722 = vcmask 1043456
      %v723 = vsel %vm722, %v708, 0.0
      %v724 = vsel %vm722, %v716, 0.0
      %v725 = vadd.f32 %v723, %v724
      %v726 = vsel %vm722, %v709, 0.0
      %v727 = vadd.f32 %v725, %v726
      %v728 = vsel %vm722, %v717, 0.0
      %v729 = vadd.f32 %v727, %v728
      %v730 = vsel %vm722, %v710, 0.0
      %v731 = vadd.f32 %v729, %v730
      %v732 = vsel %vm722, %v718, 0.0
      %v733 = vadd.f32 %v731, %v732
      %734 = vadd.xlane.f32.xlu0 %v733
      %v735 = vpop.xlane.xlu0 %734
      %v736 = vrcp.pop 768.0
      %v737 = vmul.f32 %v735, %v736
      %v740 = vunpack.c.l.s4 839922192
      %v741 = vunpack.c.0.s8 %v740
      %v742 = vlaneseq
      %v743 = vshrl.u32 %v742, 7
      %v744 = vsub.s32 %v741, %v743
      %v745 = vrot.slane %v737, %v744
      %v747 = vsub.f32 %v708, %v745
      %v748 = vsub.f32 %v709, %v745
      %v749 = vsub.f32 %v710, %v745
      %v750 = vmul.f32 %v747, %v747
      %v751 = vmul.f32 %v748, %v748
      %v752 = vmul.f32 %v749, %v749
      %v756 = vcombine.high %v750, %v750
      %v757 = vcombine.high %v751, %v751
      %v758 = vcombine.high %v752, %v752
      %v762 = vsel %vm722, %v750, 0.0
      %v763 = vsel %vm722, %v756, 0.0
      %v764 = vadd.f32 %v762, %v763
      %v765 = vsel %vm722, %v751, 0.0
      %v766 = vadd.f32 %v764, %v765
      %v767 = vsel %vm722, %v757, 0.0
      %v768 = vadd.f32 %v766, %v767
      %v769 = vsel %vm722, %v752, 0.0
      %v770 = vadd.f32 %v768, %v769
      %v771 = vsel %vm722, %v758, 0.0
      %v772 = vadd.f32 %v770, %v771
      %773 = vadd.xlane.f32.xlu0 %v772
      %v774 = vpop.xlane.xlu0 %773
      %v775 = vmul.f32 %v774, %v736
      %v776 = vadd.f32 %v775, 1e-05
      %v777 = vrsqrt.pop %v776
      %v780 = vunpack.c.l.s4 839922192
      %v781 = vunpack.c.0.s8 %v780
      %v782 = vlaneseq
      %v783 = vshrl.u32 %v782, 7
      %v784 = vsub.s32 %v781, %v783
      %v785 = vrot.slane %v777, %v784
      %v787 = vmul.f32 %v747, %v785
      %v788 = vmul.f32 %v748, %v785
      %v789 = vmul.f32 %v749, %v785
      %v791 = vlaneseq
      %v792 = vshrl.u32 %v791, 7
      %v793 = vsub.s32 0, %v792
      %v794 = vrot.slane %v711, %v793
      %v795 = vlaneseq
      %v796 = vshrl.u32 %v795, 7
      %v797 = vsub.s32 1, %v796
      %v798 = vrot.slane %v711, %v797
      %v799 = vlaneseq
      %v800 = vshrl.u32 %v799, 7
      %v801 = vsub.s32 2, %v800
      %v802 = vrot.slane %v711, %v801
      %v803 = vlaneseq
      %v804 = vshrl.u32 %v803, 7
      %v805 = vsub.s32 3, %v804
      %v806 = vrot.slane %v711, %v805
      %v807 = vlaneseq
      %v808 = vshrl.u32 %v807, 7
      %v809 = vsub.s32 4, %v808
      %v810 = vrot.slane %v711, %v809
      %v811 = vlaneseq
      %v812 = vshrl.u32 %v811, 7
      %v813 = vsub.s32 5, %v812
      %v814 = vrot.slane %v711, %v813
      %v815 = vcombine.low %v794, %v798
      %v816 = vcombine.low %v802, %v806
      %v817 = vcombine.low %v810, %v814
      %v821 = vmul.f32 %v787, %v815
      %v822 = vmul.f32 %v788, %v816
      %v823 = vmul.f32 %v789, %v817
      %v825 = vlaneseq
      %v826 = vshrl.u32 %v825, 7
      %v827 = vsub.s32 0, %v826
      %v828 = vrot.slane %v712, %v827
      %v829 = vlaneseq
      %v830 = vshrl.u32 %v829, 7
      %v831 = vsub.s32 1, %v830
      %v832 = vrot.slane %v712, %v831
      %v833 = vlaneseq
      %v834 = vshrl.u32 %v833, 7
      %v835 = vsub.s32 2, %v834
      %v836 = vrot.slane %v712, %v835
      %v837 = vlaneseq
      %v838 = vshrl.u32 %v837, 7
      %v839 = vsub.s32 3, %v838
      %v840 = vrot.slane %v712, %v839
      %v841 = vlaneseq
      %v842 = vshrl.u32 %v841, 7
      %v843 = vsub.s32 4, %v842
      %v844 = vrot.slane %v712, %v843
      %v845 = vlaneseq
      %v846 = vshrl.u32 %v845, 7
      %v847 = vsub.s32 5, %v846
      %v848 = vrot.slane %v712, %v847
      %v849 = vcombine.low %v828, %v832
      %v850 = vcombine.low %v836, %v840
      %v851 = vcombine.low %v844, %v848
      %v855 = vadd.f32 %v821, %v849
      %v856 = vadd.f32 %v822, %v850
      %v857 = vadd.f32 %v823, %v851
      %v858 = vld [vmem:[%s3] sm:$0xf]
      %v859 = vld [vmem:[%s3 + $0x4] sm:$0xf]
      %v860 = vld [vmem:[%s3 + $0x8] sm:$0xf]
      %v861 = vld [vmem:[%s3 + $0xc] sm:$0xf]
      %v862 = vld [vmem:[%s3 + $0x10] sm:$0xf]
      %v863 = vld [vmem:[%s3 + $0x14] sm:$0xf]
      %v864 = vld [vmem:[%s3 + $0x18] sm:$0xf]
      %v865 = vld [vmem:[%s3 + $0x1c] sm:$0xf]
      %v866 = vld [vmem:[%s3 + $0x20] sm:$0xf]
      %v867 = vld [vmem:[%s3 + $0x24] sm:$0xf]
      %v868 = vld [vmem:[%s3 + $0x28] sm:$0xf]
      %v869 = vld [vmem:[%s3 + $0x2c] sm:$0xf]
      %v870 = vld [vmem:[%s3 + $0x30] sm:$0xf]
      %v871 = vld [vmem:[%s3 + $0x34] sm:$0xf]
      %v872 = vld [vmem:[%s3 + $0x38] sm:$0xf]
      %v873 = vld [vmem:[%s3 + $0x3c] sm:$0xf]
      %v874 = vld [vmem:[%s3 + $0x40] sm:$0xf]
      %v875 = vld [vmem:[%s3 + $0x44] sm:$0xf]
      %v876 = vld [vmem:[%s3 + $0x48] sm:$0xf]
      %v877 = vld [vmem:[%s3 + $0x4c] sm:$0xf]
      %v878 = vld [vmem:[%s3 + $0x50] sm:$0xf]
      %v879 = vld [vmem:[%s3 + $0x54] sm:$0xf]
      %v880 = vld [vmem:[%s3 + $0x58] sm:$0xf]
      %v881 = vld [vmem:[%s3 + $0x5c] sm:$0xf]
      %v882 = vld [vmem:[%s3 + $0x60] sm:$0xf]
      %v883 = vld [vmem:[%s3 + $0x64] sm:$0xf]
      %v884 = vld [vmem:[%s3 + $0x68] sm:$0xf]
      %v885 = vld [vmem:[%s3 + $0x6c] sm:$0xf]
      %v886 = vld [vmem:[%s3 + $0x70] sm:$0xf]
      %v887 = vld [vmem:[%s3 + $0x74] sm:$0xf]
      %v888 = vld [vmem:[%s3 + $0x78] sm:$0xf]
      %v889 = vld [vmem:[%s3 + $0x7c] sm:$0xf]
      %v890 = vld [vmem:[%s3 + $0x80] sm:$0xf]
      %v891 = vld [vmem:[%s3 + $0x84] sm:$0xf]
      %v892 = vld [vmem:[%s3 + $0x88] sm:$0xf]
      %v893 = vld [vmem:[%s3 + $0x8c] sm:$0xf]
      %v894 = vld [vmem:[%s3 + $0x90] sm:$0xf]
      %v895 = vld [vmem:[%s3 + $0x94] sm:$0xf]
      %v896 = vld [vmem:[%s3 + $0x98] sm:$0xf]
      %v897 = vld [vmem:[%s3 + $0x9c] sm:$0xf]
      %v898 = vld [vmem:[%s3 + $0xa0] sm:$0xf]
      %v899 = vld [vmem:[%s3 + $0xa4] sm:$0xf]
      %v900 = vld [vmem:[%s3 + $0xa8] sm:$0xf]
      %v901 = vld [vmem:[%s3 + $0xac] sm:$0xf]
      %v902 = vld [vmem:[%s3 + $0xb0] sm:$0xf]
      %v903 = vld [vmem:[%s3 + $0xb4] sm:$0xf]
      %v904 = vld [vmem:[%s3 + $0xb8] sm:$0xf]
      %v905 = vld [vmem:[%s3 + $0xbc] sm:$0xf]
      %v906 = vld [vmem:[%s3 + $0xc0] sm:$0xf]
      %v907 = vld [vmem:[%s3 + $0xc4] sm:$0xf]
      %v908 = vld [vmem:[%s3 + $0xc8] sm:$0xf]
      %v909 = vld [vmem:[%s3 + $0xcc] sm:$0xf]
      %v910 = vld [vmem:[%s3 + $0xd0] sm:$0xf]
      %v911 = vld [vmem:[%s3 + $0xd4] sm:$0xf]
      %v912 = vld [vmem:[%s3 + $0xd8] sm:$0xf]
      %v913 = vld [vmem:[%s3 + $0xdc] sm:$0xf]
      %v914 = vld [vmem:[%s3 + $0xe0] sm:$0xf]
      %v915 = vld [vmem:[%s3 + $0xe4] sm:$0xf]
      %v916 = vld [vmem:[%s3 + $0xe8] sm:$0xf]
      %v917 = vld [vmem:[%s3 + $0xec] sm:$0xf]
      %v918 = vld [vmem:[%s3 + $0xf0] sm:$0xf]
      %v919 = vld [vmem:[%s3 + $0xf4] sm:$0xf]
      %v920 = vld [vmem:[%s3 + $0xf8] sm:$0xf]
      %v921 = vld [vmem:[%s3 + $0xfc] sm:$0xf]
      %v922 = vld [vmem:[%s3 + $0x100] sm:$0xf]
      %v923 = vld [vmem:[%s3 + $0x104] sm:$0xf]
      %v924 = vld [vmem:[%s3 + $0x108] sm:$0xf]
      %v925 = vld [vmem:[%s3 + $0x10c] sm:$0xf]
      %v926 = vld [vmem:[%s3 + $0x110] sm:$0xf]
      %v927 = vld [vmem:[%s3 + $0x114] sm:$0xf]
      %v928 = vld [vmem:[%s3 + $0x118] sm:$0xf]
      %v929 = vld [vmem:[%s3 + $0x11c] sm:$0xf]
      %v930 = vld [vmem:[%s3 + $0x120] sm:$0xf]
      %v931 = vld [vmem:[%s3 + $0x124] sm:$0xf]
      %v932 = vld [vmem:[%s3 + $0x128] sm:$0xf]
      %v933 = vld [vmem:[%s3 + $0x12c] sm:$0xf]
      %v934 = vld [vmem:[%s3 + $0x130] sm:$0xf]
      %v935 = vld [vmem:[%s3 + $0x134] sm:$0xf]
      %v936 = vld [vmem:[%s3 + $0x138] sm:$0xf]
      %v937 = vld [vmem:[%s3 + $0x13c] sm:$0xf]
      %v938 = vld [vmem:[%s3 + $0x140] sm:$0xf]
      %v939 = vld [vmem:[%s3 + $0x144] sm:$0xf]
      %v940 = vld [vmem:[%s3 + $0x148] sm:$0xf]
      %v941 = vld [vmem:[%s3 + $0x14c] sm:$0xf]
      %v942 = vld [vmem:[%s3 + $0x150] sm:$0xf]
      %v943 = vld [vmem:[%s3 + $0x154] sm:$0xf]
      %v944 = vld [vmem:[%s3 + $0x158] sm:$0xf]
      %v945 = vld [vmem:[%s3 + $0x15c] sm:$0xf]
      %v946 = vld [vmem:[%s3 + $0x160] sm:$0xf]
      %v947 = vld [vmem:[%s3 + $0x164] sm:$0xf]
      %v948 = vld [vmem:[%s3 + $0x168] sm:$0xf]
      %v949 = vld [vmem:[%s3 + $0x16c] sm:$0xf]
      %v950 = vld [vmem:[%s3 + $0x170] sm:$0xf]
      %v951 = vld [vmem:[%s3 + $0x174] sm:$0xf]
      %v952 = vld [vmem:[%s3 + $0x178] sm:$0xf]
      %v953 = vld [vmem:[%s3 + $0x17c] sm:$0xf]
      %v957 = vcombine.high %v855, %v855
      %v958 = vcombine.high %v856, %v856
      %v959 = vcombine.high %v857, %v857
      %v963 = vpack.c.bf16 %v855, %v855
      %v964 = vpack.c.bf16 %v957, %v957
      %v965 = vpack.c.bf16 %v856, %v856
      %v966 = vpack.c.bf16 %v958, %v958
      %v967 = vpack.c.bf16 %v857, %v857
      %v968 = vpack.c.bf16 %v959, %v959
      %v969 = vld [vmem:[%s4] sm:$0x1]
      %v971 = vlaneseq
      %v972 = vshrl.u32 %v971, 7
      %v973 = vsub.s32 0, %v972
      %v974 = vrot.slane %v969, %v973
      %v1072 = vunpack.c.l.b16 %v858
      %v1073 = vunpack.c.l.b16 %v859
      %v1074 = vunpack.c.l.b16 %v860
      %v1075 = vunpack.c.l.b16 %v861
      %v1076 = vunpack.c.l.b16 %v862
      %v1077 = vunpack.c.l.b16 %v863
      %v1078 = vunpack.c.l.b16 %v864
      %v1079 = vunpack.c.l.b16 %v865
      %v1080 = vunpack.c.l.b16 %v866
      %v1081 = vunpack.c.l.b16 %v867
      %v1082 = vunpack.c.l.b16 %v868
      %v1083 = vunpack.c.l.b16 %v869
      %v1084 = vunpack.c.l.b16 %v870
      %v1085 = vunpack.c.l.b16 %v871
      %v1086 = vunpack.c.l.b16 %v872
      %v1087 = vunpack.c.l.b16 %v873
      %v1088 = vunpack.c.l.b16 %v874
      %v1089 = vunpack.c.l.b16 %v875
      %v1090 = vunpack.c.l.b16 %v876
      %v1091 = vunpack.c.l.b16 %v877
      %v1092 = vunpack.c.l.b16 %v878
      %v1093 = vunpack.c.l.b16 %v879
      %v1094 = vunpack.c.l.b16 %v880
      %v1095 = vunpack.c.l.b16 %v881
      %v1096 = vunpack.c.l.b16 %v882
      %v1097 = vunpack.c.l.b16 %v883
      %v1098 = vunpack.c.l.b16 %v884
      %v1099 = vunpack.c.l.b16 %v885
      %v1100 = vunpack.c.l.b16 %v886
      %v1101 = vunpack.c.l.b16 %v887
      %v1102 = vunpack.c.l.b16 %v888
      %v1103 = vunpack.c.l.b16 %v889
      %v1104 = vunpack.c.l.b16 %v890
      %v1105 = vunpack.c.l.b16 %v891
      %v1106 = vunpack.c.l.b16 %v892
      %v1107 = vunpack.c.l.b16 %v893
      %v1108 = vunpack.c.l.b16 %v894
      %v1109 = vunpack.c.l.b16 %v895
      %v1110 = vunpack.c.l.b16 %v896
      %v1111 = vunpack.c.l.b16 %v897
      %v1112 = vunpack.c.l.b16 %v898
      %v1113 = vunpack.c.l.b16 %v899
      %v1114 = vunpack.c.l.b16 %v900
      %v1115 = vunpack.c.l.b16 %v901
      %v1116 = vunpack.c.l.b16 %v902
      %v1117 = vunpack.c.l.b16 %v903
      %v1118 = vunpack.c.l.b16 %v904
      %v1119 = vunpack.c.l.b16 %v905
      %v1120 = vunpack.c.l.b16 %v906
      %v1121 = vunpack.c.l.b16 %v907
      %v1122 = vunpack.c.l.b16 %v908
      %v1123 = vunpack.c.l.b16 %v909
      %v1124 = vunpack.c.l.b16 %v910
      %v1125 = vunpack.c.l.b16 %v911
      %v1126 = vunpack.c.l.b16 %v912
      %v1127 = vunpack.c.l.b16 %v913
      %v1128 = vunpack.c.l.b16 %v914
      %v1129 = vunpack.c.l.b16 %v915
      %v1130 = vunpack.c.l.b16 %v916
      %v1131 = vunpack.c.l.b16 %v917
      %v1132 = vunpack.c.l.b16 %v918
      %v1133 = vunpack.c.l.b16 %v919
      %v1134 = vunpack.c.l.b16 %v920
      %v1135 = vunpack.c.l.b16 %v921
      %v1136 = vunpack.c.l.b16 %v922
      %v1137 = vunpack.c.l.b16 %v923
      %v1138 = vunpack.c.l.b16 %v924
      %v1139 = vunpack.c.l.b16 %v925
      %v1140 = vunpack.c.l.b16 %v926
      %v1141 = vunpack.c.l.b16 %v927
      %v1142 = vunpack.c.l.b16 %v928
      %v1143 = vunpack.c.l.b16 %v929
      %v1144 = vunpack.c.l.b16 %v930
      %v1145 = vunpack.c.l.b16 %v931
      %v1146 = vunpack.c.l.b16 %v932
      %v1147 = vunpack.c.l.b16 %v933
      %v1148 = vunpack.c.l.b16 %v934
      %v1149 = vunpack.c.l.b16 %v935
      %v1150 = vunpack.c.l.b16 %v936
      %v1151 = vunpack.c.l.b16 %v937
      %v1152 = vunpack.c.l.b16 %v938
      %v1153 = vunpack.c.l.b16 %v939
      %v1154 = vunpack.c.l.b16 %v940
      %v1155 = vunpack.c.l.b16 %v941
      %v1156 = vunpack.c.l.b16 %v942
      %v1157 = vunpack.c.l.b16 %v943
      %v1158 = vunpack.c.l.b16 %v944
      %v1159 = vunpack.c.l.b16 %v945
      %v1160 = vunpack.c.l.b16 %v946
      %v1161 = vunpack.c.l.b16 %v947
      %v1162 = vunpack.c.l.b16 %v948
      %v1163 = vunpack.c.l.b16 %v949
      %v1164 = vunpack.c.l.b16 %v950
      %v1165 = vunpack.c.l.b16 %v951
      %v1166 = vunpack.c.l.b16 %v952
      %v1167 = vunpack.c.l.b16 %v953
      %v1168 = vpack.c.b16 %v1073, %v1072
      %v1169 = vpack.c.b16 %v1075, %v1074
      %v1170 = vpack.c.b16 %v1077, %v1076
      %v1171 = vpack.c.b16 %v1079, %v1078
      %v1172 = vpack.c.b16 %v1081, %v1080
      %v1173 = vpack.c.b16 %v1083, %v1082
      %v1174 = vpack.c.b16 %v1085, %v1084
      %v1175 = vpack.c.b16 %v1087, %v1086
      %v1176 = vpack.c.b16 %v1089, %v1088
      %v1177 = vpack.c.b16 %v1091, %v1090
      %v1178 = vpack.c.b16 %v1093, %v1092
      %v1179 = vpack.c.b16 %v1095, %v1094
      %v1180 = vpack.c.b16 %v1097, %v1096
      %v1181 = vpack.c.b16 %v1099, %v1098
      %v1182 = vpack.c.b16 %v1101, %v1100
      %v1183 = vpack.c.b16 %v1103, %v1102
      %v1184 = vpack.c.b16 %v1105, %v1104
      %v1185 = vpack.c.b16 %v1107, %v1106
      %v1186 = vpack.c.b16 %v1109, %v1108
      %v1187 = vpack.c.b16 %v1111, %v1110
      %v1188 = vpack.c.b16 %v1113, %v1112
      %v1189 = vpack.c.b16 %v1115, %v1114
      %v1190 = vpack.c.b16 %v1117, %v1116
      %v1191 = vpack.c.b16 %v1119, %v1118
      %v1192 = vpack.c.b16 %v1121, %v1120
      %v1193 = vpack.c.b16 %v1123, %v1122
      %v1194 = vpack.c.b16 %v1125, %v1124
      %v1195 = vpack.c.b16 %v1127, %v1126
      %v1196 = vpack.c.b16 %v1129, %v1128
      %v1197 = vpack.c.b16 %v1131, %v1130
      %v1198 = vpack.c.b16 %v1133, %v1132
      %v1199 = vpack.c.b16 %v1135, %v1134
      %v1200 = vpack.c.b16 %v1137, %v1136
      %v1201 = vpack.c.b16 %v1139, %v1138
      %v1202 = vpack.c.b16 %v1141, %v1140
      %v1203 = vpack.c.b16 %v1143, %v1142
      %v1204 = vpack.c.b16 %v1145, %v1144
      %v1205 = vpack.c.b16 %v1147, %v1146
      %v1206 = vpack.c.b16 %v1149, %v1148
      %v1207 = vpack.c.b16 %v1151, %v1150
      %v1208 = vpack.c.b16 %v1153, %v1152
      %v1209 = vpack.c.b16 %v1155, %v1154
      %v1210 = vpack.c.b16 %v1157, %v1156
      %v1211 = vpack.c.b16 %v1159, %v1158
      %v1212 = vpack.c.b16 %v1161, %v1160
      %v1213 = vpack.c.b16 %v1163, %v1162
      %v1214 = vpack.c.b16 %v1165, %v1164
      %v1215 = vpack.c.b16 %v1167, %v1166
      %1264 = vmatprep.subr.bf16.mxu0 0
      %1265 = vmatpush1.bf16.msra.mxu0 %v1168
      %1266 = vmatprep.subr.bf16.mxu0 0
      %1267 = vmatpush1.bf16.msra.mxu0 %v1169
      %1268 = vmatprep.subr.bf16.mxu0 0
      %1269 = vmatpush1.bf16.msra.mxu0 %v1170
      %1270 = vmatprep.subr.bf16.mxu0 0
      %1271 = vmatpush1.bf16.msra.mxu0 %v1171
      %1272 = vmatprep.subr.bf16.mxu0 0
      %1273 = vmatpush1.bf16.msra.mxu0 %v1172
      %1274 = vmatprep.subr.bf16.mxu0 0
      %1275 = vmatpush1.bf16.msra.mxu0 %v1173
      %1276 = vmatprep.subr.bf16.mxu0 0
      %1277 = vmatpush1.bf16.msra.mxu0 %v1174
      %1278 = vmatprep.subr.bf16.mxu0 0
      %1279 = vmatpush1.bf16.msra.mxu0 %v1175
      %1280 = vmatprep.subr.bf16.mxu0 0
      %1281 = vmatpush1.bf16.msra.mxu0 %v1176
      %1282 = vmatprep.subr.bf16.mxu0 0
      %1283 = vmatpush1.bf16.msra.mxu0 %v1177
      %1284 = vmatprep.subr.bf16.mxu0 0
      %1285 = vmatpush1.bf16.msra.mxu0 %v1178
      %1286 = vmatprep.subr.bf16.mxu0 0
      %1287 = vmatpush1.bf16.msra.mxu0 %v1179
      %1288 = vmatprep.subr.bf16.mxu0 0
      %1289 = vmatpush1.bf16.msra.mxu0 %v1180
      %1290 = vmatprep.subr.bf16.mxu0 0
      %1291 = vmatpush1.bf16.msra.mxu0 %v1181
      %1292 = vmatprep.subr.bf16.mxu0 0
      %1293 = vmatpush1.bf16.msra.mxu0 %v1182
      %1294 = vmatprep.subr.bf16.mxu0 0
      %1295 = vmatpush1.bf16.msra.mxu0 %v1183
      %1296 = vmatprep.mubr.bf16.mxu0 %v964
      %1297 = vmatmul.mubr.bf16.gmra.mrb[0].mxu0 %v963
      %v1298 = vpop.f32.mrb[0].mxu0
      %v1299 = vadd.f32 %v974, %v1298
      %v1300 = vpop.f32.mrb[0].mxu0
      %v1301 = vpop.f32.mrb[0].mxu0
      %v1302 = vpop.f32.mrb[0].mxu0
      %1303 = vdwg.mxu0
      %1304 = vmatprep.subr.bf16.mxu0 0
      %1305 = vmatpush1.bf16.msra.mxu0 %v1184
      %1306 = vmatprep.subr.bf16.mxu0 0
      %1307 = vmatpush1.bf16.msra.mxu0 %v1185
      %1308 = vmatprep.subr.bf16.mxu0 0
      %1309 = vmatpush1.bf16.msra.mxu0 %v1186
      %1310 = vmatprep.subr.bf16.mxu0 0
      %1311 = vmatpush1.bf16.msra.mxu0 %v1187
      %1312 = vmatprep.subr.bf16.mxu0 0
      %1313 = vmatpush1.bf16.msra.mxu0 %v1188
      %1314 = vmatprep.subr.bf16.mxu0 0
      %1315 = vmatpush1.bf16.msra.mxu0 %v1189
      %1316 = vmatprep.subr.bf16.mxu0 0
      %1317 = vmatpush1.bf16.msra.mxu0 %v1190
      %1318 = vmatprep.subr.bf16.mxu0 0
      %1319 = vmatpush1.bf16.msra.mxu0 %v1191
      %1320 = vmatprep.subr.bf16.mxu0 0
      %1321 = vmatpush1.bf16.msra.mxu0 %v1192
      %1322 = vmatprep.subr.bf16.mxu0 0
      %1323 = vmatpush1.bf16.msra.mxu0 %v1193
      %1324 = vmatprep.subr.bf16.mxu0 0
      %1325 = vmatpush1.bf16.msra.mxu0 %v1194
      %1326 = vmatprep.subr.bf16.mxu0 0
      %1327 = vmatpush1.bf16.msra.mxu0 %v1195
      %1328 = vmatprep.subr.bf16.mxu0 0
      %1329 = vmatpush1.bf16.msra.mxu0 %v1196
      %1330 = vmatprep.subr.bf16.mxu0 0
      %1331 = vmatpush1.bf16.msra.mxu0 %v1197
      %1332 = vmatprep.subr.bf16.mxu0 0
      %1333 = vmatpush1.bf16.msra.mxu0 %v1198
      %1334 = vmatprep.subr.bf16.mxu0 0
      %1335 = vmatpush1.bf16.msra.mxu0 %v1199
      %1336 = vmatprep.mubr.bf16.mxu0 %v966
      %1337 = vmatmul.mubr.bf16.gmra.mrb[0].mxu0 %v965
      %v1338 = vpop.f32.mrb[0].mxu0
      %v1339 = vadd.f32 %v1299, %v1338
      %v1340 = vpop.f32.mrb[0].mxu0
      %v1341 = vpop.f32.mrb[0].mxu0
      %v1342 = vpop.f32.mrb[0].mxu0
      %1343 = vdwg.mxu0
      %1344 = vmatprep.subr.bf16.mxu0 0
      %1345 = vmatpush1.bf16.msra.mxu0 %v1200
      %1346 = vmatprep.subr.bf16.mxu0 0
      %1347 = vmatpush1.bf16.msra.mxu0 %v1201
      %1348 = vmatprep.subr.bf16.mxu0 0
      %1349 = vmatpush1.bf16.msra.mxu0 %v1202
      %1350 = vmatprep.subr.bf16.mxu0 0
      %1351 = vmatpush1.bf16.msra.mxu0 %v1203
      %1352 = vmatprep.subr.bf16.mxu0 0
      %1353 = vmatpush1.bf16.msra.mxu0 %v1204
      %1354 = vmatprep.subr.bf16.mxu0 0
      %1355 = vmatpush1.bf16.msra.mxu0 %v1205
      %1356 = vmatprep.subr.bf16.mxu0 0
      %1357 = vmatpush1.bf16.msra.mxu0 %v1206
      %1358 = vmatprep.subr.bf16.mxu0 0
      %1359 = vmatpush1.bf16.msra.mxu0 %v1207
      %1360 = vmatprep.subr.bf16.mxu0 0
      %1361 = vmatpush1.bf16.msra.mxu0 %v1208
      %1362 = vmatprep.subr.bf16.mxu0 0
      %1363 = vmatpush1.bf16.msra.mxu0 %v1209
      %1364 = vmatprep.subr.bf16.mxu0 0
      %1365 = vmatpush1.bf16.msra.mxu0 %v1210
      %1366 = vmatprep.subr.bf16.mxu0 0
      %1367 = vmatpush1.bf16.msra.mxu0 %v1211
      %1368 = vmatprep.subr.bf16.mxu0 0
      %1369 = vmatpush1.bf16.msra.mxu0 %v1212
      %1370 = vmatprep.subr.bf16.mxu0 0
      %1371 = vmatpush1.bf16.msra.mxu0 %v1213
      %1372 = vmatprep.subr.bf16.mxu0 0
      %1373 = vmatpush1.bf16.msra.mxu0 %v1214
      %1374 = vmatprep.subr.bf16.mxu0 0
      %1375 = vmatpush1.bf16.msra.mxu0 %v1215
      %1376 = vmatprep.mubr.bf16.mxu0 %v968
      %1377 = vmatmul.mubr.bf16.gmra.mrb[0].mxu0 %v967
      %v1378 = vpop.f32.mrb[0].mxu0
      %v1379 = vadd.f32 %v1339, %v1378
      %v1380 = vpop.f32.mrb[0].mxu0
      %v1381 = vpop.f32.mrb[0].mxu0
      %v1382 = vpop.f32.mrb[0].mxu0
      %1383 = vdwg.mxu0
      %v1384 = vld [vmem:[%s5] sm:$0x1]
      %v1385 = vld [vmem:[%s6] sm:$0x1]
      %v1386 = vsel %vm722, %v1379, 0.0
      %1387 = vadd.xlane.f32.xlu0 %v1386
      %v1388 = vpop.xlane.xlu0 %1387
      %v1389 = vrcp.pop 128.0
      %v1390 = vmul.f32 %v1388, %v1389
      %v1391 = vsub.f32 %v1379, %v1390
      %v1392 = vmul.f32 %v1391, %v1391
      %v1393 = vsel %vm722, %v1392, 0.0
      %1394 = vadd.xlane.f32.xlu0 %v1393
      %v1395 = vpop.xlane.xlu0 %1394
      %v1396 = vmul.f32 %v1395, %v1389
      %v1397 = vadd.f32 %v1396, 1e-05
      %v1398 = vrsqrt.pop %v1397
      %v1399 = vmul.f32 %v1391, %v1398
      %v1401 = vlaneseq
      %v1402 = vshrl.u32 %v1401, 7
      %v1403 = vsub.s32 0, %v1402
      %v1404 = vrot.slane %v1384, %v1403
      %v1406 = vmul.f32 %v1399, %v1404
      %v1408 = vlaneseq
      %v1409 = vshrl.u32 %v1408, 7
      %v1410 = vsub.s32 0, %v1409
      %v1411 = vrot.slane %v1385, %v1410
      %v1413 = vadd.f32 %v1406, %v1411
      %1414 = vst [vmem:[#allocation2] sm:$0xff] 0.0
      %1415 = vst [vmem:[#allocation2 + $0x1] sm:$0xf] %v1413
      %v1416 = vld [vmem:[#allocation2] sm:$0xff]
      %v1417 = vld [vmem:[%s7] sm:$0xff]
      %v1418 = vadd.f32 %v1416, %v1417
      %v1419 = vlaneseq
      %v1420 = vand.u32 %v1419, 127
      %vm1421 = vcmp.lt.s32.totalorder %v1420, 5
      %v1422 = vsel %vm1421, 0.0, -1e+30
      %v1423 = vld [vmem:[%s8] sm:$0x1]
      %v1424 = vld [vmem:[%s9] sm:$0x1]
      %1425 = vadd.xlane.f32.xlu0 %v1418
      %v1426 = vpop.xlane.xlu0 %1425
      %v1427 = vmul.f32 %v1426, %v1389
      %v1428 = vsub.f32 %v1418, %v1427
      %v1429 = vmul.f32 %v1428, %v1428
      %1430 = vadd.xlane.f32.xlu0 %v1429
      %v1431 = vpop.xlane.xlu0 %1430
      %v1432 = vmul.f32 %v1431, %v1389
      %v1433 = vadd.f32 %v1432, 1e-05
      %v1434 = vrsqrt.pop %v1433
      %v1435 = vmul.f32 %v1428, %v1434
      %v1437 = vlaneseq
      %v1438 = vshrl.u32 %v1437, 7
      %v1439 = vsub.s32 0, %v1438
      %v1440 = vrot.slane %v1423, %v1439
      %v1442 = vmul.f32 %v1435, %v1440
      %v1444 = vlaneseq
      %v1445 = vshrl.u32 %v1444, 7
      %v1446 = vsub.s32 0, %v1445
      %v1447 = vrot.slane %v1424, %v1446
      %v1449 = vadd.f32 %v1442, %v1447
      %v1450 = vld [vmem:[%s10] sm:$0xff]
      %v1451 = vld [vmem:[%s10 + $0x8] sm:$0xf]
      %v1452 = vld [vmem:[%s10 + $0xc] sm:$0xff]
      %v1453 = vld [vmem:[%s10 + $0x14] sm:$0xf]
      %v1454 = vld [vmem:[%s10 + $0x18] sm:$0xff]
      %v1455 = vld [vmem:[%s10 + $0x20] sm:$0xf]
      %v1456 = vld [vmem:[%s10 + $0x24] sm:$0xff]
      %v1457 = vld [vmem:[%s10 + $0x2c] sm:$0xf]
      %v1458 = vld [vmem:[%s10 + $0x30] sm:$0xff]
      %v1459 = vld [vmem:[%s10 + $0x38] sm:$0xf]
      %v1460 = vld [vmem:[%s10 + $0x3c] sm:$0xff]
      %v1461 = vld [vmem:[%s10 + $0x44] sm:$0xf]
      %v1462 = vld [vmem:[%s10 + $0x48] sm:$0xff]
      %v1463 = vld [vmem:[%s10 + $0x50] sm:$0xf]
      %v1464 = vld [vmem:[%s10 + $0x54] sm:$0xff]
      %v1465 = vld [vmem:[%s10 + $0x5c] sm:$0xf]
      %v1466 = vld [vmem:[%s10 + $0x60] sm:$0xff]
      %v1467 = vld [vmem:[%s10 + $0x68] sm:$0xf]
      %v1468 = vld [vmem:[%s10 + $0x6c] sm:$0xff]
      %v1469 = vld [vmem:[%s10 + $0x74] sm:$0xf]
      %v1470 = vld [vmem:[%s10 + $0x78] sm:$0xff]
      %v1471 = vld [vmem:[%s10 + $0x80] sm:$0xf]
      %v1472 = vld [vmem:[%s10 + $0x84] sm:$0xff]
      %v1473 = vld [vmem:[%s10 + $0x8c] sm:$0xf]
      %v1474 = vld [vmem:[%s10 + $0x90] sm:$0xff]
      %v1475 = vld [vmem:[%s10 + $0x98] sm:$0xf]
      %v1476 = vld [vmem:[%s10 + $0x9c] sm:$0xff]
      %v1477 = vld [vmem:[%s10 + $0xa4] sm:$0xf]
      %v1478 = vld [vmem:[%s10 + $0xa8] sm:$0xff]
      %v1479 = vld [vmem:[%s10 + $0xb0] sm:$0xf]
      %v1480 = vld [vmem:[%s10 + $0xb4] sm:$0xff]
      %v1481 = vld [vmem:[%s10 + $0xbc] sm:$0xf]
      %v1482 = vpack.c.bf16 %v1449, %v1449
      %v1515 = vunpack.c.l.b16 %v1450
      %v1516 = vunpack.c.h.b16 %v1450
      %v1517 = vunpack.c.l.b16 %v1451
      %v1518 = vunpack.c.l.b16 %v1452
      %v1519 = vunpack.c.h.b16 %v1452
      %v1520 = vunpack.c.l.b16 %v1453
      %v1521 = vunpack.c.l.b16 %v1454
      %v1522 = vunpack.c.h.b16 %v1454
      %v1523 = vunpack.c.l.b16 %v1455
      %v1524 = vunpack.c.l.b16 %v1456
      %v1525 = vunpack.c.h.b16 %v1456
      %v1526 = vunpack.c.l.b16 %v1457
      %v1527 = vunpack.c.l.b16 %v1458
      %v1528 = vunpack.c.h.b16 %v1458
      %v1529 = vunpack.c.l.b16 %v1459
      %v1530 = vunpack.c.l.b16 %v1460
      %v1531 = vunpack.c.h.b16 %v1460
      %v1532 = vunpack.c.l.b16 %v1461
      %v1533 = vunpack.c.l.b16 %v1462
      %v1534 = vunpack.c.h.b16 %v1462
      %v1535 = vunpack.c.l.b16 %v1463
      %v1536 = vunpack.c.l.b16 %v1464
      %v1537 = vunpack.c.h.b16 %v1464
      %v1538 = vunpack.c.l.b16 %v1465
      %v1539 = vunpack.c.l.b16 %v1466
      %v1540 = vunpack.c.h.b16 %v1466
      %v1541 = vunpack.c.l.b16 %v1467
      %v1542 = vunpack.c.l.b16 %v1468
      %v1543 = vunpack.c.h.b16 %v1468
      %v1544 = vunpack.c.l.b16 %v1469
      %v1545 = vunpack.c.l.b16 %v1470
      %v1546 = vunpack.c.h.b16 %v1470
      %v1547 = vunpack.c.l.b16 %v1471
      %v1548 = vunpack.c.l.b16 %v1472
      %v1549 = vunpack.c.h.b16 %v1472
      %v1550 = vunpack.c.l.b16 %v1473
      %v1551 = vunpack.c.l.b16 %v1474
      %v1552 = vunpack.c.h.b16 %v1474
      %v1553 = vunpack.c.l.b16 %v1475
      %v1554 = vunpack.c.l.b16 %v1476
      %v1555 = vunpack.c.h.b16 %v1476
      %v1556 = vunpack.c.l.b16 %v1477
      %v1557 = vunpack.c.l.b16 %v1478
      %v1558 = vunpack.c.h.b16 %v1478
      %v1559 = vunpack.c.l.b16 %v1479
      %v1560 = vunpack.c.l.b16 %v1480
      %v1561 = vunpack.c.h.b16 %v1480
      %v1562 = vunpack.c.l.b16 %v1481
      %v1563 = vpack.c.b16 %v1518, %v1515
      %v1564 = vpack.c.b16 %v1519, %v1516
      %v1565 = vpack.c.b16 %v1520, %v1517
      %v1566 = vpack.c.b16 %v1524, %v1521
      %v1567 = vpack.c.b16 %v1525, %v1522
      %v1568 = vpack.c.b16 %v1526, %v1523
      %v1569 = vpack.c.b16 %v1530, %v1527
      %v1570 = vpack.c.b16 %v1531, %v1528
      %v1571 = vpack.c.b16 %v1532, %v1529
      %v1572 = vpack.c.b16 %v1536, %v1533
      %v1573 = vpack.c.b16 %v1537, %v1534
      %v1574 = vpack.c.b16 %v1538, %v1535
      %v1575 = vpack.c.b16 %v1542, %v1539
      %v1576 = vpack.c.b16 %v1543, %v1540
      %v1577 = vpack.c.b16 %v1544, %v1541
      %v1578 = vpack.c.b16 %v1548, %v1545
      %v1579 = vpack.c.b16 %v1549, %v1546
      %v1580 = vpack.c.b16 %v1550, %v1547
      %v1581 = vpack.c.b16 %v1554, %v1551
      %v1582 = vpack.c.b16 %v1555, %v1552
      %v1583 = vpack.c.b16 %v1556, %v1553
      %v1584 = vpack.c.b16 %v1560, %v1557
      %v1585 = vpack.c.b16 %v1561, %v1558
      %v1586 = vpack.c.b16 %v1562, %v1559
      %1611 = vmatprep.subr.bf16.mxu0 %v1564
      %1612 = vmatpush1.bf16.msra.mxu0 %v1563
      %1613 = vmatprep.subr.bf16.mxu0 %v1567
      %1614 = vmatpush1.bf16.msra.mxu0 %v1566
      %1615 = vmatprep.subr.bf16.mxu0 %v1570
      %1616 = vmatpush1.bf16.msra.mxu0 %v1569
      %1617 = vmatprep.subr.bf16.mxu0 %v1573
      %1618 = vmatpush1.bf16.msra.mxu0 %v1572
      %1619 = vmatprep.subr.bf16.mxu0 %v1576
      %1620 = vmatpush1.bf16.msra.mxu0 %v1575
      %1621 = vmatprep.subr.bf16.mxu0 %v1579
      %1622 = vmatpush1.bf16.msra.mxu0 %v1578
      %1623 = vmatprep.subr.bf16.mxu0 %v1582
      %1624 = vmatpush1.bf16.msra.mxu0 %v1581
      %1625 = vmatprep.subr.bf16.mxu0 %v1585
      %1626 = vmatpush1.bf16.msra.mxu0 %v1584
      %1627 = vmatprep.subr.bf16.mxu0 0
      %1628 = vmatpush1.bf16.msra.mxu0 0
      %1629 = vmatprep.subr.bf16.mxu0 0
      %1630 = vmatpush1.bf16.msra.mxu0 0
      %1631 = vmatprep.subr.bf16.mxu0 0
      %1632 = vmatpush1.bf16.msra.mxu0 0
      %1633 = vmatprep.subr.bf16.mxu0 0
      %1634 = vmatpush1.bf16.msra.mxu0 0
      %1635 = vmatprep.subr.bf16.mxu0 0
      %1636 = vmatpush1.bf16.msra.mxu0 0
      %1637 = vmatprep.subr.bf16.mxu0 0
      %1638 = vmatpush1.bf16.msra.mxu0 0
      %1639 = vmatprep.subr.bf16.mxu0 0
      %1640 = vmatpush1.bf16.msra.mxu0 0
      %1641 = vmatprep.subr.bf16.mxu0 0
      %1642 = vmatpush1.bf16.msra.mxu0 0
      %1643 = vmatprep.mubr.bf16.mxu0 0
      %1644 = vmatmul.mubr.bf16.gmra.mrb[0].mxu0 %v1482
      %v1645 = vpop.f32.mrb[0].mxu0
      %v1646 = vadd.f32 0.0, %v1645
      %v1647 = vpop.f32.mrb[0].mxu0
      %v1648 = vadd.f32 0.0, %v1647
      %v1649 = vpop.f32.mrb[0].mxu0
      %v1650 = vpop.f32.mrb[0].mxu0
      %1651 = vdwg.mxu0
      %1652 = vmatprep.subr.bf16.mxu0 0
      %1653 = vmatpush1.bf16.msra.mxu0 %v1565
      %1654 = vmatprep.subr.bf16.mxu0 0
      %1655 = vmatpush1.bf16.msra.mxu0 %v1568
      %1656 = vmatprep.subr.bf16.mxu0 0
      %1657 = vmatpush1.bf16.msra.mxu0 %v1571
      %1658 = vmatprep.subr.bf16.mxu0 0
      %1659 = vmatpush1.bf16.msra.mxu0 %v1574
      %1660 = vmatprep.subr.bf16.mxu0 0
      %1661 = vmatpush1.bf16.msra.mxu0 %v1577
      %1662 = vmatprep.subr.bf16.mxu0 0
      %1663 = vmatpush1.bf16.msra.mxu0 %v1580
      %1664 = vmatprep.subr.bf16.mxu0 0
      %1665 = vmatpush1.bf16.msra.mxu0 %v1583
      %1666 = vmatprep.subr.bf16.mxu0 0
      %1667 = vmatpush1.bf16.msra.mxu0 %v1586
      %1668 = vmatprep.subr.bf16.mxu0 0
      %1669 = vmatpush1.bf16.msra.mxu0 0
      %1670 = vmatprep.subr.bf16.mxu0 0
      %1671 = vmatpush1.bf16.msra.mxu0 0
      %1672 = vmatprep.subr.bf16.mxu0 0
      %1673 = vmatpush1.bf16.msra.mxu0 0
      %1674 = vmatprep.subr.bf16.mxu0 0
      %1675 = vmatpush1.bf16.msra.mxu0 0
      %1676 = vmatprep.subr.bf16.mxu0 0
      %1677 = vmatpush1.bf16.msra.mxu0 0
      %1678 = vmatprep.subr.bf16.mxu0 0
      %1679 = vmatpush1.bf16.msra.mxu0 0
      %1680 = vmatprep.subr.bf16.mxu0 0
      %1681 = vmatpush1.bf16.msra.mxu0 0
      %1682 = vmatprep.subr.bf16.mxu0 0
      %1683 = vmatpush1.bf16.msra.mxu0 0
      %1684 = vmatprep.mubr.bf16.mxu0 0
      %1685 = vmatmul.mubr.bf16.gmra.mrb[0].mxu0 %v1482
      %v1686 = vpop.f32.mrb[0].mxu0
      %v1687 = vadd.f32 0.0, %v1686
      %v1688 = vpop.f32.mrb[0].mxu0
      %v1689 = vpop.f32.mrb[0].mxu0
      %v1690 = vpop.f32.mrb[0].mxu0
      %1691 = vdwg.mxu0
      %v1692 = vmul.f32 %v1646, 0.17677669
      %v1693 = vpack.c.bf16 %v1692, %v1692
      %v1694 = vpack.c.bf16 %v1648, %v1648
      %v1695 = vpack.c.bf16 %v1687, %v1687
      %vm1696 = vcmask 261120
      %v1698 = vsel %vm1696, %v1693, 0
      %v1701 = vsel %vm1696, %v1694, 0
      %1703 = vmatprep.subr.bf16.mxu0 0
      %1704 = vmatpush1.bf16.xpose.msra.mxu0 %v1701
      %1705 = vmatprep.subr.bf16.mxu0 0
      %1706 = vmatpush1.bf16.xpose.msra.mxu0 0
      %1707 = vmatprep.subr.bf16.mxu0 0
      %1708 = vmatpush1.bf16.xpose.msra.mxu0 0
      %1709 = vmatprep.subr.bf16.mxu0 0
      %1710 = vmatpush1.bf16.xpose.msra.mxu0 0
      %1711 = vmatprep.subr.bf16.mxu0 0
      %1712 = vmatpush1.bf16.xpose.msra.mxu0 0
      %1713 = vmatprep.subr.bf16.mxu0 0
      %1714 = vmatpush1.bf16.xpose.msra.mxu0 0
      %1715 = vmatprep.subr.bf16.mxu0 0
      %1716 = vmatpush1.bf16.xpose.msra.mxu0 0
      %1717 = vmatprep.subr.bf16.mxu0 0
      %1718 = vmatpush1.bf16.xpose.msra.mxu0 0
      %1719 = vmatprep.subr.bf16.mxu0 0
      %1720 = vmatpush1.bf16.xpose.msra.mxu0 0
      %1721 = vmatprep.subr.bf16.mxu0 0
      %1722 = vmatpush1.bf16.xpose.msra.mxu0 0
      %1723 = vmatprep.subr.bf16.mxu0 0
      %1724 = vmatpush1.bf16.xpose.msra.mxu0 0
      %1725 = vmatprep.subr.bf16.mxu0 0
      %1726 = vmatpush1.bf16.xpose.msra.mxu0 0
      %1727 = vmatprep.subr.bf16.mxu0 0
      %1728 = vmatpush1.bf16.xpose.msra.mxu0 0
      %1729 = vmatprep.subr.bf16.mxu0 0
      %1730 = vmatpush1.bf16.xpose.msra.mxu0 0
      %1731 = vmatprep.subr.bf16.mxu0 0
      %1732 = vmatpush1.bf16.xpose.msra.mxu0 0
      %1733 = vmatprep.subr.bf16.mxu0 0
      %1734 = vmatpush1.bf16.xpose.msra.mxu0 0
      %1735 = vmatprep.mubr.bf16.mxu0 0
      %1736 = vmatmul.mubr.bf16.gmra.mrb[0].mxu0 %v1698
      %v1737 = vpop.f32.mrb[0].mxu0
      %v1738 = vadd.f32 %v1422, %v1737
      %v1739 = vpop.f32.mrb[0].mxu0
      %v1740 = vpop.f32.mrb[0].mxu0
      %v1741 = vpop.f32.mrb[0].mxu0
      %1742 = vdwg.mxu0
      %vm1743 = vcmask 64512
      %v1744 = vsel %vm1743, %v1738, -inf
      %1745 = vmax.xlane.f32.xlu0 %v1744
      %v1746 = vpop.xlane.xlu0 %1745
      %v1747 = vsub.f32 %v1738, %v1746
      %v1748 = vmul.f32 %v1747, 1.442695
      %v1749 = vpow.pop %v1748
      %v1750 = vsel %vm1743, %v1749, 0.0
      %1751 = vadd.xlane.f32.xlu0 %v1750
      %v1752 = vpop.xlane.xlu0 %1751
      %v1753 = vrcp.pop %v1752
      %v1754 = vmul.f32 %v1749, %v1753
      %v1755 = vpack.c.bf16 %v1754, %v1754
      %v1757 = vsel %vm1743, %v1755, 0
      %v1760 = vsel %vm722, %v1695, 0
      %1762 = vmatprep.subr.bf16.mxu0 0
      %1763 = vmatpush1.bf16.msra.mxu0 %v1760
      %1764 = vmatprep.subr.bf16.mxu0 0
      %1765 = vmatpush1.bf16.msra.mxu0 0
      %1766 = vmatprep.subr.bf16.mxu0 0
      %1767 = vmatpush1.bf16.msra.mxu0 0
      %1768 = vmatprep.subr.bf16.mxu0 0
      %1769 = vmatpush1.bf16.msra.mxu0 0
      %1770 = vmatprep.subr.bf16.mxu0 0
      %1771 = vmatpush1.bf16.msra.mxu0 0
      %1772 = vmatprep.subr.bf16.mxu0 0
      %1773 = vmatpush1.bf16.msra.mxu0 0
      %1774 = vmatprep.subr.bf16.mxu0 0
      %1775 = vmatpush1.bf16.msra.mxu0 0
      %1776 = vmatprep.subr.bf16.mxu0 0
      %1777 = vmatpush1.bf16.msra.mxu0 0
      %1778 = vmatprep.subr.bf16.mxu0 0
      %1779 = vmatpush1.bf16.msra.mxu0 0
      %1780 = vmatprep.subr.bf16.mxu0 0
      %1781 = vmatpush1.bf16.msra.mxu0 0
      %1782 = vmatprep.subr.bf16.mxu0 0
      %1783 = vmatpush1.bf16.msra.mxu0 0
      %1784 = vmatprep.subr.bf16.mxu0 0
      %1785 = vmatpush1.bf16.msra.mxu0 0
      %1786 = vmatprep.subr.bf16.mxu0 0
      %1787 = vmatpush1.bf16.msra.mxu0 0
      %1788 = vmatprep.subr.bf16.mxu0 0
      %1789 = vmatpush1.bf16.msra.mxu0 0
      %1790 = vmatprep.subr.bf16.mxu0 0
      %1791 = vmatpush1.bf16.msra.mxu0 0
      %1792 = vmatprep.subr.bf16.mxu0 0
      %1793 = vmatpush1.bf16.msra.mxu0 0
      %1794 = vmatprep.mubr.bf16.mxu0 0
      %1795 = vmatmul.mubr.bf16.gmra.mrb[0].mxu0 %v1757
      %v1796 = vpop.f32.mrb[0].mxu0
      %v1797 = vadd.f32 0.0, %v1796
      %v1798 = vpop.f32.mrb[0].mxu0
      %v1799 = vpop.f32.mrb[0].mxu0
      %v1800 = vpop.f32.mrb[0].mxu0
      %1801 = vdwg.mxu0
      %1802 = vst.msk [vmem:[#allocation3] sm:$0xff] %vm1696, %v1797
      %1804 = vrot.lane.b32.xlu0 %v1693, 96
      %v1805 = vpop.permute.xlu0 %1804
      %1807 = vrot.lane.b32.xlu0 %v1694, 96
      %v1808 = vpop.permute.xlu0 %1807
      %v1810 = vsel %vm1696, %v1805, 0
      %v1813 = vsel %vm1696, %v1808, 0
      %1815 = vmatprep.subr.bf16.mxu0 0
      %1816 = vmatpush1.bf16.xpose.msra.mxu0 %v1813
      %1817 = vmatprep.subr.bf16.mxu0 0
      %1818 = vmatpush1.bf16.xpose.msra.mxu0 0
      %1819 = vmatprep.subr.bf16.mxu0 0
      %1820 = vmatpush1.bf16.xpose.msra.mxu0 0
      %1821 = vmatprep.subr.bf16.mxu0 0
      %1822 = vmatpush1.bf16.xpose.msra.mxu0 0
      %1823 = vmatprep.subr.bf16.mxu0 0
      %1824 = vmatpush1.bf16.xpose.msra.mxu0 0
      %1825 = vmatprep.subr.bf16.mxu0 0
      %1826 = vmatpush1.bf16.xpose.msra.mxu0 0
      %1827 = vmatprep.subr.bf16.mxu0 0
      %1828 = vmatpush1.bf16.xpose.msra.mxu0 0
      %1829 = vmatprep.subr.bf16.mxu0 0
      %1830 = vmatpush1.bf16.xpose.msra.mxu0 0
      %1831 = vmatprep.subr.bf16.mxu0 0
      %1832 = vmatpush1.bf16.xpose.msra.mxu0 0
      %1833 = vmatprep.subr.bf16.mxu0 0
      %1834 = vmatpush1.bf16.xpose.msra.mxu0 0
      %1835 = vmatprep.subr.bf16.mxu0 0
      %1836 = vmatpush1.bf16.xpose.msra.mxu0 0
      %1837 = vmatprep.subr.bf16.mxu0 0
      %1838 = vmatpush1.bf16.xpose.msra.mxu0 0
      %1839 = vmatprep.subr.bf16.mxu0 0
      %1840 = vmatpush1.bf16.xpose.msra.mxu0 0
      %1841 = vmatprep.subr.bf16.mxu0 0
      %1842 = vmatpush1.bf16.xpose.msra.mxu0 0
      %1843 = vmatprep.subr.bf16.mxu0 0
      %1844 = vmatpush1.bf16.xpose.msra.mxu0 0
      %1845 = vmatprep.subr.bf16.mxu0 0
      %1846 = vmatpush1.bf16.xpose.msra.mxu0 0
      %1847 = vmatprep.mubr.bf16.mxu0 0
      %1848 = vmatmul.mubr.bf16.gmra.mrb[0].mxu0 %v1810
      %v1849 = vpop.f32.mrb[0].mxu0
      %v1850 = vadd.f32 %v1422, %v1849
      %v1851 = vpop.f32.mrb[0].mxu0
      %v1852 = vpop.f32.mrb[0].mxu0
      %v1853 = vpop.f32.mrb[0].mxu0
      %1854 = vdwg.mxu0
      %v1855 = vsel %vm1743, %v1850, -inf
      %1856 = vmax.xlane.f32.xlu0 %v1855
      %v1857 = vpop.xlane.xlu0 %1856
      %v1858 = vsub.f32 %v1850, %v1857
      %v1859 = vmul.f32 %v1858, 1.442695
      %v1860 = vpow.pop %v1859
      %v1861 = vsel %vm1743, %v1860, 0.0
      %1862 = vadd.xlane.f32.xlu0 %v1861
      %v1863 = vpop.xlane.xlu0 %1862
      %v1864 = vrcp.pop %v1863
      %v1865 = vmul.f32 %v1860, %v1864
      %v1866 = vpack.c.bf16 %v1865, %v1865
      %1868 = vrot.lane.b32.xlu0 %v1695, 96
      %v1869 = vpop.permute.xlu0 %1868
      %v1871 = vsel %vm1743, %v1866, 0
      %v1874 = vsel %vm722, %v1869, 0
      %1876 = vmatprep.subr.bf16.mxu0 0
      %1877 = vmatpush1.bf16.msra.mxu0 %v1874
      %1878 = vmatprep.subr.bf16.mxu0 0
      %1879 = vmatpush1.bf16.msra.mxu0 0
      %1880 = vmatprep.subr.bf16.mxu0 0
      %1881 = vmatpush1.bf16.msra.mxu0 0
      %1882 = vmatprep.subr.bf16.mxu0 0
      %1883 = vmatpush1.bf16.msra.mxu0 0
      %1884 = vmatprep.subr.bf16.mxu0 0
      %1885 = vmatpush1.bf16.msra.mxu0 0
      %1886 = vmatprep.subr.bf16.mxu0 0
      %1887 = vmatpush1.bf16.msra.mxu0 0
      %1888 = vmatprep.subr.bf16.mxu0 0
      %1889 = vmatpush1.bf16.msra.mxu0 0
      %1890 = vmatprep.subr.bf16.mxu0 0
      %1891 = vmatpush1.bf16.msra.mxu0 0
      %1892 = vmatprep.subr.bf16.mxu0 0
      %1893 = vmatpush1.bf16.msra.mxu0 0
      %1894 = vmatprep.subr.bf16.mxu0 0
      %1895 = vmatpush1.bf16.msra.mxu0 0
      %1896 = vmatprep.subr.bf16.mxu0 0
      %1897 = vmatpush1.bf16.msra.mxu0 0
      %1898 = vmatprep.subr.bf16.mxu0 0
      %1899 = vmatpush1.bf16.msra.mxu0 0
      %1900 = vmatprep.subr.bf16.mxu0 0
      %1901 = vmatpush1.bf16.msra.mxu0 0
      %1902 = vmatprep.subr.bf16.mxu0 0
      %1903 = vmatpush1.bf16.msra.mxu0 0
      %1904 = vmatprep.subr.bf16.mxu0 0
      %1905 = vmatpush1.bf16.msra.mxu0 0
      %1906 = vmatprep.subr.bf16.mxu0 0
      %1907 = vmatpush1.bf16.msra.mxu0 0
      %1908 = vmatprep.mubr.bf16.mxu0 0
      %1909 = vmatmul.mubr.bf16.gmra.mrb[0].mxu0 %v1871
      %v1910 = vpop.f32.mrb[0].mxu0
      %v1911 = vadd.f32 0.0, %v1910
      %v1912 = vpop.f32.mrb[0].mxu0
      %v1913 = vpop.f32.mrb[0].mxu0
      %v1914 = vpop.f32.mrb[0].mxu0
      %1915 = vdwg.mxu0
      %1917 = vrot.lane.b32.xlu0 %v1911, 32
      %v1918 = vpop.permute.xlu0 %1917
      %vm1920 = vcmask 523520
      %1921 = vst.msk [vmem:[#allocation3] sm:$0xff] %vm1920, %v1918
      %1922 = vrot.lane.b32.xlu0 %v1693, 64
      %v1923 = vpop.permute.xlu0 %1922
      %1924 = vrot.lane.b32.xlu0 %v1694, 64
      %v1925 = vpop.permute.xlu0 %1924
      %v1927 = vsel %vm1696, %v1923, 0
      %v1930 = vsel %vm1696, %v1925, 0
      %1932 = vmatprep.subr.bf16.mxu0 0
      %1933 = vmatpush1.bf16.xpose.msra.mxu0 %v1930
      %1934 = vmatprep.subr.bf16.mxu0 0
      %1935 = vmatpush1.bf16.xpose.msra.mxu0 0
      %1936 = vmatprep.subr.bf16.mxu0 0
      %1937 = vmatpush1.bf16.xpose.msra.mxu0 0
      %1938 = vmatprep.subr.bf16.mxu0 0
      %1939 = vmatpush1.bf16.xpose.msra.mxu0 0
      %1940 = vmatprep.subr.bf16.mxu0 0
      %1941 = vmatpush1.bf16.xpose.msra.mxu0 0
      %1942 = vmatprep.subr.bf16.mxu0 0
      %1943 = vmatpush1.bf16.xpose.msra.mxu0 0
      %1944 = vmatprep.subr.bf16.mxu0 0
      %1945 = vmatpush1.bf16.xpose.msra.mxu0 0
      %1946 = vmatprep.subr.bf16.mxu0 0
      %1947 = vmatpush1.bf16.xpose.msra.mxu0 0
      %1948 = vmatprep.subr.bf16.mxu0 0
      %1949 = vmatpush1.bf16.xpose.msra.mxu0 0
      %1950 = vmatprep.subr.bf16.mxu0 0
      %1951 = vmatpush1.bf16.xpose.msra.mxu0 0
      %1952 = vmatprep.subr.bf16.mxu0 0
      %1953 = vmatpush1.bf16.xpose.msra.mxu0 0
      %1954 = vmatprep.subr.bf16.mxu0 0
      %1955 = vmatpush1.bf16.xpose.msra.mxu0 0
      %1956 = vmatprep.subr.bf16.mxu0 0
      %1957 = vmatpush1.bf16.xpose.msra.mxu0 0
      %1958 = vmatprep.subr.bf16.mxu0 0
      %1959 = vmatpush1.bf16.xpose.msra.mxu0 0
      %1960 = vmatprep.subr.bf16.mxu0 0
      %1961 = vmatpush1.bf16.xpose.msra.mxu0 0
      %1962 = vmatprep.subr.bf16.mxu0 0
      %1963 = vmatpush1.bf16.xpose.msra.mxu0 0
      %1964 = vmatprep.mubr.bf16.mxu0 0
      %1965 = vmatmul.mubr.bf16.gmra.mrb[0].mxu0 %v1927
      %v1966 = vpop.f32.mrb[0].mxu0
      %v1967 = vadd.f32 %v1422, %v1966
      %v1968 = vpop.f32.mrb[0].mxu0
      %v1969 = vpop.f32.mrb[0].mxu0
      %v1970 = vpop.f32.mrb[0].mxu0
      %1971 = vdwg.mxu0
      %v1972 = vsel %vm1743, %v1967, -inf
      %1973 = vmax.xlane.f32.xlu0 %v1972
      %v1974 = vpop.xlane.xlu0 %1973
      %v1975 = vsub.f32 %v1967, %v1974
      %v1976 = vmul.f32 %v1975, 1.442695
      %v1977 = vpow.pop %v1976
      %v1978 = vsel %vm1743, %v1977, 0.0
      %1979 = vadd.xlane.f32.xlu0 %v1978
      %v1980 = vpop.xlane.xlu0 %1979
      %v1981 = vrcp.pop %v1980
      %v1982 = vmul.f32 %v1977, %v1981
      %v1983 = vpack.c.bf16 %v1982, %v1982
      %1984 = vrot.lane.b32.xlu0 %v1695, 64
      %v1985 = vpop.permute.xlu0 %1984
      %v1987 = vsel %vm1743, %v1983, 0
      %v1990 = vsel %vm722, %v1985, 0
      %1992 = vmatprep.subr.bf16.mxu0 0
      %1993 = vmatpush1.bf16.msra.mxu0 %v1990
      %1994 = vmatprep.subr.bf16.mxu0 0
      %1995 = vmatpush1.bf16.msra.mxu0 0
      %1996 = vmatprep.subr.bf16.mxu0 0
      %1997 = vmatpush1.bf16.msra.mxu0 0
      %1998 = vmatprep.subr.bf16.mxu0 0
      %1999 = vmatpush1.bf16.msra.mxu0 0
      %2000 = vmatprep.subr.bf16.mxu0 0
      %2001 = vmatpush1.bf16.msra.mxu0 0
      %2002 = vmatprep.subr.bf16.mxu0 0
      %2003 = vmatpush1.bf16.msra.mxu0 0
      %2004 = vmatprep.subr.bf16.mxu0 0
      %2005 = vmatpush1.bf16.msra.mxu0 0
      %2006 = vmatprep.subr.bf16.mxu0 0
      %2007 = vmatpush1.bf16.msra.mxu0 0
      %2008 = vmatprep.subr.bf16.mxu0 0
      %2009 = vmatpush1.bf16.msra.mxu0 0
      %2010 = vmatprep.subr.bf16.mxu0 0
      %2011 = vmatpush1.bf16.msra.mxu0 0
      %2012 = vmatprep.subr.bf16.mxu0 0
      %2013 = vmatpush1.bf16.msra.mxu0 0
      %2014 = vmatprep.subr.bf16.mxu0 0
      %2015 = vmatpush1.bf16.msra.mxu0 0
      %2016 = vmatprep.subr.bf16.mxu0 0
      %2017 = vmatpush1.bf16.msra.mxu0 0
      %2018 = vmatprep.subr.bf16.mxu0 0
      %2019 = vmatpush1.bf16.msra.mxu0 0
      %2020 = vmatprep.subr.bf16.mxu0 0
      %2021 = vmatpush1.bf16.msra.mxu0 0
      %2022 = vmatprep.subr.bf16.mxu0 0
      %2023 = vmatpush1.bf16.msra.mxu0 0
      %2024 = vmatprep.mubr.bf16.mxu0 0
      %2025 = vmatmul.mubr.bf16.gmra.mrb[0].mxu0 %v1987
      %v2026 = vpop.f32.mrb[0].mxu0
      %v2027 = vadd.f32 0.0, %v2026
      %v2028 = vpop.f32.mrb[0].mxu0
      %v2029 = vpop.f32.mrb[0].mxu0
      %v2030 = vpop.f32.mrb[0].mxu0
      %2031 = vdwg.mxu0
      %2033 = vrot.lane.b32.xlu0 %v2027, 64
      %v2034 = vpop.permute.xlu0 %2033
      %vm2036 = vcmask 785920
      %2037 = vst.msk [vmem:[#allocation3] sm:$0xff] %vm2036, %v2034
      %2038 = vrot.lane.b32.xlu0 %v1693, 32
      %v2039 = vpop.permute.xlu0 %2038
      %2040 = vrot.lane.b32.xlu0 %v1694, 32
      %v2041 = vpop.permute.xlu0 %2040
      %v2043 = vsel %vm1696, %v2039, 0
      %v2046 = vsel %vm1696, %v2041, 0
      %2048 = vmatprep.subr.bf16.mxu0 0
      %2049 = vmatpush1.bf16.xpose.msra.mxu0 %v2046
      %2050 = vmatprep.subr.bf16.mxu0 0
      %2051 = vmatpush1.bf16.xpose.msra.mxu0 0
      %2052 = vmatprep.subr.bf16.mxu0 0
      %2053 = vmatpush1.bf16.xpose.msra.mxu0 0
      %2054 = vmatprep.subr.bf16.mxu0 0
      %2055 = vmatpush1.bf16.xpose.msra.mxu0 0
      %2056 = vmatprep.subr.bf16.mxu0 0
      %2057 = vmatpush1.bf16.xpose.msra.mxu0 0
      %2058 = vmatprep.subr.bf16.mxu0 0
      %2059 = vmatpush1.bf16.xpose.msra.mxu0 0
      %2060 = vmatprep.subr.bf16.mxu0 0
      %2061 = vmatpush1.bf16.xpose.msra.mxu0 0
      %2062 = vmatprep.subr.bf16.mxu0 0
      %2063 = vmatpush1.bf16.xpose.msra.mxu0 0
      %2064 = vmatprep.subr.bf16.mxu0 0
      %2065 = vmatpush1.bf16.xpose.msra.mxu0 0
      %2066 = vmatprep.subr.bf16.mxu0 0
      %2067 = vmatpush1.bf16.xpose.msra.mxu0 0
      %2068 = vmatprep.subr.bf16.mxu0 0
      %2069 = vmatpush1.bf16.xpose.msra.mxu0 0
      %2070 = vmatprep.subr.bf16.mxu0 0
      %2071 = vmatpush1.bf16.xpose.msra.mxu0 0
      %2072 = vmatprep.subr.bf16.mxu0 0
      %2073 = vmatpush1.bf16.xpose.msra.mxu0 0
      %2074 = vmatprep.subr.bf16.mxu0 0
      %2075 = vmatpush1.bf16.xpose.msra.mxu0 0
      %2076 = vmatprep.subr.bf16.mxu0 0
      %2077 = vmatpush1.bf16.xpose.msra.mxu0 0
      %2078 = vmatprep.subr.bf16.mxu0 0
      %2079 = vmatpush1.bf16.xpose.msra.mxu0 0
      %2080 = vmatprep.mubr.bf16.mxu0 0
      %2081 = vmatmul.mubr.bf16.gmra.mrb[0].mxu0 %v2043
      %v2082 = vpop.f32.mrb[0].mxu0
      %v2083 = vadd.f32 %v1422, %v2082
      %v2084 = vpop.f32.mrb[0].mxu0
      %v2085 = vpop.f32.mrb[0].mxu0
      %v2086 = vpop.f32.mrb[0].mxu0
      %2087 = vdwg.mxu0
      %v2088 = vsel %vm1743, %v2083, -inf
      %2089 = vmax.xlane.f32.xlu0 %v2088
      %v2090 = vpop.xlane.xlu0 %2089
      %v2091 = vsub.f32 %v2083, %v2090
      %v2092 = vmul.f32 %v2091, 1.442695
      %v2093 = vpow.pop %v2092
      %v2094 = vsel %vm1743, %v2093, 0.0
      %2095 = vadd.xlane.f32.xlu0 %v2094
      %v2096 = vpop.xlane.xlu0 %2095
      %v2097 = vrcp.pop %v2096
      %v2098 = vmul.f32 %v2093, %v2097
      %v2099 = vpack.c.bf16 %v2098, %v2098
      %2100 = vrot.lane.b32.xlu0 %v1695, 32
      %v2101 = vpop.permute.xlu0 %2100
      %v2103 = vsel %vm1743, %v2099, 0
      %v2106 = vsel %vm722, %v2101, 0
      %2108 = vmatprep.subr.bf16.mxu0 0
      %2109 = vmatpush1.bf16.msra.mxu0 %v2106
      %2110 = vmatprep.subr.bf16.mxu0 0
      %2111 = vmatpush1.bf16.msra.mxu0 0
      %2112 = vmatprep.subr.bf16.mxu0 0
      %2113 = vmatpush1.bf16.msra.mxu0 0
      %2114 = vmatprep.subr.bf16.mxu0 0
      %2115 = vmatpush1.bf16.msra.mxu0 0
      %2116 = vmatprep.subr.bf16.mxu0 0
      %2117 = vmatpush1.bf16.msra.mxu0 0
      %2118 = vmatprep.subr.bf16.mxu0 0
      %2119 = vmatpush1.bf16.msra.mxu0 0
      %2120 = vmatprep.subr.bf16.mxu0 0
      %2121 = vmatpush1.bf16.msra.mxu0 0
      %2122 = vmatprep.subr.bf16.mxu0 0
      %2123 = vmatpush1.bf16.msra.mxu0 0
      %2124 = vmatprep.subr.bf16.mxu0 0
      %2125 = vmatpush1.bf16.msra.mxu0 0
      %2126 = vmatprep.subr.bf16.mxu0 0
      %2127 = vmatpush1.bf16.msra.mxu0 0
      %2128 = vmatprep.subr.bf16.mxu0 0
      %2129 = vmatpush1.bf16.msra.mxu0 0
      %2130 = vmatprep.subr.bf16.mxu0 0
      %2131 = vmatpush1.bf16.msra.mxu0 0
      %2132 = vmatprep.subr.bf16.mxu0 0
      %2133 = vmatpush1.bf16.msra.mxu0 0
      %2134 = vmatprep.subr.bf16.mxu0 0
      %2135 = vmatpush1.bf16.msra.mxu0 0
      %2136 = vmatprep.subr.bf16.mxu0 0
      %2137 = vmatpush1.bf16.msra.mxu0 0
      %2138 = vmatprep.subr.bf16.mxu0 0
      %2139 = vmatpush1.bf16.msra.mxu0 0
      %2140 = vmatprep.mubr.bf16.mxu0 0
      %2141 = vmatmul.mubr.bf16.gmra.mrb[0].mxu0 %v2103
      %v2142 = vpop.f32.mrb[0].mxu0
      %v2143 = vadd.f32 0.0, %v2142
      %v2144 = vpop.f32.mrb[0].mxu0
      %v2145 = vpop.f32.mrb[0].mxu0
      %v2146 = vpop.f32.mrb[0].mxu0
      %2147 = vdwg.mxu0
      %2149 = vrot.lane.b32.xlu0 %v2143, 96
      %v2150 = vpop.permute.xlu0 %2149
      %vm2152 = vcmask 1048320
      %2153 = vst.msk [vmem:[#allocation3] sm:$0xff] %vm2152, %v2150
      %v2154 = vld [vmem:[#allocation3] sm:$0xff]
      %v2155 = vld [vmem:[%s11] sm:$0xf]
      %v2156 = vld [vmem:[%s11 + $0x4] sm:$0xf]
      %v2157 = vld [vmem:[%s11 + $0x8] sm:$0xf]
      %v2158 = vld [vmem:[%s11 + $0xc] sm:$0xf]
      %v2159 = vld [vmem:[%s11 + $0x10] sm:$0xf]
      %v2160 = vld [vmem:[%s11 + $0x14] sm:$0xf]
      %v2161 = vld [vmem:[%s11 + $0x18] sm:$0xf]
      %v2162 = vld [vmem:[%s11 + $0x1c] sm:$0xf]
      %v2163 = vld [vmem:[%s11 + $0x20] sm:$0xf]
      %v2164 = vld [vmem:[%s11 + $0x24] sm:$0xf]
      %v2165 = vld [vmem:[%s11 + $0x28] sm:$0xf]
      %v2166 = vld [vmem:[%s11 + $0x2c] sm:$0xf]
      %v2167 = vld [vmem:[%s11 + $0x30] sm:$0xf]
      %v2168 = vld [vmem:[%s11 + $0x34] sm:$0xf]
      %v2169 = vld [vmem:[%s11 + $0x38] sm:$0xf]
      %v2170 = vld [vmem:[%s11 + $0x3c] sm:$0xf]
      %v2171 = vpack.c.bf16 %v2154, %v2154
      %v2172 = vld [vmem:[%s12] sm:$0x1]
      %v2174 = vlaneseq
      %v2175 = vshrl.u32 %v2174, 7
      %v2176 = vsub.s32 0, %v2175
      %v2177 = vrot.slane %v2172, %v2176
      %v2195 = vunpack.c.l.b16 %v2155
      %v2196 = vunpack.c.l.b16 %v2156
      %v2197 = vunpack.c.l.b16 %v2157
      %v2198 = vunpack.c.l.b16 %v2158
      %v2199 = vunpack.c.l.b16 %v2159
      %v2200 = vunpack.c.l.b16 %v2160
      %v2201 = vunpack.c.l.b16 %v2161
      %v2202 = vunpack.c.l.b16 %v2162
      %v2203 = vunpack.c.l.b16 %v2163
      %v2204 = vunpack.c.l.b16 %v2164
      %v2205 = vunpack.c.l.b16 %v2165
      %v2206 = vunpack.c.l.b16 %v2166
      %v2207 = vunpack.c.l.b16 %v2167
      %v2208 = vunpack.c.l.b16 %v2168
      %v2209 = vunpack.c.l.b16 %v2169
      %v2210 = vunpack.c.l.b16 %v2170
      %v2211 = vpack.c.b16 %v2196, %v2195
      %v2212 = vpack.c.b16 %v2198, %v2197
      %v2213 = vpack.c.b16 %v2200, %v2199
      %v2214 = vpack.c.b16 %v2202, %v2201
      %v2215 = vpack.c.b16 %v2204, %v2203
      %v2216 = vpack.c.b16 %v2206, %v2205
      %v2217 = vpack.c.b16 %v2208, %v2207
      %v2218 = vpack.c.b16 %v2210, %v2209
      %2227 = vmatprep.subr.bf16.mxu0 0
      %2228 = vmatpush1.bf16.msra.mxu0 %v2211
      %2229 = vmatprep.subr.bf16.mxu0 0
      %2230 = vmatpush1.bf16.msra.mxu0 %v2212
      %2231 = vmatprep.subr.bf16.mxu0 0
      %2232 = vmatpush1.bf16.msra.mxu0 %v2213
      %2233 = vmatprep.subr.bf16.mxu0 0
      %2234 = vmatpush1.bf16.msra.mxu0 %v2214
      %2235 = vmatprep.subr.bf16.mxu0 0
      %2236 = vmatpush1.bf16.msra.mxu0 %v2215
      %2237 = vmatprep.subr.bf16.mxu0 0
      %2238 = vmatpush1.bf16.msra.mxu0 %v2216
      %2239 = vmatprep.subr.bf16.mxu0 0
      %2240 = vmatpush1.bf16.msra.mxu0 %v2217
      %2241 = vmatprep.subr.bf16.mxu0 0
      %2242 = vmatpush1.bf16.msra.mxu0 %v2218
      %2243 = vmatprep.subr.bf16.mxu0 0
      %2244 = vmatpush1.bf16.msra.mxu0 0
      %2245 = vmatprep.subr.bf16.mxu0 0
      %2246 = vmatpush1.bf16.msra.mxu0 0
      %2247 = vmatprep.subr.bf16.mxu0 0
      %2248 = vmatpush1.bf16.msra.mxu0 0
      %2249 = vmatprep.subr.bf16.mxu0 0
      %2250 = vmatpush1.bf16.msra.mxu0 0
      %2251 = vmatprep.subr.bf16.mxu0 0
      %2252 = vmatpush1.bf16.msra.mxu0 0
      %2253 = vmatprep.subr.bf16.mxu0 0
      %2254 = vmatpush1.bf16.msra.mxu0 0
      %2255 = vmatprep.subr.bf16.mxu0 0
      %2256 = vmatpush1.bf16.msra.mxu0 0
      %2257 = vmatprep.subr.bf16.mxu0 0
      %2258 = vmatpush1.bf16.msra.mxu0 0
      %2259 = vmatprep.mubr.bf16.mxu0 0
      %2260 = vmatmul.mubr.bf16.gmra.mrb[0].mxu0 %v2171
      %v2261 = vpop.f32.mrb[0].mxu0
      %v2262 = vadd.f32 %v2177, %v2261
      %v2263 = vpop.f32.mrb[0].mxu0
      %v2264 = vpop.f32.mrb[0].mxu0
      %v2265 = vpop.f32.mrb[0].mxu0
      %2266 = vdwg.mxu0
      %v2267 = vadd.f32 %v2262, %v1418
      %v2268 = vld [vmem:[%s13] sm:$0x1]
      %v2269 = vld [vmem:[%s14] sm:$0x1]
      %2270 = vadd.xlane.f32.xlu0 %v2267
      %v2271 = vpop.xlane.xlu0 %2270
      %v2272 = vmul.f32 %v2271, %v1389
      %v2273 = vsub.f32 %v2267, %v2272
      %v2274 = vmul.f32 %v2273, %v2273
      %2275 = vadd.xlane.f32.xlu0 %v2274
      %v2276 = vpop.xlane.xlu0 %2275
      %v2277 = vmul.f32 %v2276, %v1389
      %v2278 = vadd.f32 %v2277, 1e-05
      %v2279 = vrsqrt.pop %v2278
      %v2280 = vmul.f32 %v2273, %v2279
      %v2282 = vlaneseq
      %v2283 = vshrl.u32 %v2282, 7
      %v2284 = vsub.s32 0, %v2283
      %v2285 = vrot.slane %v2268, %v2284
      %v2287 = vmul.f32 %v2280, %v2285
      %v2289 = vlaneseq
      %v2290 = vshrl.u32 %v2289, 7
      %v2291 = vsub.s32 0, %v2290
      %v2292 = vrot.slane %v2269, %v2291
      %v2294 = vadd.f32 %v2287, %v2292
      %v2295 = vld [vmem:[%s15] sm:$0xff]
      %v2296 = vld [vmem:[%s15 + $0x8] sm:$0xff]
      %v2297 = vld [vmem:[%s15 + $0x10] sm:$0xff]
      %v2298 = vld [vmem:[%s15 + $0x18] sm:$0xff]
      %v2299 = vld [vmem:[%s15 + $0x20] sm:$0xff]
      %v2300 = vld [vmem:[%s15 + $0x28] sm:$0xff]
      %v2301 = vld [vmem:[%s15 + $0x30] sm:$0xff]
      %v2302 = vld [vmem:[%s15 + $0x38] sm:$0xff]
      %v2303 = vld [vmem:[%s15 + $0x40] sm:$0xff]
      %v2304 = vld [vmem:[%s15 + $0x48] sm:$0xff]
      %v2305 = vld [vmem:[%s15 + $0x50] sm:$0xff]
      %v2306 = vld [vmem:[%s15 + $0x58] sm:$0xff]
      %v2307 = vld [vmem:[%s15 + $0x60] sm:$0xff]
      %v2308 = vld [vmem:[%s15 + $0x68] sm:$0xff]
      %v2309 = vld [vmem:[%s15 + $0x70] sm:$0xff]
      %v2310 = vld [vmem:[%s15 + $0x78] sm:$0xff]
      %v2311 = vpack.c.bf16 %v2294, %v2294
      %v2312 = vld [vmem:[%s16] sm:$0x3]
      %v2314 = vlaneseq
      %v2315 = vshrl.u32 %v2314, 7
      %v2316 = vsub.s32 0, %v2315
      %v2317 = vrot.slane %v2312, %v2316
      %v2318 = vlaneseq
      %v2319 = vshrl.u32 %v2318, 7
      %v2320 = vsub.s32 1, %v2319
      %v2321 = vrot.slane %v2312, %v2320
      %v2340 = vunpack.c.l.b16 %v2295
      %v2341 = vunpack.c.h.b16 %v2295
      %v2342 = vunpack.c.l.b16 %v2296
      %v2343 = vunpack.c.h.b16 %v2296
      %v2344 = vunpack.c.l.b16 %v2297
      %v2345 = vunpack.c.h.b16 %v2297
      %v2346 = vunpack.c.l.b16 %v2298
      %v2347 = vunpack.c.h.b16 %v2298
      %v2348 = vunpack.c.l.b16 %v2299
      %v2349 = vunpack.c.h.b16 %v2299
      %v2350 = vunpack.c.l.b16 %v2300
      %v2351 = vunpack.c.h.b16 %v2300
      %v2352 = vunpack.c.l.b16 %v2301
      %v2353 = vunpack.c.h.b16 %v2301
      %v2354 = vunpack.c.l.b16 %v2302
      %v2355 = vunpack.c.h.b16 %v2302
      %v2356 = vunpack.c.l.b16 %v2303
      %v2357 = vunpack.c.h.b16 %v2303
      %v2358 = vunpack.c.l.b16 %v2304
      %v2359 = vunpack.c.h.b16 %v2304
      %v2360 = vunpack.c.l.b16 %v2305
      %v2361 = vunpack.c.h.b16 %v2305
      %v2362 = vunpack.c.l.b16 %v2306
      %v2363 = vunpack.c.h.b16 %v2306
      %v2364 = vunpack.c.l.b16 %v2307
      %v2365 = vunpack.c.h.b16 %v2307
      %v2366 = vunpack.c.l.b16 %v2308
      %v2367 = vunpack.c.h.b16 %v2308
      %v2368 = vunpack.c.l.b16 %v2309
      %v2369 = vunpack.c.h.b16 %v2309
      %v2370 = vunpack.c.l.b16 %v2310
      %v2371 = vunpack.c.h.b16 %v2310
      %v2372 = vpack.c.b16 %v2342, %v2340
      %v2373 = vpack.c.b16 %v2343, %v2341
      %v2374 = vpack.c.b16 %v2346, %v2344
      %v2375 = vpack.c.b16 %v2347, %v2345
      %v2376 = vpack.c.b16 %v2350, %v2348
      %v2377 = vpack.c.b16 %v2351, %v2349
      %v2378 = vpack.c.b16 %v2354, %v2352
      %v2379 = vpack.c.b16 %v2355, %v2353
      %v2380 = vpack.c.b16 %v2358, %v2356
      %v2381 = vpack.c.b16 %v2359, %v2357
      %v2382 = vpack.c.b16 %v2362, %v2360
      %v2383 = vpack.c.b16 %v2363, %v2361
      %v2384 = vpack.c.b16 %v2366, %v2364
      %v2385 = vpack.c.b16 %v2367, %v2365
      %v2386 = vpack.c.b16 %v2370, %v2368
      %v2387 = vpack.c.b16 %v2371, %v2369
      %2404 = vmatprep.subr.bf16.mxu0 %v2373
      %2405 = vmatpush1.bf16.msra.mxu0 %v2372
      %2406 = vmatprep.subr.bf16.mxu0 %v2375
      %2407 = vmatpush1.bf16.msra.mxu0 %v2374
      %2408 = vmatprep.subr.bf16.mxu0 %v2377
      %2409 = vmatpush1.bf16.msra.mxu0 %v2376
      %2410 = vmatprep.subr.bf16.mxu0 %v2379
      %2411 = vmatpush1.bf16.msra.mxu0 %v2378
      %2412 = vmatprep.subr.bf16.mxu0 %v2381
      %2413 = vmatpush1.bf16.msra.mxu0 %v2380
      %2414 = vmatprep.subr.bf16.mxu0 %v2383
      %2415 = vmatpush1.bf16.msra.mxu0 %v2382
      %2416 = vmatprep.subr.bf16.mxu0 %v2385
      %2417 = vmatpush1.bf16.msra.mxu0 %v2384
      %2418 = vmatprep.subr.bf16.mxu0 %v2387
      %2419 = vmatpush1.bf16.msra.mxu0 %v2386
      %2420 = vmatprep.subr.bf16.mxu0 0
      %2421 = vmatpush1.bf16.msra.mxu0 0
      %2422 = vmatprep.subr.bf16.mxu0 0
      %2423 = vmatpush1.bf16.msra.mxu0 0
      %2424 = vmatprep.subr.bf16.mxu0 0
      %2425 = vmatpush1.bf16.msra.mxu0 0
      %2426 = vmatprep.subr.bf16.mxu0 0
      %2427 = vmatpush1.bf16.msra.mxu0 0
      %2428 = vmatprep.subr.bf16.mxu0 0
      %2429 = vmatpush1.bf16.msra.mxu0 0
      %2430 = vmatprep.subr.bf16.mxu0 0
      %2431 = vmatpush1.bf16.msra.mxu0 0
      %2432 = vmatprep.subr.bf16.mxu0 0
      %2433 = vmatpush1.bf16.msra.mxu0 0
      %2434 = vmatprep.subr.bf16.mxu0 0
      %2435 = vmatpush1.bf16.msra.mxu0 0
      %2436 = vmatprep.mubr.bf16.mxu0 0
      %2437 = vmatmul.mubr.bf16.gmra.mrb[0].mxu0 %v2311
      %v2438 = vpop.f32.mrb[0].mxu0
      %v2439 = vadd.f32 %v2317, %v2438
      %v2440 = vpop.f32.mrb[0].mxu0
      %v2441 = vadd.f32 %v2321, %v2440
      %v2442 = vpop.f32.mrb[0].mxu0
      %v2443 = vpop.f32.mrb[0].mxu0
      %2444 = vdwg.mxu0
      %v2445 = vmul.f32 %v2439, 0.5
      %v2446 = vmul.f32 %v2441, 0.5
      %v2447 = vmul.f32 %v2439, 0.70710677
      %v2448 = vmul.f32 %v2441, 0.70710677
      %v2449 = verf.f32.pop %v2447
      %v2450 = verf.f32.pop %v2448
      %v2451 = vadd.f32 %v2449, 1.0
      %v2452 = vadd.f32 %v2450, 1.0
      %v2453 = vmul.f32 %v2445, %v2451
      %v2454 = vmul.f32 %v2446, %v2452
      %v2455 = vld [vmem:[%s17] sm:$0xf]
      %v2456 = vld [vmem:[%s17 + $0x4] sm:$0xf]
      %v2457 = vld [vmem:[%s17 + $0x8] sm:$0xf]
      %v2458 = vld [vmem:[%s17 + $0xc] sm:$0xf]
      %v2459 = vld [vmem:[%s17 + $0x10] sm:$0xf]
      %v2460 = vld [vmem:[%s17 + $0x14] sm:$0xf]
      %v2461 = vld [vmem:[%s17 + $0x18] sm:$0xf]
      %v2462 = vld [vmem:[%s17 + $0x1c] sm:$0xf]
      %v2463 = vld [vmem:[%s17 + $0x20] sm:$0xf]
      %v2464 = vld [vmem:[%s17 + $0x24] sm:$0xf]
      %v2465 = vld [vmem:[%s17 + $0x28] sm:$0xf]
      %v2466 = vld [vmem:[%s17 + $0x2c] sm:$0xf]
      %v2467 = vld [vmem:[%s17 + $0x30] sm:$0xf]
      %v2468 = vld [vmem:[%s17 + $0x34] sm:$0xf]
      %v2469 = vld [vmem:[%s17 + $0x38] sm:$0xf]
      %v2470 = vld [vmem:[%s17 + $0x3c] sm:$0xf]
      %v2471 = vld [vmem:[%s17 + $0x40] sm:$0xf]
      %v2472 = vld [vmem:[%s17 + $0x44] sm:$0xf]
      %v2473 = vld [vmem:[%s17 + $0x48] sm:$0xf]
      %v2474 = vld [vmem:[%s17 + $0x4c] sm:$0xf]
      %v2475 = vld [vmem:[%s17 + $0x50] sm:$0xf]
      %v2476 = vld [vmem:[%s17 + $0x54] sm:$0xf]
      %v2477 = vld [vmem:[%s17 + $0x58] sm:$0xf]
      %v2478 = vld [vmem:[%s17 + $0x5c] sm:$0xf]
      %v2479 = vld [vmem:[%s17 + $0x60] sm:$0xf]
      %v2480 = vld [vmem:[%s17 + $0x64] sm:$0xf]
      %v2481 = vld [vmem:[%s17 + $0x68] sm:$0xf]
      %v2482 = vld [vmem:[%s17 + $0x6c] sm:$0xf]
      %v2483 = vld [vmem:[%s17 + $0x70] sm:$0xf]
      %v2484 = vld [vmem:[%s17 + $0x74] sm:$0xf]
      %v2485 = vld [vmem:[%s17 + $0x78] sm:$0xf]
      %v2486 = vld [vmem:[%s17 + $0x7c] sm:$0xf]
      %v2487 = vpack.c.bf16 %v2453, %v2453
      %v2488 = vpack.c.bf16 %v2454, %v2454
      %v2489 = vld [vmem:[%s18] sm:$0x1]
      %v2491 = vlaneseq
      %v2492 = vshrl.u32 %v2491, 7
      %v2493 = vsub.s32 0, %v2492
      %v2494 = vrot.slane %v2489, %v2493
      %v2528 = vunpack.c.l.b16 %v2455
      %v2529 = vunpack.c.l.b16 %v2456
      %v2530 = vunpack.c.l.b16 %v2457
      %v2531 = vunpack.c.l.b16 %v2458
      %v2532 = vunpack.c.l.b16 %v2459
      %v2533 = vunpack.c.l.b16 %v2460
      %v2534 = vunpack.c.l.b16 %v2461
      %v2535 = vunpack.c.l.b16 %v2462
      %v2536 = vunpack.c.l.b16 %v2463
      %v2537 = vunpack.c.l.b16 %v2464
      %v2538 = vunpack.c.l.b16 %v2465
      %v2539 = vunpack.c.l.b16 %v2466
      %v2540 = vunpack.c.l.b16 %v2467
      %v2541 = vunpack.c.l.b16 %v2468
      %v2542 = vunpack.c.l.b16 %v2469
      %v2543 = vunpack.c.l.b16 %v2470
      %v2544 = vunpack.c.l.b16 %v2471
      %v2545 = vunpack.c.l.b16 %v2472
      %v2546 = vunpack.c.l.b16 %v2473
      %v2547 = vunpack.c.l.b16 %v2474
      %v2548 = vunpack.c.l.b16 %v2475
      %v2549 = vunpack.c.l.b16 %v2476
      %v2550 = vunpack.c.l.b16 %v2477
      %v2551 = vunpack.c.l.b16 %v2478
      %v2552 = vunpack.c.l.b16 %v2479
      %v2553 = vunpack.c.l.b16 %v2480
      %v2554 = vunpack.c.l.b16 %v2481
      %v2555 = vunpack.c.l.b16 %v2482
      %v2556 = vunpack.c.l.b16 %v2483
      %v2557 = vunpack.c.l.b16 %v2484
      %v2558 = vunpack.c.l.b16 %v2485
      %v2559 = vunpack.c.l.b16 %v2486
      %v2560 = vpack.c.b16 %v2529, %v2528
      %v2561 = vpack.c.b16 %v2531, %v2530
      %v2562 = vpack.c.b16 %v2533, %v2532
      %v2563 = vpack.c.b16 %v2535, %v2534
      %v2564 = vpack.c.b16 %v2537, %v2536
      %v2565 = vpack.c.b16 %v2539, %v2538
      %v2566 = vpack.c.b16 %v2541, %v2540
      %v2567 = vpack.c.b16 %v2543, %v2542
      %v2568 = vpack.c.b16 %v2545, %v2544
      %v2569 = vpack.c.b16 %v2547, %v2546
      %v2570 = vpack.c.b16 %v2549, %v2548
      %v2571 = vpack.c.b16 %v2551, %v2550
      %v2572 = vpack.c.b16 %v2553, %v2552
      %v2573 = vpack.c.b16 %v2555, %v2554
      %v2574 = vpack.c.b16 %v2557, %v2556
      %v2575 = vpack.c.b16 %v2559, %v2558
      %2592 = vmatprep.subr.bf16.mxu0 0
      %2593 = vmatpush1.bf16.msra.mxu0 %v2560
      %2594 = vmatprep.subr.bf16.mxu0 0
      %2595 = vmatpush1.bf16.msra.mxu0 %v2561
      %2596 = vmatprep.subr.bf16.mxu0 0
      %2597 = vmatpush1.bf16.msra.mxu0 %v2562
      %2598 = vmatprep.subr.bf16.mxu0 0
      %2599 = vmatpush1.bf16.msra.mxu0 %v2563
      %2600 = vmatprep.subr.bf16.mxu0 0
      %2601 = vmatpush1.bf16.msra.mxu0 %v2564
      %2602 = vmatprep.subr.bf16.mxu0 0
      %2603 = vmatpush1.bf16.msra.mxu0 %v2565
      %2604 = vmatprep.subr.bf16.mxu0 0
      %2605 = vmatpush1.bf16.msra.mxu0 %v2566
      %2606 = vmatprep.subr.bf16.mxu0 0
      %2607 = vmatpush1.bf16.msra.mxu0 %v2567
      %2608 = vmatprep.subr.bf16.mxu0 0
      %2609 = vmatpush1.bf16.msra.mxu0 %v2568
      %2610 = vmatprep.subr.bf16.mxu0 0
      %2611 = vmatpush1.bf16.msra.mxu0 %v2569
      %2612 = vmatprep.subr.bf16.mxu0 0
      %2613 = vmatpush1.bf16.msra.mxu0 %v2570
      %2614 = vmatprep.subr.bf16.mxu0 0
      %2615 = vmatpush1.bf16.msra.mxu0 %v2571
      %2616 = vmatprep.subr.bf16.mxu0 0
      %2617 = vmatpush1.bf16.msra.mxu0 %v2572
      %2618 = vmatprep.subr.bf16.mxu0 0
      %2619 = vmatpush1.bf16.msra.mxu0 %v2573
      %2620 = vmatprep.subr.bf16.mxu0 0
      %2621 = vmatpush1.bf16.msra.mxu0 %v2574
      %2622 = vmatprep.subr.bf16.mxu0 0
      %2623 = vmatpush1.bf16.msra.mxu0 %v2575
      %2624 = vmatprep.mubr.bf16.mxu0 %v2488
      %2625 = vmatmul.mubr.bf16.gmra.mrb[0].mxu0 %v2487
      %v2626 = vpop.f32.mrb[0].mxu0
      %v2627 = vadd.f32 %v2494, %v2626
      %v2628 = vpop.f32.mrb[0].mxu0
      %v2629 = vpop.f32.mrb[0].mxu0
      %v2630 = vpop.f32.mrb[0].mxu0
      %2631 = vdwg.mxu0
      %v2632 = vadd.f32 %v2627, %v2267
      %s2633 = scalar_lea.vmem %s8, 1
      %v2634 = vld [vmem:[%s2633] sm:$0x1]
      %s2635 = scalar_lea.vmem %s9, 1
      %v2636 = vld [vmem:[%s2635] sm:$0x1]
      %2637 = vadd.xlane.f32.xlu0 %v2632
      %v2638 = vpop.xlane.xlu0 %2637
      %v2639 = vmul.f32 %v2638, %v1389
      %v2640 = vsub.f32 %v2632, %v2639
      %v2641 = vmul.f32 %v2640, %v2640
      %2642 = vadd.xlane.f32.xlu0 %v2641
      %v2643 = vpop.xlane.xlu0 %2642
      %v2644 = vmul.f32 %v2643, %v1389
      %v2645 = vadd.f32 %v2644, 1e-05
      %v2646 = vrsqrt.pop %v2645
      %v2647 = vmul.f32 %v2640, %v2646
      %v2649 = vlaneseq
      %v2650 = vshrl.u32 %v2649, 7
      %v2651 = vsub.s32 0, %v2650
      %v2652 = vrot.slane %v2634, %v2651
      %v2654 = vmul.f32 %v2647, %v2652
      %v2656 = vlaneseq
      %v2657 = vshrl.u32 %v2656, 7
      %v2658 = vsub.s32 0, %v2657
      %v2659 = vrot.slane %v2636, %v2658
      %v2661 = vadd.f32 %v2654, %v2659
      %s2662 = scalar_lea.vmem %s10, 192
      %v2663 = vld [vmem:[%s2662] sm:$0xff]
      %v2664 = vld [vmem:[%s2662 + $0x8] sm:$0xf]
      %v2665 = vld [vmem:[%s2662 + $0xc] sm:$0xff]
      %v2666 = vld [vmem:[%s2662 + $0x14] sm:$0xf]
      %v2667 = vld [vmem:[%s2662 + $0x18] sm:$0xff]
      %v2668 = vld [vmem:[%s2662 + $0x20] sm:$0xf]
      %v2669 = vld [vmem:[%s2662 + $0x24] sm:$0xff]
      %v2670 = vld [vmem:[%s2662 + $0x2c] sm:$0xf]
      %v2671 = vld [vmem:[%s2662 + $0x30] sm:$0xff]
      %v2672 = vld [vmem:[%s2662 + $0x38] sm:$0xf]
      %v2673 = vld [vmem:[%s2662 + $0x3c] sm:$0xff]
      %v2674 = vld [vmem:[%s2662 + $0x44] sm:$0xf]
      %v2675 = vld [vmem:[%s2662 + $0x48] sm:$0xff]
      %v2676 = vld [vmem:[%s2662 + $0x50] sm:$0xf]
      %v2677 = vld [vmem:[%s2662 + $0x54] sm:$0xff]
      %v2678 = vld [vmem:[%s2662 + $0x5c] sm:$0xf]
      %v2679 = vld [vmem:[%s2662 + $0x60] sm:$0xff]
      %v2680 = vld [vmem:[%s2662 + $0x68] sm:$0xf]
      %v2681 = vld [vmem:[%s2662 + $0x6c] sm:$0xff]
      %v2682 = vld [vmem:[%s2662 + $0x74] sm:$0xf]
      %v2683 = vld [vmem:[%s2662 + $0x78] sm:$0xff]
      %v2684 = vld [vmem:[%s2662 + $0x80] sm:$0xf]
      %v2685 = vld [vmem:[%s2662 + $0x84] sm:$0xff]
      %v2686 = vld [vmem:[%s2662 + $0x8c] sm:$0xf]
      %v2687 = vld [vmem:[%s2662 + $0x90] sm:$0xff]
      %v2688 = vld [vmem:[%s2662 + $0x98] sm:$0xf]
      %v2689 = vld [vmem:[%s2662 + $0x9c] sm:$0xff]
      %v2690 = vld [vmem:[%s2662 + $0xa4] sm:$0xf]
      %v2691 = vld [vmem:[%s2662 + $0xa8] sm:$0xff]
      %v2692 = vld [vmem:[%s2662 + $0xb0] sm:$0xf]
      %v2693 = vld [vmem:[%s2662 + $0xb4] sm:$0xff]
      %v2694 = vld [vmem:[%s2662 + $0xbc] sm:$0xf]
      %v2695 = vpack.c.bf16 %v2661, %v2661
      %v2728 = vunpack.c.l.b16 %v2663
      %v2729 = vunpack.c.h.b16 %v2663
      %v2730 = vunpack.c.l.b16 %v2664
      %v2731 = vunpack.c.l.b16 %v2665
      %v2732 = vunpack.c.h.b16 %v2665
      %v2733 = vunpack.c.l.b16 %v2666
      %v2734 = vunpack.c.l.b16 %v2667
      %v2735 = vunpack.c.h.b16 %v2667
      %v2736 = vunpack.c.l.b16 %v2668
      %v2737 = vunpack.c.l.b16 %v2669
      %v2738 = vunpack.c.h.b16 %v2669
      %v2739 = vunpack.c.l.b16 %v2670
      %v2740 = vunpack.c.l.b16 %v2671
      %v2741 = vunpack.c.h.b16 %v2671
      %v2742 = vunpack.c.l.b16 %v2672
      %v2743 = vunpack.c.l.b16 %v2673
      %v2744 = vunpack.c.h.b16 %v2673
      %v2745 = vunpack.c.l.b16 %v2674
      %v2746 = vunpack.c.l.b16 %v2675
      %v2747 = vunpack.c.h.b16 %v2675
      %v2748 = vunpack.c.l.b16 %v2676
      %v2749 = vunpack.c.l.b16 %v2677
      %v2750 = vunpack.c.h.b16 %v2677
      %v2751 = vunpack.c.l.b16 %v2678
      %v2752 = vunpack.c.l.b16 %v2679
      %v2753 = vunpack.c.h.b16 %v2679
      %v2754 = vunpack.c.l.b16 %v2680
      %v2755 = vunpack.c.l.b16 %v2681
      %v2756 = vunpack.c.h.b16 %v2681
      %v2757 = vunpack.c.l.b16 %v2682
      %v2758 = vunpack.c.l.b16 %v2683
      %v2759 = vunpack.c.h.b16 %v2683
      %v2760 = vunpack.c.l.b16 %v2684
      %v2761 = vunpack.c.l.b16 %v2685
      %v2762 = vunpack.c.h.b16 %v2685
      %v2763 = vunpack.c.l.b16 %v2686
      %v2764 = vunpack.c.l.b16 %v2687
      %v2765 = vunpack.c.h.b16 %v2687
      %v2766 = vunpack.c.l.b16 %v2688
      %v2767 = vunpack.c.l.b16 %v2689
      %v2768 = vunpack.c.h.b16 %v2689
      %v2769 = vunpack.c.l.b16 %v2690
      %v2770 = vunpack.c.l.b16 %v2691
      %v2771 = vunpack.c.h.b16 %v2691
      %v2772 = vunpack.c.l.b16 %v2692
      %v2773 = vunpack.c.l.b16 %v2693
      %v2774 = vunpack.c.h.b16 %v2693
      %v2775 = vunpack.c.l.b16 %v2694
      %v2776 = vpack.c.b16 %v2731, %v2728
      %v2777 = vpack.c.b16 %v2732, %v2729
      %v2778 = vpack.c.b16 %v2733, %v2730
      %v2779 = vpack.c.b16 %v2737, %v2734
      %v2780 = vpack.c.b16 %v2738, %v2735
      %v2781 = vpack.c.b16 %v2739, %v2736
      %v2782 = vpack.c.b16 %v2743, %v2740
      %v2783 = vpack.c.b16 %v2744, %v2741
      %v2784 = vpack.c.b16 %v2745, %v2742
      %v2785 = vpack.c.b16 %v2749, %v2746
      %v2786 = vpack.c.b16 %v2750, %v2747
      %v2787 = vpack.c.b16 %v2751, %v2748
      %v2788 = vpack.c.b16 %v2755, %v2752
      %v2789 = vpack.c.b16 %v2756, %v2753
      %v2790 = vpack.c.b16 %v2757, %v2754
      %v2791 = vpack.c.b16 %v2761, %v2758
      %v2792 = vpack.c.b16 %v2762, %v2759
      %v2793 = vpack.c.b16 %v2763, %v2760
      %v2794 = vpack.c.b16 %v2767, %v2764
      %v2795 = vpack.c.b16 %v2768, %v2765
      %v2796 = vpack.c.b16 %v2769, %v2766
      %v2797 = vpack.c.b16 %v2773, %v2770
      %v2798 = vpack.c.b16 %v2774, %v2771
      %v2799 = vpack.c.b16 %v2775, %v2772
      %2824 = vmatprep.subr.bf16.mxu0 %v2777
      %2825 = vmatpush1.bf16.msra.mxu0 %v2776
      %2826 = vmatprep.subr.bf16.mxu0 %v2780
      %2827 = vmatpush1.bf16.msra.mxu0 %v2779
      %2828 = vmatprep.subr.bf16.mxu0 %v2783
      %2829 = vmatpush1.bf16.msra.mxu0 %v2782
      %2830 = vmatprep.subr.bf16.mxu0 %v2786
      %2831 = vmatpush1.bf16.msra.mxu0 %v2785
      %2832 = vmatprep.subr.bf16.mxu0 %v2789
      %2833 = vmatpush1.bf16.msra.mxu0 %v2788
      %2834 = vmatprep.subr.bf16.mxu0 %v2792
      %2835 = vmatpush1.bf16.msra.mxu0 %v2791
      %2836 = vmatprep.subr.bf16.mxu0 %v2795
      %2837 = vmatpush1.bf16.msra.mxu0 %v2794
      %2838 = vmatprep.subr.bf16.mxu0 %v2798
      %2839 = vmatpush1.bf16.msra.mxu0 %v2797
      %2840 = vmatprep.subr.bf16.mxu0 0
      %2841 = vmatpush1.bf16.msra.mxu0 0
      %2842 = vmatprep.subr.bf16.mxu0 0
      %2843 = vmatpush1.bf16.msra.mxu0 0
      %2844 = vmatprep.subr.bf16.mxu0 0
      %2845 = vmatpush1.bf16.msra.mxu0 0
      %2846 = vmatprep.subr.bf16.mxu0 0
      %2847 = vmatpush1.bf16.msra.mxu0 0
      %2848 = vmatprep.subr.bf16.mxu0 0
      %2849 = vmatpush1.bf16.msra.mxu0 0
      %2850 = vmatprep.subr.bf16.mxu0 0
      %2851 = vmatpush1.bf16.msra.mxu0 0
      %2852 = vmatprep.subr.bf16.mxu0 0
      %2853 = vmatpush1.bf16.msra.mxu0 0
      %2854 = vmatprep.subr.bf16.mxu0 0
      %2855 = vmatpush1.bf16.msra.mxu0 0
      %2856 = vmatprep.mubr.bf16.mxu0 0
      %2857 = vmatmul.mubr.bf16.gmra.mrb[0].mxu0 %v2695
      %v2858 = vpop.f32.mrb[0].mxu0
      %v2859 = vadd.f32 0.0, %v2858
      %v2860 = vpop.f32.mrb[0].mxu0
      %v2861 = vadd.f32 0.0, %v2860
      %v2862 = vpop.f32.mrb[0].mxu0
      %v2863 = vpop.f32.mrb[0].mxu0
      %2864 = vdwg.mxu0
      %2865 = vmatprep.subr.bf16.mxu0 0
      %2866 = vmatpush1.bf16.msra.mxu0 %v2778
      %2867 = vmatprep.subr.bf16.mxu0 0
      %2868 = vmatpush1.bf16.msra.mxu0 %v2781
      %2869 = vmatprep.subr.bf16.mxu0 0
      %2870 = vmatpush1.bf16.msra.mxu0 %v2784
      %2871 = vmatprep.subr.bf16.mxu0 0
      %2872 = vmatpush1.bf16.msra.mxu0 %v2787
      %2873 = vmatprep.subr.bf16.mxu0 0
      %2874 = vmatpush1.bf16.msra.mxu0 %v2790
      %2875 = vmatprep.subr.bf16.mxu0 0
      %2876 = vmatpush1.bf16.msra.mxu0 %v2793
      %2877 = vmatprep.subr.bf16.mxu0 0
      %2878 = vmatpush1.bf16.msra.mxu0 %v2796
      %2879 = vmatprep.subr.bf16.mxu0 0
      %2880 = vmatpush1.bf16.msra.mxu0 %v2799
      %2881 = vmatprep.subr.bf16.mxu0 0
      %2882 = vmatpush1.bf16.msra.mxu0 0
      %2883 = vmatprep.subr.bf16.mxu0 0
      %2884 = vmatpush1.bf16.msra.mxu0 0
      %2885 = vmatprep.subr.bf16.mxu0 0
      %2886 = vmatpush1.bf16.msra.mxu0 0
      %2887 = vmatprep.subr.bf16.mxu0 0
      %2888 = vmatpush1.bf16.msra.mxu0 0
      %2889 = vmatprep.subr.bf16.mxu0 0
      %2890 = vmatpush1.bf16.msra.mxu0 0
      %2891 = vmatprep.subr.bf16.mxu0 0
      %2892 = vmatpush1.bf16.msra.mxu0 0
      %2893 = vmatprep.subr.bf16.mxu0 0
      %2894 = vmatpush1.bf16.msra.mxu0 0
      %2895 = vmatprep.subr.bf16.mxu0 0
      %2896 = vmatpush1.bf16.msra.mxu0 0
      %2897 = vmatprep.mubr.bf16.mxu0 0
      %2898 = vmatmul.mubr.bf16.gmra.mrb[0].mxu0 %v2695
      %v2899 = vpop.f32.mrb[0].mxu0
      %v2900 = vadd.f32 0.0, %v2899
      %v2901 = vpop.f32.mrb[0].mxu0
      %v2902 = vpop.f32.mrb[0].mxu0
      %v2903 = vpop.f32.mrb[0].mxu0
      %2904 = vdwg.mxu0
      %v2905 = vmul.f32 %v2859, 0.17677669
      %v2906 = vpack.c.bf16 %v2905, %v2905
      %v2907 = vpack.c.bf16 %v2861, %v2861
      %v2908 = vpack.c.bf16 %v2900, %v2900
      %v2910 = vsel %vm1696, %v2906, 0
      %v2913 = vsel %vm1696, %v2907, 0
      %2915 = vmatprep.subr.bf16.mxu0 0
      %2916 = vmatpush1.bf16.xpose.msra.mxu0 %v2913
      %2917 = vmatprep.subr.bf16.mxu0 0
      %2918 = vmatpush1.bf16.xpose.msra.mxu0 0
      %2919 = vmatprep.subr.bf16.mxu0 0
      %2920 = vmatpush1.bf16.xpose.msra.mxu0 0
      %2921 = vmatprep.subr.bf16.mxu0 0
      %2922 = vmatpush1.bf16.xpose.msra.mxu0 0
      %2923 = vmatprep.subr.bf16.mxu0 0
      %2924 = vmatpush1.bf16.xpose.msra.mxu0 0
      %2925 = vmatprep.subr.bf16.mxu0 0
      %2926 = vmatpush1.bf16.xpose.msra.mxu0 0
      %2927 = vmatprep.subr.bf16.mxu0 0
      %2928 = vmatpush1.bf16.xpose.msra.mxu0 0
      %2929 = vmatprep.subr.bf16.mxu0 0
      %2930 = vmatpush1.bf16.xpose.msra.mxu0 0
      %2931 = vmatprep.subr.bf16.mxu0 0
      %2932 = vmatpush1.bf16.xpose.msra.mxu0 0
      %2933 = vmatprep.subr.bf16.mxu0 0
      %2934 = vmatpush1.bf16.xpose.msra.mxu0 0
      %2935 = vmatprep.subr.bf16.mxu0 0
      %2936 = vmatpush1.bf16.xpose.msra.mxu0 0
      %2937 = vmatprep.subr.bf16.mxu0 0
      %2938 = vmatpush1.bf16.xpose.msra.mxu0 0
      %2939 = vmatprep.subr.bf16.mxu0 0
      %2940 = vmatpush1.bf16.xpose.msra.mxu0 0
      %2941 = vmatprep.subr.bf16.mxu0 0
      %2942 = vmatpush1.bf16.xpose.msra.mxu0 0
      %2943 = vmatprep.subr.bf16.mxu0 0
      %2944 = vmatpush1.bf16.xpose.msra.mxu0 0
      %2945 = vmatprep.subr.bf16.mxu0 0
      %2946 = vmatpush1.bf16.xpose.msra.mxu0 0
      %2947 = vmatprep.mubr.bf16.mxu0 0
      %2948 = vmatmul.mubr.bf16.gmra.mrb[0].mxu0 %v2910
      %v2949 = vpop.f32.mrb[0].mxu0
      %v2950 = vadd.f32 %v1422, %v2949
      %v2951 = vpop.f32.mrb[0].mxu0
      %v2952 = vpop.f32.mrb[0].mxu0
      %v2953 = vpop.f32.mrb[0].mxu0
      %2954 = vdwg.mxu0
      %v2955 = vsel %vm1743, %v2950, -inf
      %2956 = vmax.xlane.f32.xlu0 %v2955
      %v2957 = vpop.xlane.xlu0 %2956
      %v2958 = vsub.f32 %v2950, %v2957
      %v2959 = vmul.f32 %v2958, 1.442695
      %v2960 = vpow.pop %v2959
      %v2961 = vsel %vm1743, %v2960, 0.0
      %2962 = vadd.xlane.f32.xlu0 %v2961
      %v2963 = vpop.xlane.xlu0 %2962
      %v2964 = vrcp.pop %v2963
      %v2965 = vmul.f32 %v2960, %v2964
      %v2966 = vpack.c.bf16 %v2965, %v2965
      %v2968 = vsel %vm1743, %v2966, 0
      %v2971 = vsel %vm722, %v2908, 0
      %2973 = vmatprep.subr.bf16.mxu0 0
      %2974 = vmatpush1.bf16.msra.mxu0 %v2971
      %2975 = vmatprep.subr.bf16.mxu0 0
      %2976 = vmatpush1.bf16.msra.mxu0 0
      %2977 = vmatprep.subr.bf16.mxu0 0
      %2978 = vmatpush1.bf16.msra.mxu0 0
      %2979 = vmatprep.subr.bf16.mxu0 0
      %2980 = vmatpush1.bf16.msra.mxu0 0
      %2981 = vmatprep.subr.bf16.mxu0 0
      %2982 = vmatpush1.bf16.msra.mxu0 0
      %2983 = vmatprep.subr.bf16.mxu0 0
      %2984 = vmatpush1.bf16.msra.mxu0 0
      %2985 = vmatprep.subr.bf16.mxu0 0
      %2986 = vmatpush1.bf16.msra.mxu0 0
      %2987 = vmatprep.subr.bf16.mxu0 0
      %2988 = vmatpush1.bf16.msra.mxu0 0
      %2989 = vmatprep.subr.bf16.mxu0 0
      %2990 = vmatpush1.bf16.msra.mxu0 0
      %2991 = vmatprep.subr.bf16.mxu0 0
      %2992 = vmatpush1.bf16.msra.mxu0 0
      %2993 = vmatprep.subr.bf16.mxu0 0
      %2994 = vmatpush1.bf16.msra.mxu0 0
      %2995 = vmatprep.subr.bf16.mxu0 0
      %2996 = vmatpush1.bf16.msra.mxu0 0
      %2997 = vmatprep.subr.bf16.mxu0 0
      %2998 = vmatpush1.bf16.msra.mxu0 0
      %2999 = vmatprep.subr.bf16.mxu0 0
      %3000 = vmatpush1.bf16.msra.mxu0 0
      %3001 = vmatprep.subr.bf16.mxu0 0
      %3002 = vmatpush1.bf16.msra.mxu0 0
      %3003 = vmatprep.subr.bf16.mxu0 0
      %3004 = vmatpush1.bf16.msra.mxu0 0
      %3005 = vmatprep.mubr.bf16.mxu0 0
      %3006 = vmatmul.mubr.bf16.gmra.mrb[0].mxu0 %v2968
      %v3007 = vpop.f32.mrb[0].mxu0
      %v3008 = vadd.f32 0.0, %v3007
      %v3009 = vpop.f32.mrb[0].mxu0
      %v3010 = vpop.f32.mrb[0].mxu0
      %v3011 = vpop.f32.mrb[0].mxu0
      %3012 = vdwg.mxu0
      %3013 = vst.msk [vmem:[#allocation3] sm:$0xff] %vm1696, %v3008
      %3015 = vrot.lane.b32.xlu0 %v2906, 96
      %v3016 = vpop.permute.xlu0 %3015
      %3018 = vrot.lane.b32.xlu0 %v2907, 96
      %v3019 = vpop.permute.xlu0 %3018
      %v3021 = vsel %vm1696, %v3016, 0
      %v3024 = vsel %vm1696, %v3019, 0
      %3026 = vmatprep.subr.bf16.mxu0 0
      %3027 = vmatpush1.bf16.xpose.msra.mxu0 %v3024
      %3028 = vmatprep.subr.bf16.mxu0 0
      %3029 = vmatpush1.bf16.xpose.msra.mxu0 0
      %3030 = vmatprep.subr.bf16.mxu0 0
      %3031 = vmatpush1.bf16.xpose.msra.mxu0 0
      %3032 = vmatprep.subr.bf16.mxu0 0
      %3033 = vmatpush1.bf16.xpose.msra.mxu0 0
      %3034 = vmatprep.subr.bf16.mxu0 0
      %3035 = vmatpush1.bf16.xpose.msra.mxu0 0
      %3036 = vmatprep.subr.bf16.mxu0 0
      %3037 = vmatpush1.bf16.xpose.msra.mxu0 0
      %3038 = vmatprep.subr.bf16.mxu0 0
      %3039 = vmatpush1.bf16.xpose.msra.mxu0 0
      %3040 = vmatprep.subr.bf16.mxu0 0
      %3041 = vmatpush1.bf16.xpose.msra.mxu0 0
      %3042 = vmatprep.subr.bf16.mxu0 0
      %3043 = vmatpush1.bf16.xpose.msra.mxu0 0
      %3044 = vmatprep.subr.bf16.mxu0 0
      %3045 = vmatpush1.bf16.xpose.msra.mxu0 0
      %3046 = vmatprep.subr.bf16.mxu0 0
      %3047 = vmatpush1.bf16.xpose.msra.mxu0 0
      %3048 = vmatprep.subr.bf16.mxu0 0
      %3049 = vmatpush1.bf16.xpose.msra.mxu0 0
      %3050 = vmatprep.subr.bf16.mxu0 0
      %3051 = vmatpush1.bf16.xpose.msra.mxu0 0
      %3052 = vmatprep.subr.bf16.mxu0 0
      %3053 = vmatpush1.bf16.xpose.msra.mxu0 0
      %3054 = vmatprep.subr.bf16.mxu0 0
      %3055 = vmatpush1.bf16.xpose.msra.mxu0 0
      %3056 = vmatprep.subr.bf16.mxu0 0
      %3057 = vmatpush1.bf16.xpose.msra.mxu0 0
      %3058 = vmatprep.mubr.bf16.mxu0 0
      %3059 = vmatmul.mubr.bf16.gmra.mrb[0].mxu0 %v3021
      %v3060 = vpop.f32.mrb[0].mxu0
      %v3061 = vadd.f32 %v1422, %v3060
      %v3062 = vpop.f32.mrb[0].mxu0
      %v3063 = vpop.f32.mrb[0].mxu0
      %v3064 = vpop.f32.mrb[0].mxu0
      %3065 = vdwg.mxu0
      %v3066 = vsel %vm1743, %v3061, -inf
      %3067 = vmax.xlane.f32.xlu0 %v3066
      %v3068 = vpop.xlane.xlu0 %3067
      %v3069 = vsub.f32 %v3061, %v3068
      %v3070 = vmul.f32 %v3069, 1.442695
      %v3071 = vpow.pop %v3070
      %v3072 = vsel %vm1743, %v3071, 0.0
      %3073 = vadd.xlane.f32.xlu0 %v3072
      %v3074 = vpop.xlane.xlu0 %3073
      %v3075 = vrcp.pop %v3074
      %v3076 = vmul.f32 %v3071, %v3075
      %v3077 = vpack.c.bf16 %v3076, %v3076
      %3079 = vrot.lane.b32.xlu0 %v2908, 96
      %v3080 = vpop.permute.xlu0 %3079
      %v3082 = vsel %vm1743, %v3077, 0
      %v3085 = vsel %vm722, %v3080, 0
      %3087 = vmatprep.subr.bf16.mxu0 0
      %3088 = vmatpush1.bf16.msra.mxu0 %v3085
      %3089 = vmatprep.subr.bf16.mxu0 0
      %3090 = vmatpush1.bf16.msra.mxu0 0
      %3091 = vmatprep.subr.bf16.mxu0 0
      %3092 = vmatpush1.bf16.msra.mxu0 0
      %3093 = vmatprep.subr.bf16.mxu0 0
      %3094 = vmatpush1.bf16.msra.mxu0 0
      %3095 = vmatprep.subr.bf16.mxu0 0
      %3096 = vmatpush1.bf16.msra.mxu0 0
      %3097 = vmatprep.subr.bf16.mxu0 0
      %3098 = vmatpush1.bf16.msra.mxu0 0
      %3099 = vmatprep.subr.bf16.mxu0 0
      %3100 = vmatpush1.bf16.msra.mxu0 0
      %3101 = vmatprep.subr.bf16.mxu0 0
      %3102 = vmatpush1.bf16.msra.mxu0 0
      %3103 = vmatprep.subr.bf16.mxu0 0
      %3104 = vmatpush1.bf16.msra.mxu0 0
      %3105 = vmatprep.subr.bf16.mxu0 0
      %3106 = vmatpush1.bf16.msra.mxu0 0
      %3107 = vmatprep.subr.bf16.mxu0 0
      %3108 = vmatpush1.bf16.msra.mxu0 0
      %3109 = vmatprep.subr.bf16.mxu0 0
      %3110 = vmatpush1.bf16.msra.mxu0 0
      %3111 = vmatprep.subr.bf16.mxu0 0
      %3112 = vmatpush1.bf16.msra.mxu0 0
      %3113 = vmatprep.subr.bf16.mxu0 0
      %3114 = vmatpush1.bf16.msra.mxu0 0
      %3115 = vmatprep.subr.bf16.mxu0 0
      %3116 = vmatpush1.bf16.msra.mxu0 0
      %3117 = vmatprep.subr.bf16.mxu0 0
      %3118 = vmatpush1.bf16.msra.mxu0 0
      %3119 = vmatprep.mubr.bf16.mxu0 0
      %3120 = vmatmul.mubr.bf16.gmra.mrb[0].mxu0 %v3082
      %v3121 = vpop.f32.mrb[0].mxu0
      %v3122 = vadd.f32 0.0, %v3121
      %v3123 = vpop.f32.mrb[0].mxu0
      %v3124 = vpop.f32.mrb[0].mxu0
      %v3125 = vpop.f32.mrb[0].mxu0
      %3126 = vdwg.mxu0
      %3128 = vrot.lane.b32.xlu0 %v3122, 32
      %v3129 = vpop.permute.xlu0 %3128
      %3131 = vst.msk [vmem:[#allocation3] sm:$0xff] %vm1920, %v3129
      %3132 = vrot.lane.b32.xlu0 %v2906, 64
      %v3133 = vpop.permute.xlu0 %3132
      %3134 = vrot.lane.b32.xlu0 %v2907, 64
      %v3135 = vpop.permute.xlu0 %3134
      %v3137 = vsel %vm1696, %v3133, 0
      %v3140 = vsel %vm1696, %v3135, 0
      %3142 = vmatprep.subr.bf16.mxu0 0
      %3143 = vmatpush1.bf16.xpose.msra.mxu0 %v3140
      %3144 = vmatprep.subr.bf16.mxu0 0
      %3145 = vmatpush1.bf16.xpose.msra.mxu0 0
      %3146 = vmatprep.subr.bf16.mxu0 0
      %3147 = vmatpush1.bf16.xpose.msra.mxu0 0
      %3148 = vmatprep.subr.bf16.mxu0 0
      %3149 = vmatpush1.bf16.xpose.msra.mxu0 0
      %3150 = vmatprep.subr.bf16.mxu0 0
      %3151 = vmatpush1.bf16.xpose.msra.mxu0 0
      %3152 = vmatprep.subr.bf16.mxu0 0
      %3153 = vmatpush1.bf16.xpose.msra.mxu0 0
      %3154 = vmatprep.subr.bf16.mxu0 0
      %3155 = vmatpush1.bf16.xpose.msra.mxu0 0
      %3156 = vmatprep.subr.bf16.mxu0 0
      %3157 = vmatpush1.bf16.xpose.msra.mxu0 0
      %3158 = vmatprep.subr.bf16.mxu0 0
      %3159 = vmatpush1.bf16.xpose.msra.mxu0 0
      %3160 = vmatprep.subr.bf16.mxu0 0
      %3161 = vmatpush1.bf16.xpose.msra.mxu0 0
      %3162 = vmatprep.subr.bf16.mxu0 0
      %3163 = vmatpush1.bf16.xpose.msra.mxu0 0
      %3164 = vmatprep.subr.bf16.mxu0 0
      %3165 = vmatpush1.bf16.xpose.msra.mxu0 0
      %3166 = vmatprep.subr.bf16.mxu0 0
      %3167 = vmatpush1.bf16.xpose.msra.mxu0 0
      %3168 = vmatprep.subr.bf16.mxu0 0
      %3169 = vmatpush1.bf16.xpose.msra.mxu0 0
      %3170 = vmatprep.subr.bf16.mxu0 0
      %3171 = vmatpush1.bf16.xpose.msra.mxu0 0
      %3172 = vmatprep.subr.bf16.mxu0 0
      %3173 = vmatpush1.bf16.xpose.msra.mxu0 0
      %3174 = vmatprep.mubr.bf16.mxu0 0
      %3175 = vmatmul.mubr.bf16.gmra.mrb[0].mxu0 %v3137
      %v3176 = vpop.f32.mrb[0].mxu0
      %v3177 = vadd.f32 %v1422, %v3176
      %v3178 = vpop.f32.mrb[0].mxu0
      %v3179 = vpop.f32.mrb[0].mxu0
      %v3180 = vpop.f32.mrb[0].mxu0
      %3181 = vdwg.mxu0
      %v3182 = vsel %vm1743, %v3177, -inf
      %3183 = vmax.xlane.f32.xlu0 %v3182
      %v3184 = vpop.xlane.xlu0 %3183
      %v3185 = vsub.f32 %v3177, %v3184
      %v3186 = vmul.f32 %v3185, 1.442695
      %v3187 = vpow.pop %v3186
      %v3188 = vsel %vm1743, %v3187, 0.0
      %3189 = vadd.xlane.f32.xlu0 %v3188
      %v3190 = vpop.xlane.xlu0 %3189
      %v3191 = vrcp.pop %v3190
      %v3192 = vmul.f32 %v3187, %v3191
      %v3193 = vpack.c.bf16 %v3192, %v3192
      %3194 = vrot.lane.b32.xlu0 %v2908, 64
      %v3195 = vpop.permute.xlu0 %3194
      %v3197 = vsel %vm1743, %v3193, 0
      %v3200 = vsel %vm722, %v3195, 0
      %3202 = vmatprep.subr.bf16.mxu0 0
      %3203 = vmatpush1.bf16.msra.mxu0 %v3200
      %3204 = vmatprep.subr.bf16.mxu0 0
      %3205 = vmatpush1.bf16.msra.mxu0 0
      %3206 = vmatprep.subr.bf16.mxu0 0
      %3207 = vmatpush1.bf16.msra.mxu0 0
      %3208 = vmatprep.subr.bf16.mxu0 0
      %3209 = vmatpush1.bf16.msra.mxu0 0
      %3210 = vmatprep.subr.bf16.mxu0 0
      %3211 = vmatpush1.bf16.msra.mxu0 0
      %3212 = vmatprep.subr.bf16.mxu0 0
      %3213 = vmatpush1.bf16.msra.mxu0 0
      %3214 = vmatprep.subr.bf16.mxu0 0
      %3215 = vmatpush1.bf16.msra.mxu0 0
      %3216 = vmatprep.subr.bf16.mxu0 0
      %3217 = vmatpush1.bf16.msra.mxu0 0
      %3218 = vmatprep.subr.bf16.mxu0 0
      %3219 = vmatpush1.bf16.msra.mxu0 0
      %3220 = vmatprep.subr.bf16.mxu0 0
      %3221 = vmatpush1.bf16.msra.mxu0 0
      %3222 = vmatprep.subr.bf16.mxu0 0
      %3223 = vmatpush1.bf16.msra.mxu0 0
      %3224 = vmatprep.subr.bf16.mxu0 0
      %3225 = vmatpush1.bf16.msra.mxu0 0
      %3226 = vmatprep.subr.bf16.mxu0 0
      %3227 = vmatpush1.bf16.msra.mxu0 0
      %3228 = vmatprep.subr.bf16.mxu0 0
      %3229 = vmatpush1.bf16.msra.mxu0 0
      %3230 = vmatprep.subr.bf16.mxu0 0
      %3231 = vmatpush1.bf16.msra.mxu0 0
      %3232 = vmatprep.subr.bf16.mxu0 0
      %3233 = vmatpush1.bf16.msra.mxu0 0
      %3234 = vmatprep.mubr.bf16.mxu0 0
      %3235 = vmatmul.mubr.bf16.gmra.mrb[0].mxu0 %v3197
      %v3236 = vpop.f32.mrb[0].mxu0
      %v3237 = vadd.f32 0.0, %v3236
      %v3238 = vpop.f32.mrb[0].mxu0
      %v3239 = vpop.f32.mrb[0].mxu0
      %v3240 = vpop.f32.mrb[0].mxu0
      %3241 = vdwg.mxu0
      %3243 = vrot.lane.b32.xlu0 %v3237, 64
      %v3244 = vpop.permute.xlu0 %3243
      %3246 = vst.msk [vmem:[#allocation3] sm:$0xff] %vm2036, %v3244
      %3247 = vrot.lane.b32.xlu0 %v2906, 32
      %v3248 = vpop.permute.xlu0 %3247
      %3249 = vrot.lane.b32.xlu0 %v2907, 32
      %v3250 = vpop.permute.xlu0 %3249
      %v3252 = vsel %vm1696, %v3248, 0
      %v3255 = vsel %vm1696, %v3250, 0
      %3257 = vmatprep.subr.bf16.mxu0 0
      %3258 = vmatpush1.bf16.xpose.msra.mxu0 %v3255
      %3259 = vmatprep.subr.bf16.mxu0 0
      %3260 = vmatpush1.bf16.xpose.msra.mxu0 0
      %3261 = vmatprep.subr.bf16.mxu0 0
      %3262 = vmatpush1.bf16.xpose.msra.mxu0 0
      %3263 = vmatprep.subr.bf16.mxu0 0
      %3264 = vmatpush1.bf16.xpose.msra.mxu0 0
      %3265 = vmatprep.subr.bf16.mxu0 0
      %3266 = vmatpush1.bf16.xpose.msra.mxu0 0
      %3267 = vmatprep.subr.bf16.mxu0 0
      %3268 = vmatpush1.bf16.xpose.msra.mxu0 0
      %3269 = vmatprep.subr.bf16.mxu0 0
      %3270 = vmatpush1.bf16.xpose.msra.mxu0 0
      %3271 = vmatprep.subr.bf16.mxu0 0
      %3272 = vmatpush1.bf16.xpose.msra.mxu0 0
      %3273 = vmatprep.subr.bf16.mxu0 0
      %3274 = vmatpush1.bf16.xpose.msra.mxu0 0
      %3275 = vmatprep.subr.bf16.mxu0 0
      %3276 = vmatpush1.bf16.xpose.msra.mxu0 0
      %3277 = vmatprep.subr.bf16.mxu0 0
      %3278 = vmatpush1.bf16.xpose.msra.mxu0 0
      %3279 = vmatprep.subr.bf16.mxu0 0
      %3280 = vmatpush1.bf16.xpose.msra.mxu0 0
      %3281 = vmatprep.subr.bf16.mxu0 0
      %3282 = vmatpush1.bf16.xpose.msra.mxu0 0
      %3283 = vmatprep.subr.bf16.mxu0 0
      %3284 = vmatpush1.bf16.xpose.msra.mxu0 0
      %3285 = vmatprep.subr.bf16.mxu0 0
      %3286 = vmatpush1.bf16.xpose.msra.mxu0 0
      %3287 = vmatprep.subr.bf16.mxu0 0
      %3288 = vmatpush1.bf16.xpose.msra.mxu0 0
      %3289 = vmatprep.mubr.bf16.mxu0 0
      %3290 = vmatmul.mubr.bf16.gmra.mrb[0].mxu0 %v3252
      %v3291 = vpop.f32.mrb[0].mxu0
      %v3292 = vadd.f32 %v1422, %v3291
      %v3293 = vpop.f32.mrb[0].mxu0
      %v3294 = vpop.f32.mrb[0].mxu0
      %v3295 = vpop.f32.mrb[0].mxu0
      %3296 = vdwg.mxu0
      %v3297 = vsel %vm1743, %v3292, -inf
      %3298 = vmax.xlane.f32.xlu0 %v3297
      %v3299 = vpop.xlane.xlu0 %3298
      %v3300 = vsub.f32 %v3292, %v3299
      %v3301 = vmul.f32 %v3300, 1.442695
      %v3302 = vpow.pop %v3301
      %v3303 = vsel %vm1743, %v3302, 0.0
      %3304 = vadd.xlane.f32.xlu0 %v3303
      %v3305 = vpop.xlane.xlu0 %3304
      %v3306 = vrcp.pop %v3305
      %v3307 = vmul.f32 %v3302, %v3306
      %v3308 = vpack.c.bf16 %v3307, %v3307
      %3309 = vrot.lane.b32.xlu0 %v2908, 32
      %v3310 = vpop.permute.xlu0 %3309
      %v3312 = vsel %vm1743, %v3308, 0
      %v3315 = vsel %vm722, %v3310, 0
      %3317 = vmatprep.subr.bf16.mxu0 0
      %3318 = vmatpush1.bf16.msra.mxu0 %v3315
      %3319 = vmatprep.subr.bf16.mxu0 0
      %3320 = vmatpush1.bf16.msra.mxu0 0
      %3321 = vmatprep.subr.bf16.mxu0 0
      %3322 = vmatpush1.bf16.msra.mxu0 0
      %3323 = vmatprep.subr.bf16.mxu0 0
      %3324 = vmatpush1.bf16.msra.mxu0 0
      %3325 = vmatprep.subr.bf16.mxu0 0
      %3326 = vmatpush1.bf16.msra.mxu0 0
      %3327 = vmatprep.subr.bf16.mxu0 0
      %3328 = vmatpush1.bf16.msra.mxu0 0
      %3329 = vmatprep.subr.bf16.mxu0 0
      %3330 = vmatpush1.bf16.msra.mxu0 0
      %3331 = vmatprep.subr.bf16.mxu0 0
      %3332 = vmatpush1.bf16.msra.mxu0 0
      %3333 = vmatprep.subr.bf16.mxu0 0
      %3334 = vmatpush1.bf16.msra.mxu0 0
      %3335 = vmatprep.subr.bf16.mxu0 0
      %3336 = vmatpush1.bf16.msra.mxu0 0
      %3337 = vmatprep.subr.bf16.mxu0 0
      %3338 = vmatpush1.bf16.msra.mxu0 0
      %3339 = vmatprep.subr.bf16.mxu0 0
      %3340 = vmatpush1.bf16.msra.mxu0 0
      %3341 = vmatprep.subr.bf16.mxu0 0
      %3342 = vmatpush1.bf16.msra.mxu0 0
      %3343 = vmatprep.subr.bf16.mxu0 0
      %3344 = vmatpush1.bf16.msra.mxu0 0
      %3345 = vmatprep.subr.bf16.mxu0 0
      %3346 = vmatpush1.bf16.msra.mxu0 0
      %3347 = vmatprep.subr.bf16.mxu0 0
      %3348 = vmatpush1.bf16.msra.mxu0 0
      %3349 = vmatprep.mubr.bf16.mxu0 0
      %3350 = vmatmul.mubr.bf16.gmra.mrb[0].mxu0 %v3312
      %v3351 = vpop.f32.mrb[0].mxu0
      %v3352 = vadd.f32 0.0, %v3351
      %v3353 = vpop.f32.mrb[0].mxu0
      %v3354 = vpop.f32.mrb[0].mxu0
      %v3355 = vpop.f32.mrb[0].mxu0
      %3356 = vdwg.mxu0
      %3358 = vrot.lane.b32.xlu0 %v3352, 96
      %v3359 = vpop.permute.xlu0 %3358
      %3361 = vst.msk [vmem:[#allocation3] sm:$0xff] %vm2152, %v3359
      %v3362 = vld [vmem:[#allocation3] sm:$0xff]
      %s3363 = scalar_lea.vmem %s11, 64
      %v3364 = vld [vmem:[%s3363] sm:$0xf]
      %v3365 = vld [vmem:[%s3363 + $0x4] sm:$0xf]
      %v3366 = vld [vmem:[%s3363 + $0x8] sm:$0xf]
      %v3367 = vld [vmem:[%s3363 + $0xc] sm:$0xf]
      %v3368 = vld [vmem:[%s3363 + $0x10] sm:$0xf]
      %v3369 = vld [vmem:[%s3363 + $0x14] sm:$0xf]
      %v3370 = vld [vmem:[%s3363 + $0x18] sm:$0xf]
      %v3371 = vld [vmem:[%s3363 + $0x1c] sm:$0xf]
      %v3372 = vld [vmem:[%s3363 + $0x20] sm:$0xf]
      %v3373 = vld [vmem:[%s3363 + $0x24] sm:$0xf]
      %v3374 = vld [vmem:[%s3363 + $0x28] sm:$0xf]
      %v3375 = vld [vmem:[%s3363 + $0x2c] sm:$0xf]
      %v3376 = vld [vmem:[%s3363 + $0x30] sm:$0xf]
      %v3377 = vld [vmem:[%s3363 + $0x34] sm:$0xf]
      %v3378 = vld [vmem:[%s3363 + $0x38] sm:$0xf]
      %v3379 = vld [vmem:[%s3363 + $0x3c] sm:$0xf]
      %v3380 = vpack.c.bf16 %v3362, %v3362
      %s3381 = scalar_lea.vmem %s12, 1
      %v3382 = vld [vmem:[%s3381] sm:$0x1]
      %v3384 = vlaneseq
      %v3385 = vshrl.u32 %v3384, 7
      %v3386 = vsub.s32 0, %v3385
      %v3387 = vrot.slane %v3382, %v3386
      %v3405 = vunpack.c.l.b16 %v3364
      %v3406 = vunpack.c.l.b16 %v3365
      %v3407 = vunpack.c.l.b16 %v3366
      %v3408 = vunpack.c.l.b16 %v3367
      %v3409 = vunpack.c.l.b16 %v3368
      %v3410 = vunpack.c.l.b16 %v3369
      %v3411 = vunpack.c.l.b16 %v3370
      %v3412 = vunpack.c.l.b16 %v3371
      %v3413 = vunpack.c.l.b16 %v3372
      %v3414 = vunpack.c.l.b16 %v3373
      %v3415 = vunpack.c.l.b16 %v3374
      %v3416 = vunpack.c.l.b16 %v3375
      %v3417 = vunpack.c.l.b16 %v3376
      %v3418 = vunpack.c.l.b16 %v3377
      %v3419 = vunpack.c.l.b16 %v3378
      %v3420 = vunpack.c.l.b16 %v3379
      %v3421 = vpack.c.b16 %v3406, %v3405
      %v3422 = vpack.c.b16 %v3408, %v3407
      %v3423 = vpack.c.b16 %v3410, %v3409
      %v3424 = vpack.c.b16 %v3412, %v3411
      %v3425 = vpack.c.b16 %v3414, %v3413
      %v3426 = vpack.c.b16 %v3416, %v3415
      %v3427 = vpack.c.b16 %v3418, %v3417
      %v3428 = vpack.c.b16 %v3420, %v3419
      %3437 = vmatprep.subr.bf16.mxu0 0
      %3438 = vmatpush1.bf16.msra.mxu0 %v3421
      %3439 = vmatprep.subr.bf16.mxu0 0
      %3440 = vmatpush1.bf16.msra.mxu0 %v3422
      %3441 = vmatprep.subr.bf16.mxu0 0
      %3442 = vmatpush1.bf16.msra.mxu0 %v3423
      %3443 = vmatprep.subr.bf16.mxu0 0
      %3444 = vmatpush1.bf16.msra.mxu0 %v3424
      %3445 = vmatprep.subr.bf16.mxu0 0
      %3446 = vmatpush1.bf16.msra.mxu0 %v3425
      %3447 = vmatprep.subr.bf16.mxu0 0
      %3448 = vmatpush1.bf16.msra.mxu0 %v3426
      %3449 = vmatprep.subr.bf16.mxu0 0
      %3450 = vmatpush1.bf16.msra.mxu0 %v3427
      %3451 = vmatprep.subr.bf16.mxu0 0
      %3452 = vmatpush1.bf16.msra.mxu0 %v3428
      %3453 = vmatprep.subr.bf16.mxu0 0
      %3454 = vmatpush1.bf16.msra.mxu0 0
      %3455 = vmatprep.subr.bf16.mxu0 0
      %3456 = vmatpush1.bf16.msra.mxu0 0
      %3457 = vmatprep.subr.bf16.mxu0 0
      %3458 = vmatpush1.bf16.msra.mxu0 0
      %3459 = vmatprep.subr.bf16.mxu0 0
      %3460 = vmatpush1.bf16.msra.mxu0 0
      %3461 = vmatprep.subr.bf16.mxu0 0
      %3462 = vmatpush1.bf16.msra.mxu0 0
      %3463 = vmatprep.subr.bf16.mxu0 0
      %3464 = vmatpush1.bf16.msra.mxu0 0
      %3465 = vmatprep.subr.bf16.mxu0 0
      %3466 = vmatpush1.bf16.msra.mxu0 0
      %3467 = vmatprep.subr.bf16.mxu0 0
      %3468 = vmatpush1.bf16.msra.mxu0 0
      %3469 = vmatprep.mubr.bf16.mxu0 0
      %3470 = vmatmul.mubr.bf16.gmra.mrb[0].mxu0 %v3380
      %v3471 = vpop.f32.mrb[0].mxu0
      %v3472 = vadd.f32 %v3387, %v3471
      %v3473 = vpop.f32.mrb[0].mxu0
      %v3474 = vpop.f32.mrb[0].mxu0
      %v3475 = vpop.f32.mrb[0].mxu0
      %3476 = vdwg.mxu0
      %v3477 = vadd.f32 %v3472, %v2632
      %s3478 = scalar_lea.vmem %s13, 1
      %v3479 = vld [vmem:[%s3478] sm:$0x1]
      %s3480 = scalar_lea.vmem %s14, 1
      %v3481 = vld [vmem:[%s3480] sm:$0x1]
      %3482 = vadd.xlane.f32.xlu0 %v3477
      %v3483 = vpop.xlane.xlu0 %3482
      %v3484 = vmul.f32 %v3483, %v1389
      %v3485 = vsub.f32 %v3477, %v3484
      %v3486 = vmul.f32 %v3485, %v3485
      %3487 = vadd.xlane.f32.xlu0 %v3486
      %v3488 = vpop.xlane.xlu0 %3487
      %v3489 = vmul.f32 %v3488, %v1389
      %v3490 = vadd.f32 %v3489, 1e-05
      %v3491 = vrsqrt.pop %v3490
      %v3492 = vmul.f32 %v3485, %v3491
      %v3494 = vlaneseq
      %v3495 = vshrl.u32 %v3494, 7
      %v3496 = vsub.s32 0, %v3495
      %v3497 = vrot.slane %v3479, %v3496
      %v3499 = vmul.f32 %v3492, %v3497
      %v3501 = vlaneseq
      %v3502 = vshrl.u32 %v3501, 7
      %v3503 = vsub.s32 0, %v3502
      %v3504 = vrot.slane %v3481, %v3503
      %v3506 = vadd.f32 %v3499, %v3504
      %s3507 = scalar_lea.vmem %s15, 128
      %v3508 = vld [vmem:[%s3507] sm:$0xff]
      %v3509 = vld [vmem:[%s3507 + $0x8] sm:$0xff]
      %v3510 = vld [vmem:[%s3507 + $0x10] sm:$0xff]
      %v3511 = vld [vmem:[%s3507 + $0x18] sm:$0xff]
      %v3512 = vld [vmem:[%s3507 + $0x20] sm:$0xff]
      %v3513 = vld [vmem:[%s3507 + $0x28] sm:$0xff]
      %v3514 = vld [vmem:[%s3507 + $0x30] sm:$0xff]
      %v3515 = vld [vmem:[%s3507 + $0x38] sm:$0xff]
      %v3516 = vld [vmem:[%s3507 + $0x40] sm:$0xff]
      %v3517 = vld [vmem:[%s3507 + $0x48] sm:$0xff]
      %v3518 = vld [vmem:[%s3507 + $0x50] sm:$0xff]
      %v3519 = vld [vmem:[%s3507 + $0x58] sm:$0xff]
      %v3520 = vld [vmem:[%s3507 + $0x60] sm:$0xff]
      %v3521 = vld [vmem:[%s3507 + $0x68] sm:$0xff]
      %v3522 = vld [vmem:[%s3507 + $0x70] sm:$0xff]
      %v3523 = vld [vmem:[%s3507 + $0x78] sm:$0xff]
      %v3524 = vpack.c.bf16 %v3506, %v3506
      %s3525 = scalar_lea.vmem %s16, 2
      %v3526 = vld [vmem:[%s3525] sm:$0x3]
      %v3528 = vlaneseq
      %v3529 = vshrl.u32 %v3528, 7
      %v3530 = vsub.s32 0, %v3529
      %v3531 = vrot.slane %v3526, %v3530
      %v3532 = vlaneseq
      %v3533 = vshrl.u32 %v3532, 7
      %v3534 = vsub.s32 1, %v3533
      %v3535 = vrot.slane %v3526, %v3534
      %v3554 = vunpack.c.l.b16 %v3508
      %v3555 = vunpack.c.h.b16 %v3508
      %v3556 = vunpack.c.l.b16 %v3509
      %v3557 = vunpack.c.h.b16 %v3509
      %v3558 = vunpack.c.l.b16 %v3510
      %v3559 = vunpack.c.h.b16 %v3510
      %v3560 = vunpack.c.l.b16 %v3511
      %v3561 = vunpack.c.h.b16 %v3511
      %v3562 = vunpack.c.l.b16 %v3512
      %v3563 = vunpack.c.h.b16 %v3512
      %v3564 = vunpack.c.l.b16 %v3513
      %v3565 = vunpack.c.h.b16 %v3513
      %v3566 = vunpack.c.l.b16 %v3514
      %v3567 = vunpack.c.h.b16 %v3514
      %v3568 = vunpack.c.l.b16 %v3515
      %v3569 = vunpack.c.h.b16 %v3515
      %v3570 = vunpack.c.l.b16 %v3516
      %v3571 = vunpack.c.h.b16 %v3516
      %v3572 = vunpack.c.l.b16 %v3517
      %v3573 = vunpack.c.h.b16 %v3517
      %v3574 = vunpack.c.l.b16 %v3518
      %v3575 = vunpack.c.h.b16 %v3518
      %v3576 = vunpack.c.l.b16 %v3519
      %v3577 = vunpack.c.h.b16 %v3519
      %v3578 = vunpack.c.l.b16 %v3520
      %v3579 = vunpack.c.h.b16 %v3520
      %v3580 = vunpack.c.l.b16 %v3521
      %v3581 = vunpack.c.h.b16 %v3521
      %v3582 = vunpack.c.l.b16 %v3522
      %v3583 = vunpack.c.h.b16 %v3522
      %v3584 = vunpack.c.l.b16 %v3523
      %v3585 = vunpack.c.h.b16 %v3523
      %v3586 = vpack.c.b16 %v3556, %v3554
      %v3587 = vpack.c.b16 %v3557, %v3555
      %v3588 = vpack.c.b16 %v3560, %v3558
      %v3589 = vpack.c.b16 %v3561, %v3559
      %v3590 = vpack.c.b16 %v3564, %v3562
      %v3591 = vpack.c.b16 %v3565, %v3563
      %v3592 = vpack.c.b16 %v3568, %v3566
      %v3593 = vpack.c.b16 %v3569, %v3567
      %v3594 = vpack.c.b16 %v3572, %v3570
      %v3595 = vpack.c.b16 %v3573, %v3571
      %v3596 = vpack.c.b16 %v3576, %v3574
      %v3597 = vpack.c.b16 %v3577, %v3575
      %v3598 = vpack.c.b16 %v3580, %v3578
      %v3599 = vpack.c.b16 %v3581, %v3579
      %v3600 = vpack.c.b16 %v3584, %v3582
      %v3601 = vpack.c.b16 %v3585, %v3583
      %3618 = vmatprep.subr.bf16.mxu0 %v3587
      %3619 = vmatpush1.bf16.msra.mxu0 %v3586
      %3620 = vmatprep.subr.bf16.mxu0 %v3589
      %3621 = vmatpush1.bf16.msra.mxu0 %v3588
      %3622 = vmatprep.subr.bf16.mxu0 %v3591
      %3623 = vmatpush1.bf16.msra.mxu0 %v3590
      %3624 = vmatprep.subr.bf16.mxu0 %v3593
      %3625 = vmatpush1.bf16.msra.mxu0 %v3592
      %3626 = vmatprep.subr.bf16.mxu0 %v3595
      %3627 = vmatpush1.bf16.msra.mxu0 %v3594
      %3628 = vmatprep.subr.bf16.mxu0 %v3597
      %3629 = vmatpush1.bf16.msra.mxu0 %v3596
      %3630 = vmatprep.subr.bf16.mxu0 %v3599
      %3631 = vmatpush1.bf16.msra.mxu0 %v3598
      %3632 = vmatprep.subr.bf16.mxu0 %v3601
      %3633 = vmatpush1.bf16.msra.mxu0 %v3600
      %3634 = vmatprep.subr.bf16.mxu0 0
      %3635 = vmatpush1.bf16.msra.mxu0 0
      %3636 = vmatprep.subr.bf16.mxu0 0
      %3637 = vmatpush1.bf16.msra.mxu0 0
      %3638 = vmatprep.subr.bf16.mxu0 0
      %3639 = vmatpush1.bf16.msra.mxu0 0
      %3640 = vmatprep.subr.bf16.mxu0 0
      %3641 = vmatpush1.bf16.msra.mxu0 0
      %3642 = vmatprep.subr.bf16.mxu0 0
      %3643 = vmatpush1.bf16.msra.mxu0 0
      %3644 = vmatprep.subr.bf16.mxu0 0
      %3645 = vmatpush1.bf16.msra.mxu0 0
      %3646 = vmatprep.subr.bf16.mxu0 0
      %3647 = vmatpush1.bf16.msra.mxu0 0
      %3648 = vmatprep.subr.bf16.mxu0 0
      %3649 = vmatpush1.bf16.msra.mxu0 0
      %3650 = vmatprep.mubr.bf16.mxu0 0
      %3651 = vmatmul.mubr.bf16.gmra.mrb[0].mxu0 %v3524
      %v3652 = vpop.f32.mrb[0].mxu0
      %v3653 = vadd.f32 %v3531, %v3652
      %v3654 = vpop.f32.mrb[0].mxu0
      %v3655 = vadd.f32 %v3535, %v3654
      %v3656 = vpop.f32.mrb[0].mxu0
      %v3657 = vpop.f32.mrb[0].mxu0
      %3658 = vdwg.mxu0
      %v3659 = vmul.f32 %v3653, 0.5
      %v3660 = vmul.f32 %v3655, 0.5
      %v3661 = vmul.f32 %v3653, 0.70710677
      %v3662 = vmul.f32 %v3655, 0.70710677
      %v3663 = verf.f32.pop %v3661
      %v3664 = verf.f32.pop %v3662
      %v3665 = vadd.f32 %v3663, 1.0
      %v3666 = vadd.f32 %v3664, 1.0
      %v3667 = vmul.f32 %v3659, %v3665
      %v3668 = vmul.f32 %v3660, %v3666
      %s3669 = scalar_lea.vmem %s17, 128
      %v3670 = vld [vmem:[%s3669] sm:$0xf]
      %v3671 = vld [vmem:[%s3669 + $0x4] sm:$0xf]
      %v3672 = vld [vmem:[%s3669 + $0x8] sm:$0xf]
      %v3673 = vld [vmem:[%s3669 + $0xc] sm:$0xf]
      %v3674 = vld [vmem:[%s3669 + $0x10] sm:$0xf]
      %v3675 = vld [vmem:[%s3669 + $0x14] sm:$0xf]
      %v3676 = vld [vmem:[%s3669 + $0x18] sm:$0xf]
      %v3677 = vld [vmem:[%s3669 + $0x1c] sm:$0xf]
      %v3678 = vld [vmem:[%s3669 + $0x20] sm:$0xf]
      %v3679 = vld [vmem:[%s3669 + $0x24] sm:$0xf]
      %v3680 = vld [vmem:[%s3669 + $0x28] sm:$0xf]
      %v3681 = vld [vmem:[%s3669 + $0x2c] sm:$0xf]
      %v3682 = vld [vmem:[%s3669 + $0x30] sm:$0xf]
      %v3683 = vld [vmem:[%s3669 + $0x34] sm:$0xf]
      %v3684 = vld [vmem:[%s3669 + $0x38] sm:$0xf]
      %v3685 = vld [vmem:[%s3669 + $0x3c] sm:$0xf]
      %v3686 = vld [vmem:[%s3669 + $0x40] sm:$0xf]
      %v3687 = vld [vmem:[%s3669 + $0x44] sm:$0xf]
      %v3688 = vld [vmem:[%s3669 + $0x48] sm:$0xf]
      %v3689 = vld [vmem:[%s3669 + $0x4c] sm:$0xf]
      %v3690 = vld [vmem:[%s3669 + $0x50] sm:$0xf]
      %v3691 = vld [vmem:[%s3669 + $0x54] sm:$0xf]
      %v3692 = vld [vmem:[%s3669 + $0x58] sm:$0xf]
      %v3693 = vld [vmem:[%s3669 + $0x5c] sm:$0xf]
      %v3694 = vld [vmem:[%s3669 + $0x60] sm:$0xf]
      %v3695 = vld [vmem:[%s3669 + $0x64] sm:$0xf]
      %v3696 = vld [vmem:[%s3669 + $0x68] sm:$0xf]
      %v3697 = vld [vmem:[%s3669 + $0x6c] sm:$0xf]
      %v3698 = vld [vmem:[%s3669 + $0x70] sm:$0xf]
      %v3699 = vld [vmem:[%s3669 + $0x74] sm:$0xf]
      %v3700 = vld [vmem:[%s3669 + $0x78] sm:$0xf]
      %v3701 = vld [vmem:[%s3669 + $0x7c] sm:$0xf]
      %v3702 = vpack.c.bf16 %v3667, %v3667
      %v3703 = vpack.c.bf16 %v3668, %v3668
      %s3704 = scalar_lea.vmem %s18, 1
      %v3705 = vld [vmem:[%s3704] sm:$0x1]
      %v3707 = vlaneseq
      %v3708 = vshrl.u32 %v3707, 7
      %v3709 = vsub.s32 0, %v3708
      %v3710 = vrot.slane %v3705, %v3709
      %v3744 = vunpack.c.l.b16 %v3670
      %v3745 = vunpack.c.l.b16 %v3671
      %v3746 = vunpack.c.l.b16 %v3672
      %v3747 = vunpack.c.l.b16 %v3673
      %v3748 = vunpack.c.l.b16 %v3674
      %v3749 = vunpack.c.l.b16 %v3675
      %v3750 = vunpack.c.l.b16 %v3676
      %v3751 = vunpack.c.l.b16 %v3677
      %v3752 = vunpack.c.l.b16 %v3678
      %v3753 = vunpack.c.l.b16 %v3679
      %v3754 = vunpack.c.l.b16 %v3680
      %v3755 = vunpack.c.l.b16 %v3681
      %v3756 = vunpack.c.l.b16 %v3682
      %v3757 = vunpack.c.l.b16 %v3683
      %v3758 = vunpack.c.l.b16 %v3684
      %v3759 = vunpack.c.l.b16 %v3685
      %v3760 = vunpack.c.l.b16 %v3686
      %v3761 = vunpack.c.l.b16 %v3687
      %v3762 = vunpack.c.l.b16 %v3688
      %v3763 = vunpack.c.l.b16 %v3689
      %v3764 = vunpack.c.l.b16 %v3690
      %v3765 = vunpack.c.l.b16 %v3691
      %v3766 = vunpack.c.l.b16 %v3692
      %v3767 = vunpack.c.l.b16 %v3693
      %v3768 = vunpack.c.l.b16 %v3694
      %v3769 = vunpack.c.l.b16 %v3695
      %v3770 = vunpack.c.l.b16 %v3696
      %v3771 = vunpack.c.l.b16 %v3697
      %v3772 = vunpack.c.l.b16 %v3698
      %v3773 = vunpack.c.l.b16 %v3699
      %v3774 = vunpack.c.l.b16 %v3700
      %v3775 = vunpack.c.l.b16 %v3701
      %v3776 = vpack.c.b16 %v3745, %v3744
      %v3777 = vpack.c.b16 %v3747, %v3746
      %v3778 = vpack.c.b16 %v3749, %v3748
      %v3779 = vpack.c.b16 %v3751, %v3750
      %v3780 = vpack.c.b16 %v3753, %v3752
      %v3781 = vpack.c.b16 %v3755, %v3754
      %v3782 = vpack.c.b16 %v3757, %v3756
      %v3783 = vpack.c.b16 %v3759, %v3758
      %v3784 = vpack.c.b16 %v3761, %v3760
      %v3785 = vpack.c.b16 %v3763, %v3762
      %v3786 = vpack.c.b16 %v3765, %v3764
      %v3787 = vpack.c.b16 %v3767, %v3766
      %v3788 = vpack.c.b16 %v3769, %v3768
      %v3789 = vpack.c.b16 %v3771, %v3770
      %v3790 = vpack.c.b16 %v3773, %v3772
      %v3791 = vpack.c.b16 %v3775, %v3774
      %3808 = vmatprep.subr.bf16.mxu0 0
      %3809 = vmatpush1.bf16.msra.mxu0 %v3776
      %3810 = vmatprep.subr.bf16.mxu0 0
      %3811 = vmatpush1.bf16.msra.mxu0 %v3777
      %3812 = vmatprep.subr.bf16.mxu0 0
      %3813 = vmatpush1.bf16.msra.mxu0 %v3778
      %3814 = vmatprep.subr.bf16.mxu0 0
      %3815 = vmatpush1.bf16.msra.mxu0 %v3779
      %3816 = vmatprep.subr.bf16.mxu0 0
      %3817 = vmatpush1.bf16.msra.mxu0 %v3780
      %3818 = vmatprep.subr.bf16.mxu0 0
      %3819 = vmatpush1.bf16.msra.mxu0 %v3781
      %3820 = vmatprep.subr.bf16.mxu0 0
      %3821 = vmatpush1.bf16.msra.mxu0 %v3782
      %3822 = vmatprep.subr.bf16.mxu0 0
      %3823 = vmatpush1.bf16.msra.mxu0 %v3783
      %3824 = vmatprep.subr.bf16.mxu0 0
      %3825 = vmatpush1.bf16.msra.mxu0 %v3784
      %3826 = vmatprep.subr.bf16.mxu0 0
      %3827 = vmatpush1.bf16.msra.mxu0 %v3785
      %3828 = vmatprep.subr.bf16.mxu0 0
      %3829 = vmatpush1.bf16.msra.mxu0 %v3786
      %3830 = vmatprep.subr.bf16.mxu0 0
      %3831 = vmatpush1.bf16.msra.mxu0 %v3787
      %3832 = vmatprep.subr.bf16.mxu0 0
      %3833 = vmatpush1.bf16.msra.mxu0 %v3788
      %3834 = vmatprep.subr.bf16.mxu0 0
      %3835 = vmatpush1.bf16.msra.mxu0 %v3789
      %3836 = vmatprep.subr.bf16.mxu0 0
      %3837 = vmatpush1.bf16.msra.mxu0 %v3790
      %3838 = vmatprep.subr.bf16.mxu0 0
      %3839 = vmatpush1.bf16.msra.mxu0 %v3791
      %3840 = vmatprep.mubr.bf16.mxu0 %v3703
      %3841 = vmatmul.mubr.bf16.gmra.mrb[0].mxu0 %v3702
      %v3842 = vpop.f32.mrb[0].mxu0
      %v3843 = vadd.f32 %v3710, %v3842
      %v3844 = vpop.f32.mrb[0].mxu0
      %v3845 = vpop.f32.mrb[0].mxu0
      %v3846 = vpop.f32.mrb[0].mxu0
      %3847 = vdwg.mxu0
      %v3848 = vadd.f32 %v3843, %v3477
      %v3849 = vld [vmem:[%s19] sm:$0x1]
      %v3850 = vld [vmem:[%s20] sm:$0x1]
      %vm3851 = vcmask 1040384
      %v3852 = vsel %vm3851, %v3848, 0.0
      %3853 = vadd.xlane.f32.xlu0 %v3852
      %v3854 = vpop.xlane.xlu0 %3853
      %v3855 = vmul.f32 %v3854, %v1389
      %v3856 = vsub.f32 %v3848, %v3855
      %v3857 = vmul.f32 %v3856, %v3856
      %v3858 = vsel %vm3851, %v3857, 0.0
      %3859 = vadd.xlane.f32.xlu0 %v3858
      %v3860 = vpop.xlane.xlu0 %3859
      %v3861 = vmul.f32 %v3860, %v1389
      %v3862 = vadd.f32 %v3861, 1e-05
      %v3863 = vrsqrt.pop %v3862
      %v3864 = vmul.f32 %v3856, %v3863
      %v3865 = vmul.f32 %v3864, %v3849
      %v3866 = vadd.f32 %v3865, %v3850
      %v3867 = vld [vmem:[%s21] sm:$0xf]
      %v3868 = vld [vmem:[%s21 + $0x4] sm:$0xf]
      %v3869 = vld [vmem:[%s21 + $0x8] sm:$0xf]
      %v3870 = vld [vmem:[%s21 + $0xc] sm:$0xf]
      %v3871 = vld [vmem:[%s21 + $0x10] sm:$0xf]
      %v3872 = vld [vmem:[%s21 + $0x14] sm:$0xf]
      %v3873 = vld [vmem:[%s21 + $0x18] sm:$0xf]
      %v3874 = vld [vmem:[%s21 + $0x1c] sm:$0xf]
      %v3875 = vld [vmem:[%s21 + $0x20] sm:$0xf]
      %v3876 = vld [vmem:[%s21 + $0x24] sm:$0xf]
      %v3877 = vld [vmem:[%s21 + $0x28] sm:$0xf]
      %v3878 = vld [vmem:[%s21 + $0x2c] sm:$0xf]
      %v3879 = vld [vmem:[%s21 + $0x30] sm:$0xf]
      %v3880 = vld [vmem:[%s21 + $0x34] sm:$0xf]
      %v3881 = vld [vmem:[%s21 + $0x38] sm:$0xf]
      %v3882 = vld [vmem:[%s21 + $0x3c] sm:$0xf]
      %v3883 = vpack.c.bf16 %v3866, %v3866
      %v3884 = vld [vmem:[%s22] sm:$0x1]
      %v3901 = vunpack.c.l.b16 %v3867
      %v3902 = vunpack.c.l.b16 %v3868
      %v3903 = vunpack.c.l.b16 %v3869
      %v3904 = vunpack.c.l.b16 %v3870
      %v3905 = vunpack.c.l.b16 %v3871
      %v3906 = vunpack.c.l.b16 %v3872
      %v3907 = vunpack.c.l.b16 %v3873
      %v3908 = vunpack.c.l.b16 %v3874
      %v3909 = vunpack.c.l.b16 %v3875
      %v3910 = vunpack.c.l.b16 %v3876
      %v3911 = vunpack.c.l.b16 %v3877
      %v3912 = vunpack.c.l.b16 %v3878
      %v3913 = vunpack.c.l.b16 %v3879
      %v3914 = vunpack.c.l.b16 %v3880
      %v3915 = vunpack.c.l.b16 %v3881
      %v3916 = vunpack.c.l.b16 %v3882
      %v3917 = vpack.c.b16 %v3902, %v3901
      %v3918 = vpack.c.b16 %v3904, %v3903
      %v3919 = vpack.c.b16 %v3906, %v3905
      %v3920 = vpack.c.b16 %v3908, %v3907
      %v3921 = vpack.c.b16 %v3910, %v3909
      %v3922 = vpack.c.b16 %v3912, %v3911
      %v3923 = vpack.c.b16 %v3914, %v3913
      %v3924 = vpack.c.b16 %v3916, %v3915
      %3933 = vmatprep.subr.bf16.mxu0 0
      %3934 = vmatpush1.bf16.msra.mxu0 %v3917
      %3935 = vmatprep.subr.bf16.mxu0 0
      %3936 = vmatpush1.bf16.msra.mxu0 %v3918
      %3937 = vmatprep.subr.bf16.mxu0 0
      %3938 = vmatpush1.bf16.msra.mxu0 %v3919
      %3939 = vmatprep.subr.bf16.mxu0 0
      %3940 = vmatpush1.bf16.msra.mxu0 %v3920
      %3941 = vmatprep.subr.bf16.mxu0 0
      %3942 = vmatpush1.bf16.msra.mxu0 %v3921
      %3943 = vmatprep.subr.bf16.mxu0 0
      %3944 = vmatpush1.bf16.msra.mxu0 %v3922
      %3945 = vmatprep.subr.bf16.mxu0 0
      %3946 = vmatpush1.bf16.msra.mxu0 %v3923
      %3947 = vmatprep.subr.bf16.mxu0 0
      %3948 = vmatpush1.bf16.msra.mxu0 %v3924
      %3949 = vmatprep.subr.bf16.mxu0 0
      %3950 = vmatpush1.bf16.msra.mxu0 0
      %3951 = vmatprep.subr.bf16.mxu0 0
      %3952 = vmatpush1.bf16.msra.mxu0 0
      %3953 = vmatprep.subr.bf16.mxu0 0
      %3954 = vmatpush1.bf16.msra.mxu0 0
      %3955 = vmatprep.subr.bf16.mxu0 0
      %3956 = vmatpush1.bf16.msra.mxu0 0
      %3957 = vmatprep.subr.bf16.mxu0 0
      %3958 = vmatpush1.bf16.msra.mxu0 0
      %3959 = vmatprep.subr.bf16.mxu0 0
      %3960 = vmatpush1.bf16.msra.mxu0 0
      %3961 = vmatprep.subr.bf16.mxu0 0
      %3962 = vmatpush1.bf16.msra.mxu0 0
      %3963 = vmatprep.subr.bf16.mxu0 0
      %3964 = vmatpush1.bf16.msra.mxu0 0
      %3965 = vmatprep.mubr.bf16.mxu0 0
      %3966 = vmatmul.mubr.bf16.gmra.mrb[0].mxu0 %v3883
      %v3967 = vpop.f32.mrb[0].mxu0
      %v3968 = vadd.f32 %v3884, %v3967
      %v3969 = vpop.f32.mrb[0].mxu0
      %v3970 = vpop.f32.mrb[0].mxu0
      %v3971 = vpop.f32.mrb[0].mxu0
      %3972 = vdwg.mxu0
      %3973 = vst [vmem:[%s706] sm:$0x1] %v3968
      %p3974 = scmp.lt.s32.totalorder %s34, 1
      %s3975 = scalar_select %p3974, %s34, 1
      %s3976 = scalar_lea.vmem %s23, %s3975
      // Predicated region
      $region113: #{vit_forward.1} parent=111 // pred_check
        %p3977 = pneg %p540
      $region114: #{vit_forward.1} parent=111 // pred_check_branch
        %3979 = sbr.rel (%p3977) target = $region116
      $region115: #{vit_forward.1} parent=111 // pred_region
        _
      $region116: #{vit_forward.1} parent=111 // pred_fallthru
        _
    $region112: #{vit_forward.1} parent=5 // pred_fallthru
      _
    %p3980 = scmp.le.s32.totalorder 2, %s29
    // Predicated region
    $region117: #{vit_forward.1} parent=5 // pred_check
      %p3981 = pneg %p3980
    $region118: #{vit_forward.1} parent=5 // pred_check_branch
      %3983 = sbr.rel (%p3981) target = $region120
    $region119: #{vit_forward.1} parent=5 // pred_region
      %s3984 = ssub.s32 %s29, 2
      // Predicated region
      $region121: #{vit_forward.1} parent=119 // pred_check
        %p3985 = pneg %p546
      $region122: #{vit_forward.1} parent=119 // pred_check_branch
        %3987 = sbr.rel (%p3985) target = $region124
      $region123: #{vit_forward.1} parent=119 // pred_region
        %p3988 = scmp.lt.s32.totalorder %s35, 1
        %s3989 = scalar_select %p3988, %s35, 1
        %s3990 = scalar_lea.vmem %s23, %s3989
      $region124: #{vit_forward.1} parent=119 // pred_fallthru
        _
    $region120: #{vit_forward.1} parent=5 // pred_fallthru
      _
  $region6: #{vit_forward.1} parent=0 // loop_footer
    %s33 = sadd.s32 1, %s29
  $region7: #{vit_forward.1} parent=0 // loop_footer_branch
    %28 = sbr.rel target = $region3
  $region8: #{vit_forward.1} parent=0 // loop_exit
    _

</llo_original>
